<compile_context>
chip_gen: v6e
topology: v6e:2x2x1
jax: 0.10.0
libtpu: 0.0.40
codegen_flags: <defaults>
</compile_context>

<pallas_src>
import functools

import jax
import jax.numpy as jnp
from jax.experimental import pallas as pl
from jax.experimental.pallas import tpu as pltpu

# Explicit scoped-VMEM budget (review: v5e default is 16 MiB, v7x physical is
# 64 MiB); actual usage here is well under 1 MiB.
_VMEM_LIMIT = 32 * 1024 * 1024


def _cparams(semantics):
    return pltpu.CompilerParams(dimension_semantics=semantics,
                                vmem_limit_bytes=_VMEM_LIMIT)


# ----------------------------------------------------------------------------
# Pallas kernels
# ----------------------------------------------------------------------------
def _conv_lrelu_kernel(w_ref, p_ref, o_ref):
    """o = LeakyReLU(W @ P, 0.2); W:(Cout,K) bf16, P:(K,tm) bf16."""
    y = jnp.dot(w_ref[...], p_ref[...], preferred_element_type=jnp.float32)
    o_ref[...] = jnp.where(y >= 0.0, y, 0.2 * y).astype(o_ref.dtype)


def _conv_bn_lrelu_kernel(w_ref, p_ref, g_ref, b_ref, o_ref, sum_ref, sq_ref,
                          *, inv_m, eps, tm, n_tiles):
    """Fused conv + BatchNorm (train-mode batch stats) + LeakyReLU.

    Grid = (cout_blocks [parallel], m_tiles [arbitrary]).  BN statistics are
    per output channel, so Cout blocks are fully independent.
    """
    y = jnp.dot(w_ref[...], p_ref[...], preferred_element_type=jnp.float32)

    if n_tiles == 1:
        # Whole M in one step (this config): exact centered two-pass variance
        # in f32, straight from the matmul result (no bf16 round trip).
        mean = jnp.mean(y, axis=1, keepdims=True)
        yc = y - mean
        var = jnp.mean(yc * yc, axis=1, keepdims=True)
        scale = g_ref[...] * jax.lax.rsqrt(var + eps)
        yy = yc * scale + b_ref[...]
        o_ref[...] = jnp.where(yy >= 0.0, yy, 0.2 * yy).astype(o_ref.dtype)
    else:
        m_idx = pl.program_id(1)

        @pl.when(m_idx == 0)
        def _init():
            sum_ref[...] = jnp.zeros_like(sum_ref)
            sq_ref[...] = jnp.zeros_like(sq_ref)

        sum_ref[...] += jnp.sum(y, axis=1, keepdims=True)
        sq_ref[...] += jnp.sum(y * y, axis=1, keepdims=True)
        off = pl.multiple_of(m_idx * tm, tm)
        o_ref[:, pl.ds(off, tm)] = y.astype(o_ref.dtype)

        @pl.when(m_idx == n_tiles - 1)
        def _finalize():
            mean = sum_ref[...] * inv_m
            var = jnp.maximum(sq_ref[...] * inv_m - mean * mean, 0.0)
            scale = g_ref[...] * jax.lax.rsqrt(var + eps)
            shift = b_ref[...] - mean * scale
            yy = o_ref[...].astype(jnp.float32) * scale + shift
            o_ref[...] = jnp.where(yy >= 0.0, yy, 0.2 * yy).astype(o_ref.dtype)


def _attn_tail_kernel(xT_ref, xpT_ref, wthT_ref, wphT_ref, wgT_ref, woTs_ref,
                      w5r_ref, o_ref):
    """Fused SelfAttn + final 4x4 valid conv + sigmoid (everything in VMEM).

    xT  : (N, HW, C)        bf16   activations, per-batch transposed
    xpT : (N*4, HW/4, C)    bf16   2x2-pool-window gather of the activations
    wthT/wphT : (C, C/8)    bf16   theta / phi 1x1 weights (pre-transposed)
    wgT : (C, C/2)          bf16
    woTs: (C/2, C)          bf16   gamma * w_o^T (gamma folded at pack time)
    w5r : (HW, C)           f32    final 4x4 conv weight, flattened
    o   : (N, 1)            f32    sigmoid(discriminator logit)
    """
    n_batch = xT_ref.shape[0]
    n_win = xpT_ref.shape[0] // n_batch          # 4 taps of each 2x2 window

    wthT = wthT_ref[...]
    wphT = wphT_ref[...]
    wgT = wgT_ref[...]
    woTs = woTs_ref[...].astype(jnp.float32)
    w5r = w5r_ref[...]

    for b in range(n_batch):                     # static unroll (small N)
        xb = xT_ref[b]                                                  # (HW, C)
        thT = jnp.dot(xb, wthT, preferred_element_type=jnp.float32)    # (HW, C/8)

        # maxpool(conv1x1(x)) == max over window taps of conv1x1(tap): the 1x1
        # conv is per-pixel, so pooling commutes with the projection.
        phT = None                                # (HW/4, C/8)
        gT = None                                 # (HW/4, C/2)
        for k in range(n_win):
            xk = xpT_ref[b * n_win + k]                                 # (HW/4, C)
            ph_k = jnp.dot(xk, wphT, preferred_element_type=jnp.float32)
            g_k = jnp.dot(xk, wgT, preferred_element_type=jnp.float32)
            phT = ph_k if phT is None else jnp.maximum(phT, ph_k)
            gT = g_k if gT is None else jnp.maximum(gT, g_k)

        # attn = softmax(theta^T @ phi): s[q,k] = sum_c8 thT[q,c8] * phT[k,c8]
        s = jax.lax.dot_general(thT, phT, (((1,), (1,)), ((), ())),
                                preferred_element_type=jnp.float32)    # (HW, HW/4)
        s = s - jnp.max(s, axis=-1, keepdims=True)
        p = jnp.exp(s)
        p = p / jnp.sum(p, axis=-1, keepdims=True)                     # exact divide

        agT = jnp.dot(p, gT, preferred_element_type=jnp.float32)       # (HW, C/2)
        # out = x + gamma * conv1x1_o(attn_g); gamma pre-folded into woTs.
        aT = jnp.dot(agT, woTs, preferred_element_type=jnp.float32)    # (HW, C)
        aT = aT + xb.astype(jnp.float32)

        # Final 4x4 valid conv (spatial == kernel -> one output pixel) + sigmoid.
        t = jnp.sum(aT * w5r, axis=-1, keepdims=True)                  # (HW, 1)
        logit = jnp.sum(t, axis=0, keepdims=True)                      # (1, 1)
        o_ref[b:b + 1, :] = jax.nn.sigmoid(logit)


# ----------------------------------------------------------------------------
# Plain-JAX glue: im2col (channels-major), spectral norm (init only)
# ----------------------------------------------------------------------------
def im2col_cnhw(x, kh, kw, stride, pad):
    """x:(C,N,H,W) -> patches (C*KH*KW, N*OH*OW); row index = c*KH*KW + i*KW + j.

    TODO(synk): fold this gather into the conv kernel (pl.ANY + manual DMA, or
    an in-kernel strided gather) to avoid the duplicated patch matrix in HBM.
    """
    if pad:
        x = jnp.pad(x, ((0, 0), (0, 0), (pad, pad), (pad, pad)))
    C, N, H, W = x.shape
    oh = (H - kh) // stride + 1
    ow = (W - kw) // stride + 1
    taps = [x[:, :, i:i + stride * oh:stride, j:j + stride * ow:stride]
            for i in range(kh) for j in range(kw)]
    p = jnp.stack(taps, axis=1)                        # (C, KH*KW, N, OH, OW)
    return p.reshape(C * kh * kw, N * oh * ow), oh, ow


def spectral_normalize(w, n_iter=30, eps=1e-12):
    # TODO(synk): PyTorch runs 1 power iteration per forward with a persistent
    # random u; here we converge sigma with a fixed deterministic start.
    cout = w.shape[0]
    w2 = w.reshape(cout, -1).astype(jnp.float32)
    u = jnp.ones((cout,), jnp.float32) / jnp.sqrt(float(cout))
    v = None
    for _ in range(n_iter):
        v = w2.T @ u
        v = v / (jnp.linalg.norm(v) + eps)
        u = w2 @ v
        u = u / (jnp.linalg.norm(u) + eps)
    sigma = u @ (w2 @ v)
    return w / sigma


# ----------------------------------------------------------------------------
# Kernel wrappers (activations are CNHW bf16 throughout)
# ----------------------------------------------------------------------------
def _pick_tile(m, cap=2048):
    """Largest lane tile that divides m exactly (no pad/slice round trips)."""
    if m <= cap:
        return m, 1
    for t in (2048, 1024, 512, 256, 128):
        if t <= cap and m % t == 0:
            return t, m // t
    # TODO(synk): pad M to a multiple of 128 (masking the BN sums) instead of
    # an unblocked full-M fallback for awkward batch sizes.
    return m, 1


def conv_lrelu(x_cnhw, w2, *, max_tm=2048):
    """4x4 stride-2 pad-1 conv + LeakyReLU(0.2); w2 pre-packed (Cout, Cin*16) bf16."""
    cout, K = w2.shape
    n = x_cnhw.shape[1]
    p, oh, ow = im2col_cnhw(x_cnhw, 4, 4, 2, 1)
    assert p.shape[0] == K
    M = p.shape[1]
    tm, nt = _pick_tile(M, max_tm)
    y = pl.pallas_call(
        _conv_lrelu_kernel,
        out_shape=jax.ShapeDtypeStruct((cout, M), jnp.bfloat16),
        grid=(nt,),
        in_specs=[pl.BlockSpec((cout, K), lambda i: (0, 0)),
                  pl.BlockSpec((K, tm), lambda i: (0, i))],
        out_specs=pl.BlockSpec((cout, tm), lambda i: (0, i)),
        compiler_params=_cparams(("parallel",)),
    )(w2, p)
    return y.reshape(cout, n, oh, ow)


def conv_bn_lrelu(x_cnhw, w2, bn_g, bn_b, *, eps=1e-5, max_tm=2048):
    """4x4 stride-2 pad-1 conv + BatchNorm(batch stats) + LeakyReLU, fully fused."""
    cout, K = w2.shape
    n = x_cnhw.shape[1]
    p, oh, ow = im2col_cnhw(x_cnhw, 4, 4, 2, 1)
    assert p.shape[0] == K
    M = p.shape[1]
    tm, nt = _pick_tile(M, max_tm)
    # Split Cout into two independent "parallel" blocks (per-channel BN stats)
    # so v7x's two TensorCores both get work; harmless on 1-TC chips.
    cb = cout // 2 if (cout >= 16 and (cout // 2) % 8 == 0) else cout
    n_cb = cout // cb
    y = pl.pallas_call(
        functools.partial(_conv_bn_lrelu_kernel,
                          inv_m=1.0 / M, eps=eps, tm=tm, n_tiles=nt),
        out_shape=jax.ShapeDtypeStruct((cout, M), jnp.bfloat16),
        grid=(n_cb, nt),
        in_specs=[
            pl.BlockSpec((cb, K), lambda c, m: (c, 0)),
            pl.BlockSpec((K, tm), lambda c, m: (0, m)),
            pl.BlockSpec((cb, 1), lambda c, m: (c, 0)),
            pl.BlockSpec((cb, 1), lambda c, m: (c, 0)),
        ],
        # Output block resident across the M (reduction) axis for each Cout block.
        out_specs=pl.BlockSpec((cb, M), lambda c, m: (c, 0)),
        scratch_shapes=[pltpu.VMEM((cb, 1), jnp.float32),
                        pltpu.VMEM((cb, 1), jnp.float32)],
        compiler_params=_cparams(("parallel", "arbitrary")),
    )(w2, p, bn_g, bn_b)
    return y.reshape(cout, n, oh, ow)


def attn_conv5_sigmoid(h_cnhw, sa):
    """Single pallas_call for SelfAttn + final 4x4 valid conv + sigmoid."""
    C, N, H, W = h_cnhw.shape
    # TODO(synk): the fused tail assumes the final 4x4 valid conv covers the
    # full feature map (H == W == 4, i.e. 64x64 network inputs).
    assert H == 4 and W == 4 and C % 8 == 0
    HW, HW4 = H * W, (H * W) // 4

    xT = jnp.transpose(h_cnhw, (1, 2, 3, 0)).reshape(N, HW, C)        # (N, HW, C)
    xpT = jnp.transpose(
        h_cnhw.reshape(C, N, H // 2, 2, W // 2, 2),                    # (C,N,ho,dy,wo,dx)
        (1, 3, 5, 2, 4, 0)).reshape(N * 4, HW4, C)                     # (N*4, HW/4, C)

    out = pl.pallas_call(
        _attn_tail_kernel,
        out_shape=jax.ShapeDtypeStruct((N, 1), jnp.float32),
        grid=(1,),
        in_specs=[
            pl.BlockSpec((N, HW, C), lambda i: (0, 0, 0)),
            pl.BlockSpec((N * 4, HW4, C), lambda i: (0, 0, 0)),
            pl.BlockSpec(sa["wthT"].shape, lambda i: (0, 0)),
            pl.BlockSpec(sa["wphT"].shape, lambda i: (0, 0)),
            pl.BlockSpec(sa["wgT"].shape, lambda i: (0, 0)),
            pl.BlockSpec(sa["woTs"].shape, lambda i: (0, 0)),
            pl.BlockSpec(sa["w5r"].shape, lambda i: (0, 0)),
        ],
        out_specs=pl.BlockSpec((N, 1), lambda i: (0, 0)),
        compiler_params=_cparams(("arbitrary",)),
    )(xT, xpT, sa["wthT"], sa["wphT"], sa["wgT"], sa["woTs"], sa["w5r"])
    return out


# ----------------------------------------------------------------------------
# Forward pass
# ----------------------------------------------------------------------------
def discriminator_forward(x_nchw, pk):
    # NCHW -> channels-major CNHW once at the boundary; cast to bf16 once.
    h = jnp.transpose(x_nchw, (1, 0, 2, 3)).astype(jnp.bfloat16)
    h = conv_lrelu(h, pk["w1"])
    h = conv_bn_lrelu(h, pk["w2"], pk["bn2_g"], pk["bn2_b"])
    h = conv_bn_lrelu(h, pk["w3"], pk["bn3_g"], pk["bn3_b"])
    h = conv_bn_lrelu(h, pk["w4"], pk["bn4_g"], pk["bn4_b"])
    out = attn_conv5_sigmoid(h, pk["sa"])                    # (N, 1) f32
    return out.reshape(out.shape[0], 1, 1, 1)                # (N, 1, 1, 1)


# ----------------------------------------------------------------------------
# Deterministic parameter init (shapes from Discriminator.__init__) + packing
# ----------------------------------------------------------------------------
def init_params(key, nc, fd):
    keys = jax.random.split(key, 9)

    def conv_w(k, cout, cin, kh, kw):
        return (0.02 * jax.random.normal(k, (cout, cin, kh, kw))).astype(jnp.float32)

    p = {
        "w1": conv_w(keys[0], fd, nc, 4, 4),
        "w2": conv_w(keys[1], fd * 2, fd, 4, 4),
        "bn2_g": jnp.ones((fd * 2,), jnp.float32),
        "bn2_b": jnp.zeros((fd * 2,), jnp.float32),
        "w3": conv_w(keys[2], fd * 4, fd * 2, 4, 4),
        "bn3_g": jnp.ones((fd * 4,), jnp.float32),
        "bn3_b": jnp.zeros((fd * 4,), jnp.float32),
        "w4": conv_w(keys[3], fd * 8, fd * 4, 4, 4),
        "bn4_g": jnp.ones((fd * 8,), jnp.float32),
        "bn4_b": jnp.zeros((fd * 8,), jnp.float32),
        "w5": conv_w(keys[8], 1, fd * 8, 4, 4),
    }
    C = fd * 8
    p["sa"] = {
        # 1x1 conv weights stored as (Cout, Cin) after spectral normalisation.
        "w_theta": spectral_normalize(conv_w(keys[4], C // 8, C, 1, 1)).reshape(C // 8, C),
        "w_phi": spectral_normalize(conv_w(keys[5], C // 8, C, 1, 1)).reshape(C // 8, C),
        "w_g": spectral_normalize(conv_w(keys[6], C // 2, C, 1, 1)).reshape(C // 2, C),
        "w_o": spectral_normalize(conv_w(keys[7], C, C // 2, 1, 1)).reshape(C, C // 2),
        "gamma": jnp.zeros((1,), jnp.float32),
    }
    return p


def pack_params(p):
    """One-time packing of PyTorch-layout params into kernel-ready layouts.

    Hoisted out of the per-forward path (perf review): conv weights reshaped to
    (Cout, Cin*KH*KW) bf16, BN affine as (Cout, 1) f32, attention 1x1 weights
    pre-transposed with gamma folded into the output projection, final conv
    flattened to (KH*KW, Cin) f32.
    """
    def cw(w):
        return w.reshape(w.shape[0], -1).astype(jnp.bfloat16)

    def bn(v):
        return v.reshape(-1, 1).astype(jnp.float32)

    sa = p["sa"]
    C = sa["w_o"].shape[0]
    w5r = jnp.transpose(p["w5"][0], (1, 2, 0)).reshape(-1, C).astype(jnp.float32)
    return {
        "w1": cw(p["w1"]),
        "w2": cw(p["w2"]), "bn2_g": bn(p["bn2_g"]), "bn2_b": bn(p["bn2_b"]),
        "w3": cw(p["w3"]), "bn3_g": bn(p["bn3_g"]), "bn3_b": bn(p["bn3_b"]),
        "w4": cw(p["w4"]), "bn4_g": bn(p["bn4_g"]), "bn4_b": bn(p["bn4_b"]),
        "sa": {
            "wthT": sa["w_theta"].T.astype(jnp.bfloat16),                     # (C, C/8)
            "wphT": sa["w_phi"].T.astype(jnp.bfloat16),                       # (C, C/8)
            "wgT": sa["w_g"].T.astype(jnp.bfloat16),                          # (C, C/2)
            "woTs": (sa["gamma"].reshape(()) * sa["w_o"]).T.astype(jnp.bfloat16),  # (C/2, C)
            "w5r": w5r,                                                       # (16, C)
        },
    }


if __name__ == "__main__":
    # 4 stride-2 convs + final 4x4 valid conv require 64x64 inputs;
    # FeaDis*8 must be divisible by 8 for SelfAttn.
    batch, nc, fea_dis, spatial = 2, 3, 8, 64

    key = jax.random.PRNGKey(0)
    k_x, k_p = jax.random.split(key)
    x = jax.random.normal(k_x, (batch, nc, spatial, spatial), dtype=jnp.float32)
    raw_params = init_params(k_p, nc, fea_dis)
    packed = jax.tree_util.tree_map(lambda a: a, pack_params(raw_params))  # packed once

    fwd = jax.jit(discriminator_forward)
    out = jax.block_until_ready(fwd(x, packed))

    assert out.shape == (batch, 1, 1, 1), out.shape
    assert bool(jnp.all(jnp.isfinite(out)))
    assert bool(jnp.all((out >= 0.0) & (out <= 1.0)))
    print("KERNEL_OK")
</pallas_src>

<mosaic_0001>
module attributes {stable_mosaic.version = 11 : i64} {
  func.func @_conv_lrelu_kernel(%arg0: i32, %arg1: memref<8x48xbf16, #tpu.memory_space<vmem>>, %arg2: memref<48x2048xbf16, #tpu.memory_space<vmem>>, %arg3: memref<8x2048xbf16, #tpu.memory_space<vmem>>) attributes {dimension_semantics = [#tpu.dimension_semantics<parallel>], iteration_bounds = array<i64: 1>, scalar_prefetch = 0 : i64, scratch_operands = 0 : i64, tpu.core_type = #tpu.core_type<tc>, window_params = [{pipeline_mode = #tpu.pipeline_mode<synchronous>, transform_indices = @transform_0, window_bounds = array<i64: 8, 48>}, {transform_indices = @transform_1, window_bounds = array<i64: 48, 2048>}, {transform_indices = @transform_2, window_bounds = array<i64: 8, 2048>}]} {
    %c0 = arith.constant 0 : index
    %c0_0 = arith.constant 0 : index
    %0 = vector.load %arg1[%c0, %c0_0] : memref<8x48xbf16, #tpu.memory_space<vmem>>, vector<8x48xbf16>
    %c0_1 = arith.constant 0 : index
    %c0_2 = arith.constant 0 : index
    %1 = vector.load %arg2[%c0_1, %c0_2] : memref<48x2048xbf16, #tpu.memory_space<vmem>>, vector<48x2048xbf16>
    %cst = arith.constant dense<0.000000e+00> : vector<8x2048xf32>
    %2 = tpu.matmul %0, %1, %cst {dimension_numbers = #tpu.dot_dimension_numbers<[1], [0], [0], [1], [0, 0, 1, 1], [], []>} : vector<8x48xbf16>, vector<48x2048xbf16>, vector<8x2048xf32> -> vector<8x2048xf32>
    %cst_3 = arith.constant 0.000000e+00 : f32
    %3 = vector.broadcast %cst_3 : f32 to vector<8x2048xf32>
    %4 = arith.cmpf oge, %2, %3 : vector<8x2048xf32>
    %cst_4 = arith.constant 2.000000e-01 : f32
    %5 = vector.broadcast %cst_4 : f32 to vector<8x2048xf32>
    %6 = arith.mulf %5, %2 : vector<8x2048xf32>
    %7 = arith.select %4, %2, %6 : vector<8x2048xi1>, vector<8x2048xf32>
    %8 = arith.truncf %7 : vector<8x2048xf32> to vector<8x2048xbf16>
    %c0_5 = arith.constant 0 : index
    %c0_6 = arith.constant 0 : index
    %9 = vector.load %arg3[%c0_5, %c0_6] : memref<8x2048xbf16, #tpu.memory_space<vmem>>, vector<8x2048xbf16>
    tpu.vector_store %arg3[%c0_5, %c0_6], %8 {strides = array<i32>} : memref<8x2048xbf16, #tpu.memory_space<vmem>>, vector<8x2048xbf16>,
    return
  }
  func.func @transform_0(%arg0: i32) -> (i32, i32) {
    %c0_i32 = arith.constant 0 : i32
    %c0_i32_0 = arith.constant 0 : i32
    %c0_i32_1 = arith.constant 0 : i32
    return %c0_i32, %c0_i32_0 : i32, i32
  }
  func.func @transform_1(%arg0: i32) -> (i32, i32) {
    %c0_i32 = arith.constant 0 : i32
    %c0_i32_0 = arith.constant 0 : i32
    return %c0_i32, %arg0 : i32, i32
  }
  func.func @transform_2(%arg0: i32) -> (i32, i32) {
    %c0_i32 = arith.constant 0 : i32
    %c0_i32_0 = arith.constant 0 : i32
    return %c0_i32, %arg0 : i32, i32
  }
}

module attributes {stable_mosaic.version = 11 : i64} {
  func.func @_conv_bn_lrelu_kernel(%arg0: i32, %arg1: i32, %arg2: memref<8x128xbf16, #tpu.memory_space<vmem>>, %arg3: memref<128x512xbf16, #tpu.memory_space<vmem>>, %arg4: memref<8x1xf32, #tpu.memory_space<vmem>>, %arg5: memref<8x1xf32, #tpu.memory_space<vmem>>, %arg6: memref<8x512xbf16, #tpu.memory_space<vmem>>, %arg7: memref<8x1xf32, #tpu.memory_space<vmem>>, %arg8: memref<8x1xf32, #tpu.memory_space<vmem>>) attributes {dimension_semantics = [#tpu.dimension_semantics<parallel>, #tpu.dimension_semantics<arbitrary>], iteration_bounds = array<i64: 2, 1>, scalar_prefetch = 0 : i64, scratch_operands = 2 : i64, tpu.core_type = #tpu.core_type<tc>, window_params = [{transform_indices = @transform_0, window_bounds = array<i64: 8, 128>}, {transform_indices = @transform_1, window_bounds = array<i64: 128, 512>}, {transform_indices = @transform_2, window_bounds = array<i64: 8, 1>}, {transform_indices = @transform_3, window_bounds = array<i64: 8, 1>}, {transform_indices = @transform_4, window_bounds = array<i64: 8, 512>}]} {
    %c0 = arith.constant 0 : index
    %c0_0 = arith.constant 0 : index
    %0 = vector.load %arg2[%c0, %c0_0] : memref<8x128xbf16, #tpu.memory_space<vmem>>, vector<8x128xbf16>
    %c0_1 = arith.constant 0 : index
    %c0_2 = arith.constant 0 : index
    %1 = vector.load %arg3[%c0_1, %c0_2] : memref<128x512xbf16, #tpu.memory_space<vmem>>, vector<128x512xbf16>
    %cst = arith.constant dense<0.000000e+00> : vector<8x512xf32>
    %2 = tpu.matmul %0, %1, %cst {dimension_numbers = #tpu.dot_dimension_numbers<[1], [0], [0], [1], [0, 0, 1, 1], [], []>} : vector<8x128xbf16>, vector<128x512xbf16>, vector<8x512xf32> -> vector<8x512xf32>
    %cst_3 = arith.constant dense<0.000000e+00> : vector<8xf32>
    %3 = vector.multi_reduction <add>, %2, %cst_3 [1] : vector<8x512xf32> to vector<8xf32>
    %4 = vector.shape_cast %3 : vector<8xf32> to vector<8x1xf32>
    %cst_4 = arith.constant 5.120000e+02 : f32
    %5 = vector.broadcast %cst_4 : f32 to vector<8x1xf32>
    %6 = arith.divf %4, %5 : vector<8x1xf32>
    %7 = vector.broadcast %6 : vector<8x1xf32> to vector<8x512xf32>
    %8 = arith.subf %2, %7 : vector<8x512xf32>
    %9 = arith.mulf %8, %8 : vector<8x512xf32>
    %cst_5 = arith.constant dense<0.000000e+00> : vector<8xf32>
    %10 = vector.multi_reduction <add>, %9, %cst_5 [1] : vector<8x512xf32> to vector<8xf32>
    %11 = vector.shape_cast %10 : vector<8xf32> to vector<8x1xf32>
    %cst_6 = arith.constant 5.120000e+02 : f32
    %12 = vector.broadcast %cst_6 : f32 to vector<8x1xf32>
    %13 = arith.divf %11, %12 : vector<8x1xf32>
    %c0_7 = arith.constant 0 : index
    %c0_8 = arith.constant 0 : index
    %14 = vector.load %arg4[%c0_7, %c0_8] : memref<8x1xf32, #tpu.memory_space<vmem>>, vector<8x1xf32>
    %cst_9 = arith.constant 9.99999974E-6 : f32
    %15 = vector.broadcast %cst_9 : f32 to vector<8x1xf32>
    %16 = arith.addf %13, %15 : vector<8x1xf32>
    %17 = math.rsqrt %16 : vector<8x1xf32>
    %18 = arith.mulf %14, %17 : vector<8x1xf32>
    %19 = vector.broadcast %18 : vector<8x1xf32> to vector<8x512xf32>
    %20 = arith.mulf %8, %19 : vector<8x512xf32>
    %c0_10 = arith.constant 0 : index
    %c0_11 = arith.constant 0 : index
    %21 = vector.load %arg5[%c0_10, %c0_11] : memref<8x1xf32, #tpu.memory_space<vmem>>, vector<8x1xf32>
    %22 = vector.broadcast %21 : vector<8x1xf32> to vector<8x512xf32>
    %23 = arith.addf %20, %22 : vector<8x512xf32>
    %cst_12 = arith.constant 0.000000e+00 : f32
    %24 = vector.broadcast %cst_12 : f32 to vector<8x512xf32>
    %25 = arith.cmpf oge, %23, %24 : vector<8x512xf32>
    %cst_13 = arith.constant 2.000000e-01 : f32
    %26 = vector.broadcast %cst_13 : f32 to vector<8x512xf32>
    %27 = arith.mulf %26, %23 : vector<8x512xf32>
    %28 = arith.select %25, %23, %27 : vector<8x512xi1>, vector<8x512xf32>
    %29 = arith.truncf %28 : vector<8x512xf32> to vector<8x512xbf16>
    %c0_14 = arith.constant 0 : index
    %c0_15 = arith.constant 0 : index
    %30 = vector.load %arg6[%c0_14, %c0_15] : memref<8x512xbf16, #tpu.memory_space<vmem>>, vector<8x512xbf16>
    tpu.vector_store %arg6[%c0_14, %c0_15], %29 {strides = array<i32>} : memref<8x512xbf16, #tpu.memory_space<vmem>>, vector<8x512xbf16>,
    return
  }
  func.func @transform_0(%arg0: i32, %arg1: i32) -> (i32, i32) {
    %c0_i32 = arith.constant 0 : i32
    %c0_i32_0 = arith.constant 0 : i32
    return %arg0, %c0_i32 : i32, i32
  }
  func.func @transform_1(%arg0: i32, %arg1: i32) -> (i32, i32) {
    %c0_i32 = arith.constant 0 : i32
    %c0_i32_0 = arith.constant 0 : i32
    return %c0_i32, %arg1 : i32, i32
  }
  func.func @transform_2(%arg0: i32, %arg1: i32) -> (i32, i32) {
    %c0_i32 = arith.constant 0 : i32
    %c0_i32_0 = arith.constant 0 : i32
    return %arg0, %c0_i32 : i32, i32
  }
  func.func @transform_3(%arg0: i32, %arg1: i32) -> (i32, i32) {
    %c0_i32 = arith.constant 0 : i32
    %c0_i32_0 = arith.constant 0 : i32
    return %arg0, %c0_i32 : i32, i32
  }
  func.func @transform_4(%arg0: i32, %arg1: i32) -> (i32, i32) {
    %c0_i32 = arith.constant 0 : i32
    %c0_i32_0 = arith.constant 0 : i32
    return %arg0, %c0_i32 : i32, i32
  }
}

module attributes {stable_mosaic.version = 11 : i64} {
  func.func @_conv_bn_lrelu_kernel(%arg0: i32, %arg1: i32, %arg2: memref<16x256xbf16, #tpu.memory_space<vmem>>, %arg3: memref<256x128xbf16, #tpu.memory_space<vmem>>, %arg4: memref<16x1xf32, #tpu.memory_space<vmem>>, %arg5: memref<16x1xf32, #tpu.memory_space<vmem>>, %arg6: memref<16x128xbf16, #tpu.memory_space<vmem>>, %arg7: memref<16x1xf32, #tpu.memory_space<vmem>>, %arg8: memref<16x1xf32, #tpu.memory_space<vmem>>) attributes {dimension_semantics = [#tpu.dimension_semantics<parallel>, #tpu.dimension_semantics<arbitrary>], iteration_bounds = array<i64: 2, 1>, scalar_prefetch = 0 : i64, scratch_operands = 2 : i64, tpu.core_type = #tpu.core_type<tc>, window_params = [{transform_indices = @transform_0, window_bounds = array<i64: 16, 256>}, {transform_indices = @transform_1, window_bounds = array<i64: 256, 128>}, {transform_indices = @transform_2, window_bounds = array<i64: 16, 1>}, {transform_indices = @transform_3, window_bounds = array<i64: 16, 1>}, {transform_indices = @transform_4, window_bounds = array<i64: 16, 128>}]} {
    %c0 = arith.constant 0 : index
    %c0_0 = arith.constant 0 : index
    %0 = vector.load %arg2[%c0, %c0_0] : memref<16x256xbf16, #tpu.memory_space<vmem>>, vector<16x256xbf16>
    %c0_1 = arith.constant 0 : index
    %c0_2 = arith.constant 0 : index
    %1 = vector.load %arg3[%c0_1, %c0_2] : memref<256x128xbf16, #tpu.memory_space<vmem>>, vector<256x128xbf16>
    %cst = arith.constant dense<0.000000e+00> : vector<16x128xf32>
    %2 = tpu.matmul %0, %1, %cst {dimension_numbers = #tpu.dot_dimension_numbers<[1], [0], [0], [1], [0, 0, 1, 1], [], []>} : vector<16x256xbf16>, vector<256x128xbf16>, vector<16x128xf32> -> vector<16x128xf32>
    %cst_3 = arith.constant dense<0.000000e+00> : vector<16xf32>
    %3 = vector.multi_reduction <add>, %2, %cst_3 [1] : vector<16x128xf32> to vector<16xf32>
    %4 = vector.shape_cast %3 : vector<16xf32> to vector<16x1xf32>
    %cst_4 = arith.constant 1.280000e+02 : f32
    %5 = vector.broadcast %cst_4 : f32 to vector<16x1xf32>
    %6 = arith.divf %4, %5 : vector<16x1xf32>
    %7 = vector.broadcast %6 : vector<16x1xf32> to vector<16x128xf32>
    %8 = arith.subf %2, %7 : vector<16x128xf32>
    %9 = arith.mulf %8, %8 : vector<16x128xf32>
    %cst_5 = arith.constant dense<0.000000e+00> : vector<16xf32>
    %10 = vector.multi_reduction <add>, %9, %cst_5 [1] : vector<16x128xf32> to vector<16xf32>
    %11 = vector.shape_cast %10 : vector<16xf32> to vector<16x1xf32>
    %cst_6 = arith.constant 1.280000e+02 : f32
    %12 = vector.broadcast %cst_6 : f32 to vector<16x1xf32>
    %13 = arith.divf %11, %12 : vector<16x1xf32>
    %c0_7 = arith.constant 0 : index
    %c0_8 = arith.constant 0 : index
    %14 = vector.load %arg4[%c0_7, %c0_8] : memref<16x1xf32, #tpu.memory_space<vmem>>, vector<16x1xf32>
    %cst_9 = arith.constant 9.99999974E-6 : f32
    %15 = vector.broadcast %cst_9 : f32 to vector<16x1xf32>
    %16 = arith.addf %13, %15 : vector<16x1xf32>
    %17 = math.rsqrt %16 : vector<16x1xf32>
    %18 = arith.mulf %14, %17 : vector<16x1xf32>
    %19 = vector.broadcast %18 : vector<16x1xf32> to vector<16x128xf32>
    %20 = arith.mulf %8, %19 : vector<16x128xf32>
    %c0_10 = arith.constant 0 : index
    %c0_11 = arith.constant 0 : index
    %21 = vector.load %arg5[%c0_10, %c0_11] : memref<16x1xf32, #tpu.memory_space<vmem>>, vector<16x1xf32>
    %22 = vector.broadcast %21 : vector<16x1xf32> to vector<16x128xf32>
    %23 = arith.addf %20, %22 : vector<16x128xf32>
    %cst_12 = arith.constant 0.000000e+00 : f32
    %24 = vector.broadcast %cst_12 : f32 to vector<16x128xf32>
    %25 = arith.cmpf oge, %23, %24 : vector<16x128xf32>
    %cst_13 = arith.constant 2.000000e-01 : f32
    %26 = vector.broadcast %cst_13 : f32 to vector<16x128xf32>
    %27 = arith.mulf %26, %23 : vector<16x128xf32>
    %28 = arith.select %25, %23, %27 : vector<16x128xi1>, vector<16x128xf32>
    %29 = arith.truncf %28 : vector<16x128xf32> to vector<16x128xbf16>
    %c0_14 = arith.constant 0 : index
    %c0_15 = arith.constant 0 : index
    %30 = vector.load %arg6[%c0_14, %c0_15] : memref<16x128xbf16, #tpu.memory_space<vmem>>, vector<16x128xbf16>
    tpu.vector_store %arg6[%c0_14, %c0_15], %29 {strides = array<i32>} : memref<16x128xbf16, #tpu.memory_space<vmem>>, vector<16x128xbf16>,
    return
  }
  func.func @transform_0(%arg0: i32, %arg1: i32) -> (i32, i32) {
    %c0_i32 = arith.constant 0 : i32
    %c0_i32_0 = arith.constant 0 : i32
    return %arg0, %c0_i32 : i32, i32
  }
  func.func @transform_1(%arg0: i32, %arg1: i32) -> (i32, i32) {
    %c0_i32 = arith.constant 0 : i32
    %c0_i32_0 = arith.constant 0 : i32
    return %c0_i32, %arg1 : i32, i32
  }
  func.func @transform_2(%arg0: i32, %arg1: i32) -> (i32, i32) {
    %c0_i32 = arith.constant 0 : i32
    %c0_i32_0 = arith.constant 0 : i32
    return %arg0, %c0_i32 : i32, i32
  }
  func.func @transform_3(%arg0: i32, %arg1: i32) -> (i32, i32) {
    %c0_i32 = arith.constant 0 : i32
    %c0_i32_0 = arith.constant 0 : i32
    return %arg0, %c0_i32 : i32, i32
  }
  func.func @transform_4(%arg0: i32, %arg1: i32) -> (i32, i32) {
    %c0_i32 = arith.constant 0 : i32
    %c0_i32_0 = arith.constant 0 : i32
    return %arg0, %c0_i32 : i32, i32
  }
}

module attributes {stable_mosaic.version = 11 : i64} {
  func.func @_conv_bn_lrelu_kernel(%arg0: i32, %arg1: i32, %arg2: memref<32x512xbf16, #tpu.memory_space<vmem>>, %arg3: memref<512x32xbf16, #tpu.memory_space<vmem>>, %arg4: memref<32x1xf32, #tpu.memory_space<vmem>>, %arg5: memref<32x1xf32, #tpu.memory_space<vmem>>, %arg6: memref<32x32xbf16, #tpu.memory_space<vmem>>, %arg7: memref<32x1xf32, #tpu.memory_space<vmem>>, %arg8: memref<32x1xf32, #tpu.memory_space<vmem>>) attributes {dimension_semantics = [#tpu.dimension_semantics<parallel>, #tpu.dimension_semantics<arbitrary>], iteration_bounds = array<i64: 2, 1>, scalar_prefetch = 0 : i64, scratch_operands = 2 : i64, tpu.core_type = #tpu.core_type<tc>, window_params = [{transform_indices = @transform_0, window_bounds = array<i64: 32, 512>}, {transform_indices = @transform_1, window_bounds = array<i64: 512, 32>}, {transform_indices = @transform_2, window_bounds = array<i64: 32, 1>}, {transform_indices = @transform_3, window_bounds = array<i64: 32, 1>}, {transform_indices = @transform_4, window_bounds = array<i64: 32, 32>}]} {
    %c0 = arith.constant 0 : index
    %c0_0 = arith.constant 0 : index
    %0 = vector.load %arg2[%c0, %c0_0] : memref<32x512xbf16, #tpu.memory_space<vmem>>, vector<32x512xbf16>
    %c0_1 = arith.constant 0 : index
    %c0_2 = arith.constant 0 : index
    %1 = vector.load %arg3[%c0_1, %c0_2] : memref<512x32xbf16, #tpu.memory_space<vmem>>, vector<512x32xbf16>
    %cst = arith.constant dense<0.000000e+00> : vector<32x32xf32>
    %2 = tpu.matmul %0, %1, %cst {dimension_numbers = #tpu.dot_dimension_numbers<[1], [0], [0], [1], [0, 0, 1, 1], [], []>} : vector<32x512xbf16>, vector<512x32xbf16>, vector<32x32xf32> -> vector<32x32xf32>
    %cst_3 = arith.constant dense<0.000000e+00> : vector<32xf32>
    %3 = vector.multi_reduction <add>, %2, %cst_3 [1] : vector<32x32xf32> to vector<32xf32>
    %4 = vector.shape_cast %3 : vector<32xf32> to vector<32x1xf32>
    %cst_4 = arith.constant 3.200000e+01 : f32
    %5 = vector.broadcast %cst_4 : f32 to vector<32x1xf32>
    %6 = arith.divf %4, %5 : vector<32x1xf32>
    %7 = vector.broadcast %6 : vector<32x1xf32> to vector<32x32xf32>
    %8 = arith.subf %2, %7 : vector<32x32xf32>
    %9 = arith.mulf %8, %8 : vector<32x32xf32>
    %cst_5 = arith.constant dense<0.000000e+00> : vector<32xf32>
    %10 = vector.multi_reduction <add>, %9, %cst_5 [1] : vector<32x32xf32> to vector<32xf32>
    %11 = vector.shape_cast %10 : vector<32xf32> to vector<32x1xf32>
    %cst_6 = arith.constant 3.200000e+01 : f32
    %12 = vector.broadcast %cst_6 : f32 to vector<32x1xf32>
    %13 = arith.divf %11, %12 : vector<32x1xf32>
    %c0_7 = arith.constant 0 : index
    %c0_8 = arith.constant 0 : index
    %14 = vector.load %arg4[%c0_7, %c0_8] : memref<32x1xf32, #tpu.memory_space<vmem>>, vector<32x1xf32>
    %cst_9 = arith.constant 9.99999974E-6 : f32
    %15 = vector.broadcast %cst_9 : f32 to vector<32x1xf32>
    %16 = arith.addf %13, %15 : vector<32x1xf32>
    %17 = math.rsqrt %16 : vector<32x1xf32>
    %18 = arith.mulf %14, %17 : vector<32x1xf32>
    %19 = vector.broadcast %18 : vector<32x1xf32> to vector<32x32xf32>
    %20 = arith.mulf %8, %19 : vector<32x32xf32>
    %c0_10 = arith.constant 0 : index
    %c0_11 = arith.constant 0 : index
    %21 = vector.load %arg5[%c0_10, %c0_11] : memref<32x1xf32, #tpu.memory_space<vmem>>, vector<32x1xf32>
    %22 = vector.broadcast %21 : vector<32x1xf32> to vector<32x32xf32>
    %23 = arith.addf %20, %22 : vector<32x32xf32>
    %cst_12 = arith.constant 0.000000e+00 : f32
    %24 = vector.broadcast %cst_12 : f32 to vector<32x32xf32>
    %25 = arith.cmpf oge, %23, %24 : vector<32x32xf32>
    %cst_13 = arith.constant 2.000000e-01 : f32
    %26 = vector.broadcast %cst_13 : f32 to vector<32x32xf32>
    %27 = arith.mulf %26, %23 : vector<32x32xf32>
    %28 = arith.select %25, %23, %27 : vector<32x32xi1>, vector<32x32xf32>
    %29 = arith.truncf %28 : vector<32x32xf32> to vector<32x32xbf16>
    %c0_14 = arith.constant 0 : index
    %c0_15 = arith.constant 0 : index
    %30 = vector.load %arg6[%c0_14, %c0_15] : memref<32x32xbf16, #tpu.memory_space<vmem>>, vector<32x32xbf16>
    tpu.vector_store %arg6[%c0_14, %c0_15], %29 {strides = array<i32>} : memref<32x32xbf16, #tpu.memory_space<vmem>>, vector<32x32xbf16>,
    return
  }
  func.func @transform_0(%arg0: i32, %arg1: i32) -> (i32, i32) {
    %c0_i32 = arith.constant 0 : i32
    %c0_i32_0 = arith.constant 0 : i32
    return %arg0, %c0_i32 : i32, i32
  }
  func.func @transform_1(%arg0: i32, %arg1: i32) -> (i32, i32) {
    %c0_i32 = arith.constant 0 : i32
    %c0_i32_0 = arith.constant 0 : i32
    return %c0_i32, %arg1 : i32, i32
  }
  func.func @transform_2(%arg0: i32, %arg1: i32) -> (i32, i32) {
    %c0_i32 = arith.constant 0 : i32
    %c0_i32_0 = arith.constant 0 : i32
    return %arg0, %c0_i32 : i32, i32
  }
  func.func @transform_3(%arg0: i32, %arg1: i32) -> (i32, i32) {
    %c0_i32 = arith.constant 0 : i32
    %c0_i32_0 = arith.constant 0 : i32
    return %arg0, %c0_i32 : i32, i32
  }
  func.func @transform_4(%arg0: i32, %arg1: i32) -> (i32, i32) {
    %c0_i32 = arith.constant 0 : i32
    %c0_i32_0 = arith.constant 0 : i32
    return %arg0, %c0_i32 : i32, i32
  }
}

module attributes {stable_mosaic.version = 11 : i64} {
  func.func @_attn_tail_kernel(%arg0: i32, %arg1: memref<2x16x64xbf16, #tpu.memory_space<vmem>>, %arg2: memref<8x4x64xbf16, #tpu.memory_space<vmem>>, %arg3: memref<64x8xbf16, #tpu.memory_space<vmem>>, %arg4: memref<64x8xbf16, #tpu.memory_space<vmem>>, %arg5: memref<64x32xbf16, #tpu.memory_space<vmem>>, %arg6: memref<32x64xbf16, #tpu.memory_space<vmem>>, %arg7: memref<16x64xf32, #tpu.memory_space<vmem>>, %arg8: memref<2x1xf32, #tpu.memory_space<vmem>>) attributes {dimension_semantics = [#tpu.dimension_semantics<arbitrary>], iteration_bounds = array<i64: 1>, scalar_prefetch = 0 : i64, scratch_operands = 0 : i64, tpu.core_type = #tpu.core_type<tc>, window_params = [{pipeline_mode = #tpu.pipeline_mode<synchronous>, transform_indices = @transform_0, window_bounds = array<i64: 2, 16, 64>}, {pipeline_mode = #tpu.pipeline_mode<synchronous>, transform_indices = @transform_1, window_bounds = array<i64: 8, 4, 64>}, {pipeline_mode = #tpu.pipeline_mode<synchronous>, transform_indices = @transform_2, window_bounds = array<i64: 64, 8>}, {pipeline_mode = #tpu.pipeline_mode<synchronous>, transform_indices = @transform_3, window_bounds = array<i64: 64, 8>}, {pipeline_mode = #tpu.pipeline_mode<synchronous>, transform_indices = @transform_4, window_bounds = array<i64: 64, 32>}, {pipeline_mode = #tpu.pipeline_mode<synchronous>, transform_indices = @transform_5, window_bounds = array<i64: 32, 64>}, {pipeline_mode = #tpu.pipeline_mode<synchronous>, transform_indices = @transform_6, window_bounds = array<i64: 16, 64>}, {pipeline_mode = #tpu.pipeline_mode<synchronous>, transform_indices = @transform_7, window_bounds = array<i64: 2, 1>}]} {
    %c0 = arith.constant 0 : index
    %c0_0 = arith.constant 0 : index
    %0 = vector.load %arg3[%c0, %c0_0] : memref<64x8xbf16, #tpu.memory_space<vmem>>, vector<64x8xbf16>
    %c0_1 = arith.constant 0 : index
    %c0_2 = arith.constant 0 : index
    %1 = vector.load %arg4[%c0_1, %c0_2] : memref<64x8xbf16, #tpu.memory_space<vmem>>, vector<64x8xbf16>
    %c0_3 = arith.constant 0 : index
    %c0_4 = arith.constant 0 : index
    %2 = vector.load %arg5[%c0_3, %c0_4] : memref<64x32xbf16, #tpu.memory_space<vmem>>, vector<64x32xbf16>
    %c0_5 = arith.constant 0 : index
    %c0_6 = arith.constant 0 : index
    %3 = vector.load %arg6[%c0_5, %c0_6] : memref<32x64xbf16, #tpu.memory_space<vmem>>, vector<32x64xbf16>
    %4 = arith.extf %3 : vector<32x64xbf16> to vector<32x64xf32>
    %c0_7 = arith.constant 0 : index
    %c0_8 = arith.constant 0 : index
    %5 = vector.load %arg7[%c0_7, %c0_8] : memref<16x64xf32, #tpu.memory_space<vmem>>, vector<16x64xf32>
    %c0_9 = arith.constant 0 : index
    %c0_10 = arith.constant 0 : index
    %c0_11 = arith.constant 0 : index
    %6 = vector.load %arg1[%c0_9, %c0_10, %c0_11] : memref<2x16x64xbf16, #tpu.memory_space<vmem>>, vector<1x16x64xbf16>
    %7 = vector.shape_cast %6 : vector<1x16x64xbf16> to vector<16x64xbf16>
    %cst = arith.constant dense<0.000000e+00> : vector<16x8xf32>
    %8 = tpu.matmul %7, %0, %cst {dimension_numbers = #tpu.dot_dimension_numbers<[1], [0], [0], [1], [0, 0, 1, 1], [], []>} : vector<16x64xbf16>, vector<64x8xbf16>, vector<16x8xf32> -> vector<16x8xf32>
    %c0_12 = arith.constant 0 : index
    %c0_13 = arith.constant 0 : index
    %c0_14 = arith.constant 0 : index
    %9 = vector.load %arg2[%c0_12, %c0_13, %c0_14] : memref<8x4x64xbf16, #tpu.memory_space<vmem>>, vector<1x4x64xbf16>
    %10 = vector.shape_cast %9 : vector<1x4x64xbf16> to vector<4x64xbf16>
    %cst_15 = arith.constant dense<0.000000e+00> : vector<4x8xf32>
    %11 = tpu.matmul %10, %1, %cst_15 {dimension_numbers = #tpu.dot_dimension_numbers<[1], [0], [0], [1], [0, 0, 1, 1], [], []>} : vector<4x64xbf16>, vector<64x8xbf16>, vector<4x8xf32> -> vector<4x8xf32>
    %cst_16 = arith.constant dense<0.000000e+00> : vector<4x32xf32>
    %12 = tpu.matmul %10, %2, %cst_16 {dimension_numbers = #tpu.dot_dimension_numbers<[1], [0], [0], [1], [0, 0, 1, 1], [], []>} : vector<4x64xbf16>, vector<64x32xbf16>, vector<4x32xf32> -> vector<4x32xf32>
    %c1 = arith.constant 1 : index
    %c0_17 = arith.constant 0 : index
    %c0_18 = arith.constant 0 : index
    %13 = vector.load %arg2[%c1, %c0_17, %c0_18] : memref<8x4x64xbf16, #tpu.memory_space<vmem>>, vector<1x4x64xbf16>
    %14 = vector.shape_cast %13 : vector<1x4x64xbf16> to vector<4x64xbf16>
    %cst_19 = arith.constant dense<0.000000e+00> : vector<4x8xf32>
    %15 = tpu.matmul %14, %1, %cst_19 {dimension_numbers = #tpu.dot_dimension_numbers<[1], [0], [0], [1], [0, 0, 1, 1], [], []>} : vector<4x64xbf16>, vector<64x8xbf16>, vector<4x8xf32> -> vector<4x8xf32>
    %cst_20 = arith.constant dense<0.000000e+00> : vector<4x32xf32>
    %16 = tpu.matmul %14, %2, %cst_20 {dimension_numbers = #tpu.dot_dimension_numbers<[1], [0], [0], [1], [0, 0, 1, 1], [], []>} : vector<4x64xbf16>, vector<64x32xbf16>, vector<4x32xf32> -> vector<4x32xf32>
    %17 = arith.maximumf %11, %15 : vector<4x8xf32>
    %18 = arith.maximumf %12, %16 : vector<4x32xf32>
    %c2 = arith.constant 2 : index
    %c0_21 = arith.constant 0 : index
    %c0_22 = arith.constant 0 : index
    %19 = vector.load %arg2[%c2, %c0_21, %c0_22] : memref<8x4x64xbf16, #tpu.memory_space<vmem>>, vector<1x4x64xbf16>
    %20 = vector.shape_cast %19 : vector<1x4x64xbf16> to vector<4x64xbf16>
    %cst_23 = arith.constant dense<0.000000e+00> : vector<4x8xf32>
    %21 = tpu.matmul %20, %1, %cst_23 {dimension_numbers = #tpu.dot_dimension_numbers<[1], [0], [0], [1], [0, 0, 1, 1], [], []>} : vector<4x64xbf16>, vector<64x8xbf16>, vector<4x8xf32> -> vector<4x8xf32>
    %cst_24 = arith.constant dense<0.000000e+00> : vector<4x32xf32>
    %22 = tpu.matmul %20, %2, %cst_24 {dimension_numbers = #tpu.dot_dimension_numbers<[1], [0], [0], [1], [0, 0, 1, 1], [], []>} : vector<4x64xbf16>, vector<64x32xbf16>, vector<4x32xf32> -> vector<4x32xf32>
    %23 = arith.maximumf %17, %21 : vector<4x8xf32>
    %24 = arith.maximumf %18, %22 : vector<4x32xf32>
    %c3 = arith.constant 3 : index
    %c0_25 = arith.constant 0 : index
    %c0_26 = arith.constant 0 : index
    %25 = vector.load %arg2[%c3, %c0_25, %c0_26] : memref<8x4x64xbf16, #tpu.memory_space<vmem>>, vector<1x4x64xbf16>
    %26 = vector.shape_cast %25 : vector<1x4x64xbf16> to vector<4x64xbf16>
    %cst_27 = arith.constant dense<0.000000e+00> : vector<4x8xf32>
    %27 = tpu.matmul %26, %1, %cst_27 {dimension_numbers = #tpu.dot_dimension_numbers<[1], [0], [0], [1], [0, 0, 1, 1], [], []>} : vector<4x64xbf16>, vector<64x8xbf16>, vector<4x8xf32> -> vector<4x8xf32>
    %cst_28 = arith.constant dense<0.000000e+00> : vector<4x32xf32>
    %28 = tpu.matmul %26, %2, %cst_28 {dimension_numbers = #tpu.dot_dimension_numbers<[1], [0], [0], [1], [0, 0, 1, 1], [], []>} : vector<4x64xbf16>, vector<64x32xbf16>, vector<4x32xf32> -> vector<4x32xf32>
    %29 = arith.maximumf %23, %27 : vector<4x8xf32>
    %30 = arith.maximumf %24, %28 : vector<4x32xf32>
    %cst_29 = arith.constant dense<0.000000e+00> : vector<16x4xf32>
    %31 = tpu.matmul %8, %29, %cst_29 {dimension_numbers = #tpu.dot_dimension_numbers<[1], [1], [0], [0], [0, 0, 1, 0], [], []>} : vector<16x8xf32>, vector<4x8xf32>, vector<16x4xf32> -> vector<16x4xf32>
    %cst_30 = arith.constant dense<0xFF800000> : vector<16xf32>
    %32 = vector.multi_reduction <maximumf>, %31, %cst_30 [1] : vector<16x4xf32> to vector<16xf32>
    %33 = vector.shape_cast %32 : vector<16xf32> to vector<16x1xf32>
    %34 = vector.broadcast %33 : vector<16x1xf32> to vector<16x4xf32>
    %35 = arith.subf %31, %34 : vector<16x4xf32>
    %36 = math.exp %35 : vector<16x4xf32>
    %cst_31 = arith.constant dense<0.000000e+00> : vector<16xf32>
    %37 = vector.multi_reduction <add>, %36, %cst_31 [1] : vector<16x4xf32> to vector<16xf32>
    %38 = vector.shape_cast %37 : vector<16xf32> to vector<16x1xf32>
    %39 = vector.broadcast %38 : vector<16x1xf32> to vector<16x4xf32>
    %40 = arith.divf %36, %39 : vector<16x4xf32>
    %cst_32 = arith.constant dense<0.000000e+00> : vector<16x32xf32>
    %41 = tpu.matmul %40, %30, %cst_32 {dimension_numbers = #tpu.dot_dimension_numbers<[1], [0], [0], [1], [0, 0, 1, 1], [], []>} : vector<16x4xf32>, vector<4x32xf32>, vector<16x32xf32> -> vector<16x32xf32>
    %cst_33 = arith.constant dense<0.000000e+00> : vector<16x64xf32>
    %42 = tpu.matmul %41, %4, %cst_33 {dimension_numbers = #tpu.dot_dimension_numbers<[1], [0], [0], [1], [0, 0, 1, 1], [], []>} : vector<16x32xf32>, vector<32x64xf32>, vector<16x64xf32> -> vector<16x64xf32>
    %43 = arith.extf %7 : vector<16x64xbf16> to vector<16x64xf32>
    %44 = arith.addf %42, %43 : vector<16x64xf32>
    %45 = arith.mulf %44, %5 : vector<16x64xf32>
    %cst_34 = arith.constant dense<0.000000e+00> : vector<16xf32>
    %46 = vector.multi_reduction <add>, %45, %cst_34 [1] : vector<16x64xf32> to vector<16xf32>
    %47 = vector.shape_cast %46 : vector<16xf32> to vector<16x1xf32>
    %cst_35 = arith.constant dense<0.000000e+00> : vector<1xf32>
    %48 = vector.multi_reduction <add>, %47, %cst_35 [0] : vector<16x1xf32> to vector<1xf32>
    %49 = vector.shape_cast %48 : vector<1xf32> to vector<1x1xf32>
    %50 = arith.negf %49 : vector<1x1xf32>
    %51 = math.exp %50 : vector<1x1xf32>
    %cst_36 = arith.constant 1.000000e+00 : f32
    %52 = vector.broadcast %cst_36 : f32 to vector<1x1xf32>
    %53 = arith.addf %52, %51 : vector<1x1xf32>
    %54 = arith.divf %52, %53 : vector<1x1xf32>
    %c0_37 = arith.constant 0 : index
    %c0_38 = arith.constant 0 : index
    %55 = vector.load %arg8[%c0_37, %c0_38] : memref<2x1xf32, #tpu.memory_space<vmem>>, vector<1x1xf32>
    tpu.vector_store %arg8[%c0_37, %c0_38], %54 {strides = array<i32>} : memref<2x1xf32, #tpu.memory_space<vmem>>, vector<1x1xf32>,
    %c1_39 = arith.constant 1 : index
    %c0_40 = arith.constant 0 : index
    %c0_41 = arith.constant 0 : index
    %56 = vector.load %arg1[%c1_39, %c0_40, %c0_41] : memref<2x16x64xbf16, #tpu.memory_space<vmem>>, vector<1x16x64xbf16>
    %57 = vector.shape_cast %56 : vector<1x16x64xbf16> to vector<16x64xbf16>
    %cst_42 = arith.constant dense<0.000000e+00> : vector<16x8xf32>
    %58 = tpu.matmul %57, %0, %cst_42 {dimension_numbers = #tpu.dot_dimension_numbers<[1], [0], [0], [1], [0, 0, 1, 1], [], []>} : vector<16x64xbf16>, vector<64x8xbf16>, vector<16x8xf32> -> vector<16x8xf32>
    %c4 = arith.constant 4 : index
    %c0_43 = arith.constant 0 : index
    %c0_44 = arith.constant 0 : index
    %59 = vector.load %arg2[%c4, %c0_43, %c0_44] : memref<8x4x64xbf16, #tpu.memory_space<vmem>>, vector<1x4x64xbf16>
    %60 = vector.shape_cast %59 : vector<1x4x64xbf16> to vector<4x64xbf16>
    %cst_45 = arith.constant dense<0.000000e+00> : vector<4x8xf32>
    %61 = tpu.matmul %60, %1, %cst_45 {dimension_numbers = #tpu.dot_dimension_numbers<[1], [0], [0], [1], [0, 0, 1, 1], [], []>} : vector<4x64xbf16>, vector<64x8xbf16>, vector<4x8xf32> -> vector<4x8xf32>
    %cst_46 = arith.constant dense<0.000000e+00> : vector<4x32xf32>
    %62 = tpu.matmul %60, %2, %cst_46 {dimension_numbers = #tpu.dot_dimension_numbers<[1], [0], [0], [1], [0, 0, 1, 1], [], []>} : vector<4x64xbf16>, vector<64x32xbf16>, vector<4x32xf32> -> vector<4x32xf32>
    %c5 = arith.constant 5 : index
    %c0_47 = arith.constant 0 : index
    %c0_48 = arith.constant 0 : index
    %63 = vector.load %arg2[%c5, %c0_47, %c0_48] : memref<8x4x64xbf16, #tpu.memory_space<vmem>>, vector<1x4x64xbf16>
    %64 = vector.shape_cast %63 : vector<1x4x64xbf16> to vector<4x64xbf16>
    %cst_49 = arith.constant dense<0.000000e+00> : vector<4x8xf32>
    %65 = tpu.matmul %64, %1, %cst_49 {dimension_numbers = #tpu.dot_dimension_numbers<[1], [0], [0], [1], [0, 0, 1, 1], [], []>} : vector<4x64xbf16>, vector<64x8xbf16>, vector<4x8xf32> -> vector<4x8xf32>
    %cst_50 = arith.constant dense<0.000000e+00> : vector<4x32xf32>
    %66 = tpu.matmul %64, %2, %cst_50 {dimension_numbers = #tpu.dot_dimension_numbers<[1], [0], [0], [1], [0, 0, 1, 1], [], []>} : vector<4x64xbf16>, vector<64x32xbf16>, vector<4x32xf32> -> vector<4x32xf32>
    %67 = arith.maximumf %61, %65 : vector<4x8xf32>
    %68 = arith.maximumf %62, %66 : vector<4x32xf32>
    %c6 = arith.constant 6 : index
    %c0_51 = arith.constant 0 : index
    %c0_52 = arith.constant 0 : index
    %69 = vector.load %arg2[%c6, %c0_51, %c0_52] : memref<8x4x64xbf16, #tpu.memory_space<vmem>>, vector<1x4x64xbf16>
    %70 = vector.shape_cast %69 : vector<1x4x64xbf16> to vector<4x64xbf16>
    %cst_53 = arith.constant dense<0.000000e+00> : vector<4x8xf32>
    %71 = tpu.matmul %70, %1, %cst_53 {dimension_numbers = #tpu.dot_dimension_numbers<[1], [0], [0], [1], [0, 0, 1, 1], [], []>} : vector<4x64xbf16>, vector<64x8xbf16>, vector<4x8xf32> -> vector<4x8xf32>
    %cst_54 = arith.constant dense<0.000000e+00> : vector<4x32xf32>
    %72 = tpu.matmul %70, %2, %cst_54 {dimension_numbers = #tpu.dot_dimension_numbers<[1], [0], [0], [1], [0, 0, 1, 1], [], []>} : vector<4x64xbf16>, vector<64x32xbf16>, vector<4x32xf32> -> vector<4x32xf32>
    %73 = arith.maximumf %67, %71 : vector<4x8xf32>
    %74 = arith.maximumf %68, %72 : vector<4x32xf32>
    %c7 = arith.constant 7 : index
    %c0_55 = arith.constant 0 : index
    %c0_56 = arith.constant 0 : index
    %75 = vector.load %arg2[%c7, %c0_55, %c0_56] : memref<8x4x64xbf16, #tpu.memory_space<vmem>>, vector<1x4x64xbf16>
    %76 = vector.shape_cast %75 : vector<1x4x64xbf16> to vector<4x64xbf16>
    %cst_57 = arith.constant dense<0.000000e+00> : vector<4x8xf32>
    %77 = tpu.matmul %76, %1, %cst_57 {dimension_numbers = #tpu.dot_dimension_numbers<[1], [0], [0], [1], [0, 0, 1, 1], [], []>} : vector<4x64xbf16>, vector<64x8xbf16>, vector<4x8xf32> -> vector<4x8xf32>
    %cst_58 = arith.constant dense<0.000000e+00> : vector<4x32xf32>
    %78 = tpu.matmul %76, %2, %cst_58 {dimension_numbers = #tpu.dot_dimension_numbers<[1], [0], [0], [1], [0, 0, 1, 1], [], []>} : vector<4x64xbf16>, vector<64x32xbf16>, vector<4x32xf32> -> vector<4x32xf32>
    %79 = arith.maximumf %73, %77 : vector<4x8xf32>
    %80 = arith.maximumf %74, %78 : vector<4x32xf32>
    %cst_59 = arith.constant dense<0.000000e+00> : vector<16x4xf32>
    %81 = tpu.matmul %58, %79, %cst_59 {dimension_numbers = #tpu.dot_dimension_numbers<[1], [1], [0], [0], [0, 0, 1, 0], [], []>} : vector<16x8xf32>, vector<4x8xf32>, vector<16x4xf32> -> vector<16x4xf32>
    %cst_60 = arith.constant dense<0xFF800000> : vector<16xf32>
    %82 = vector.multi_reduction <maximumf>, %81, %cst_60 [1] : vector<16x4xf32> to vector<16xf32>
    %83 = vector.shape_cast %82 : vector<16xf32> to vector<16x1xf32>
    %84 = vector.broadcast %83 : vector<16x1xf32> to vector<16x4xf32>
    %85 = arith.subf %81, %84 : vector<16x4xf32>
    %86 = math.exp %85 : vector<16x4xf32>
    %cst_61 = arith.constant dense<0.000000e+00> : vector<16xf32>
    %87 = vector.multi_reduction <add>, %86, %cst_61 [1] : vector<16x4xf32> to vector<16xf32>
    %88 = vector.shape_cast %87 : vector<16xf32> to vector<16x1xf32>
    %89 = vector.broadcast %88 : vector<16x1xf32> to vector<16x4xf32>
    %90 = arith.divf %86, %89 : vector<16x4xf32>
    %cst_62 = arith.constant dense<0.000000e+00> : vector<16x32xf32>
    %91 = tpu.matmul %90, %80, %cst_62 {dimension_numbers = #tpu.dot_dimension_numbers<[1], [0], [0], [1], [0, 0, 1, 1], [], []>} : vector<16x4xf32>, vector<4x32xf32>, vector<16x32xf32> -> vector<16x32xf32>
    %cst_63 = arith.constant dense<0.000000e+00> : vector<16x64xf32>
    %92 = tpu.matmul %91, %4, %cst_63 {dimension_numbers = #tpu.dot_dimension_numbers<[1], [0], [0], [1], [0, 0, 1, 1], [], []>} : vector<16x32xf32>, vector<32x64xf32>, vector<16x64xf32> -> vector<16x64xf32>
    %93 = arith.extf %57 : vector<16x64xbf16> to vector<16x64xf32>
    %94 = arith.addf %92, %93 : vector<16x64xf32>
    %95 = arith.mulf %94, %5 : vector<16x64xf32>
    %cst_64 = arith.constant dense<0.000000e+00> : vector<16xf32>
    %96 = vector.multi_reduction <add>, %95, %cst_64 [1] : vector<16x64xf32> to vector<16xf32>
    %97 = vector.shape_cast %96 : vector<16xf32> to vector<16x1xf32>
    %cst_65 = arith.constant dense<0.000000e+00> : vector<1xf32>
    %98 = vector.multi_reduction <add>, %97, %cst_65 [0] : vector<16x1xf32> to vector<1xf32>
    %99 = vector.shape_cast %98 : vector<1xf32> to vector<1x1xf32>
    %100 = arith.negf %99 : vector<1x1xf32>
    %101 = math.exp %100 : vector<1x1xf32>
    %cst_66 = arith.constant 1.000000e+00 : f32
    %102 = vector.broadcast %cst_66 : f32 to vector<1x1xf32>
    %103 = arith.addf %102, %101 : vector<1x1xf32>
    %104 = arith.divf %102, %103 : vector<1x1xf32>
    %c1_67 = arith.constant 1 : index
    %c0_68 = arith.constant 0 : index
    %105 = vector.load %arg8[%c1_67, %c0_68] : memref<2x1xf32, #tpu.memory_space<vmem>>, vector<1x1xf32>
    tpu.vector_store %arg8[%c1_67, %c0_68], %104 {strides = array<i32>} : memref<2x1xf32, #tpu.memory_space<vmem>>, vector<1x1xf32>,
    return
  }
  func.func @transform_0(%arg0: i32) -> (i32, i32, i32) {
    %c0_i32 = arith.constant 0 : i32
    %c0_i32_0 = arith.constant 0 : i32
    %c0_i32_1 = arith.constant 0 : i32
    %c0_i32_2 = arith.constant 0 : i32
    return %c0_i32, %c0_i32_0, %c0_i32_1 : i32, i32, i32
  }
  func.func @transform_1(%arg0: i32) -> (i32, i32, i32) {
    %c0_i32 = arith.constant 0 : i32
    %c0_i32_0 = arith.constant 0 : i32
    %c0_i32_1 = arith.constant 0 : i32
    %c0_i32_2 = arith.constant 0 : i32
    return %c0_i32, %c0_i32_0, %c0_i32_1 : i32, i32, i32
  }
  func.func @transform_2(%arg0: i32) -> (i32, i32) {
    %c0_i32 = arith.constant 0 : i32
    %c0_i32_0 = arith.constant 0 : i32
    %c0_i32_1 = arith.constant 0 : i32
    return %c0_i32, %c0_i32_0 : i32, i32
  }
  func.func @transform_3(%arg0: i32) -> (i32, i32) {
    %c0_i32 = arith.constant 0 : i32
    %c0_i32_0 = arith.constant 0 : i32
    %c0_i32_1 = arith.constant 0 : i32
    return %c0_i32, %c0_i32_0 : i32, i32
  }
  func.func @transform_4(%arg0: i32) -> (i32, i32) {
    %c0_i32 = arith.constant 0 : i32
    %c0_i32_0 = arith.constant 0 : i32
    %c0_i32_1 = arith.constant 0 : i32
    return %c0_i32, %c0_i32_0 : i32, i32
  }
  func.func @transform_5(%arg0: i32) -> (i32, i32) {
    %c0_i32 = arith.constant 0 : i32
    %c0_i32_0 = arith.constant 0 : i32
    %c0_i32_1 = arith.constant 0 : i32
    return %c0_i32, %c0_i32_0 : i32, i32
  }
  func.func @transform_6(%arg0: i32) -> (i32, i32) {
    %c0_i32 = arith.constant 0 : i32
    %c0_i32_0 = arith.constant 0 : i32
    %c0_i32_1 = arith.constant 0 : i32
    return %c0_i32, %c0_i32_0 : i32, i32
  }
  func.func @transform_7(%arg0: i32) -> (i32, i32) {
    %c0_i32 = arith.constant 0 : i32
    %c0_i32_0 = arith.constant 0 : i32
    %c0_i32_1 = arith.constant 0 : i32
    return %c0_i32, %c0_i32_0 : i32, i32
  }
}

</mosaic_0001>

<llo_original>
// kernel: discriminator_forward.5
$region0: #{discriminator_forward.5}
  #allocation0 [shape = 'u32[]', space=smem, size = 0x4, offset = 0x4, fixed_abs, tag = 'smem constant byte address 0x4 - core index']
  #allocation1 [shape = 'u32[144,128]{1,0:T(1,128)}', space=vmem, size = 0x12000, scoped, tag = 'internal scratch']
  %s0 = inlined_call_operand.vmem [shape: bf16[8,48], index: 0, kind: input, shape index: {}]
  %s1 = inlined_call_operand.vmem [shape: bf16[48,2048], index: 1, kind: input, shape index: {}]
  %s2 = inlined_call_operand.vmem [shape: bf16[8,2048], index: 2, kind: output, shape index: {}]
  %s3 = sld [smem:[#allocation0]]
  $region18: #{discriminator_forward.5} parent=0
    _
  %s5 = ssub.s32 1, %s3
  %s6 = scalar_select 0, %s5, %s3
  // Predicated region
  $region2: #{discriminator_forward.5} parent=0 // pred_check
    _
  $region3: #{discriminator_forward.5} parent=0 // pred_check_branch
    %8 = sbr.rel (0) target = $region5
  $region4: #{discriminator_forward.5} parent=0 // pred_region
    _
  $region5: #{discriminator_forward.5} parent=0 // pred_fallthru
    _
  // Predicated region
  $region6: #{discriminator_forward.5} parent=0 // pred_check
    _
  $region7: #{discriminator_forward.5} parent=0 // pred_check_branch
    %10 = sbr.rel (0) target = $region9
  $region8: #{discriminator_forward.5} parent=0 // pred_region
    _
  $region9: #{discriminator_forward.5} parent=0 // pred_fallthru
    _
  %v12 = vld [vmem:[%s0] sm:$0xf]
  %v13 = vld [vmem:[%s1] sm:$0xff]
  %v14 = vld [vmem:[%s1 + $0x8] sm:$0xff]
  %v15 = vld [vmem:[%s1 + $0x10] sm:$0xff]
  %v16 = vld [vmem:[%s1 + $0x18] sm:$0xff]
  %v17 = vld [vmem:[%s1 + $0x20] sm:$0xff]
  %v18 = vld [vmem:[%s1 + $0x28] sm:$0xff]
  %v19 = vld [vmem:[%s1 + $0x30] sm:$0xff]
  %v20 = vld [vmem:[%s1 + $0x38] sm:$0xff]
  %v21 = vld [vmem:[%s1 + $0x40] sm:$0xff]
  %v22 = vld [vmem:[%s1 + $0x48] sm:$0xff]
  %v23 = vld [vmem:[%s1 + $0x50] sm:$0xff]
  %v24 = vld [vmem:[%s1 + $0x58] sm:$0xff]
  %v25 = vld [vmem:[%s1 + $0x60] sm:$0xff]
  %v26 = vld [vmem:[%s1 + $0x68] sm:$0xff]
  %v27 = vld [vmem:[%s1 + $0x70] sm:$0xff]
  %v28 = vld [vmem:[%s1 + $0x78] sm:$0xff]
  %v29 = vld [vmem:[%s1 + $0x80] sm:$0xff]
  %v30 = vld [vmem:[%s1 + $0x88] sm:$0xff]
  %v31 = vld [vmem:[%s1 + $0x90] sm:$0xff]
  %v32 = vld [vmem:[%s1 + $0x98] sm:$0xff]
  %v33 = vld [vmem:[%s1 + $0xa0] sm:$0xff]
  %v34 = vld [vmem:[%s1 + $0xa8] sm:$0xff]
  %v35 = vld [vmem:[%s1 + $0xb0] sm:$0xff]
  %v36 = vld [vmem:[%s1 + $0xb8] sm:$0xff]
  %v37 = vld [vmem:[%s1 + $0xc0] sm:$0xff]
  %v38 = vld [vmem:[%s1 + $0xc8] sm:$0xff]
  %v39 = vld [vmem:[%s1 + $0xd0] sm:$0xff]
  %v40 = vld [vmem:[%s1 + $0xd8] sm:$0xff]
  %v41 = vld [vmem:[%s1 + $0xe0] sm:$0xff]
  %v42 = vld [vmem:[%s1 + $0xe8] sm:$0xff]
  %v43 = vld [vmem:[%s1 + $0xf0] sm:$0xff]
  %v44 = vld [vmem:[%s1 + $0xf8] sm:$0xff]
  %v45 = vld [vmem:[%s1 + $0x100] sm:$0xff]
  %v46 = vld [vmem:[%s1 + $0x108] sm:$0xff]
  %v47 = vld [vmem:[%s1 + $0x110] sm:$0xff]
  %v48 = vld [vmem:[%s1 + $0x118] sm:$0xff]
  %v49 = vld [vmem:[%s1 + $0x120] sm:$0xff]
  %v50 = vld [vmem:[%s1 + $0x128] sm:$0xff]
  %v51 = vld [vmem:[%s1 + $0x130] sm:$0xff]
  %v52 = vld [vmem:[%s1 + $0x138] sm:$0xff]
  %v53 = vld [vmem:[%s1 + $0x140] sm:$0xff]
  %v54 = vld [vmem:[%s1 + $0x148] sm:$0xff]
  %v55 = vld [vmem:[%s1 + $0x150] sm:$0xff]
  %v56 = vld [vmem:[%s1 + $0x158] sm:$0xff]
  %v57 = vld [vmem:[%s1 + $0x160] sm:$0xff]
  %v58 = vld [vmem:[%s1 + $0x168] sm:$0xff]
  %v59 = vld [vmem:[%s1 + $0x170] sm:$0xff]
  %v60 = vld [vmem:[%s1 + $0x178] sm:$0xff]
  %v109 = vunpack.c.l.b16 %v13
  %v110 = vunpack.c.h.b16 %v13
  %v111 = vunpack.c.l.b16 %v14
  %v112 = vunpack.c.h.b16 %v14
  %v113 = vunpack.c.l.b16 %v15
  %v114 = vunpack.c.h.b16 %v15
  %v115 = vunpack.c.l.b16 %v16
  %v116 = vunpack.c.h.b16 %v16
  %v117 = vunpack.c.l.b16 %v17
  %v118 = vunpack.c.h.b16 %v17
  %v119 = vunpack.c.l.b16 %v18
  %v120 = vunpack.c.h.b16 %v18
  %v121 = vunpack.c.l.b16 %v19
  %v122 = vunpack.c.h.b16 %v19
  %v123 = vunpack.c.l.b16 %v20
  %v124 = vunpack.c.h.b16 %v20
  %v125 = vunpack.c.l.b16 %v21
  %v126 = vunpack.c.h.b16 %v21
  %v127 = vunpack.c.l.b16 %v22
  %v128 = vunpack.c.h.b16 %v22
  %v129 = vunpack.c.l.b16 %v23
  %v130 = vunpack.c.h.b16 %v23
  %v131 = vunpack.c.l.b16 %v24
  %v132 = vunpack.c.h.b16 %v24
  %v133 = vunpack.c.l.b16 %v25
  %v134 = vunpack.c.h.b16 %v25
  %v135 = vunpack.c.l.b16 %v26
  %v136 = vunpack.c.h.b16 %v26
  %v137 = vunpack.c.l.b16 %v27
  %v138 = vunpack.c.h.b16 %v27
  %v139 = vunpack.c.l.b16 %v28
  %v140 = vunpack.c.h.b16 %v28
  %v141 = vunpack.c.l.b16 %v29
  %v142 = vunpack.c.h.b16 %v29
  %v143 = vunpack.c.l.b16 %v30
  %v144 = vunpack.c.h.b16 %v30
  %v145 = vunpack.c.l.b16 %v31
  %v146 = vunpack.c.h.b16 %v31
  %v147 = vunpack.c.l.b16 %v32
  %v148 = vunpack.c.h.b16 %v32
  %v149 = vunpack.c.l.b16 %v33
  %v150 = vunpack.c.h.b16 %v33
  %v151 = vunpack.c.l.b16 %v34
  %v152 = vunpack.c.h.b16 %v34
  %v153 = vunpack.c.l.b16 %v35
  %v154 = vunpack.c.h.b16 %v35
  %v155 = vunpack.c.l.b16 %v36
  %v156 = vunpack.c.h.b16 %v36
  %v157 = vunpack.c.l.b16 %v37
  %v158 = vunpack.c.h.b16 %v37
  %v159 = vunpack.c.l.b16 %v38
  %v160 = vunpack.c.h.b16 %v38
  %v161 = vunpack.c.l.b16 %v39
  %v162 = vunpack.c.h.b16 %v39
  %v163 = vunpack.c.l.b16 %v40
  %v164 = vunpack.c.h.b16 %v40
  %v165 = vunpack.c.l.b16 %v41
  %v166 = vunpack.c.h.b16 %v41
  %v167 = vunpack.c.l.b16 %v42
  %v168 = vunpack.c.h.b16 %v42
  %v169 = vunpack.c.l.b16 %v43
  %v170 = vunpack.c.h.b16 %v43
  %v171 = vunpack.c.l.b16 %v44
  %v172 = vunpack.c.h.b16 %v44
  %v173 = vunpack.c.l.b16 %v45
  %v174 = vunpack.c.h.b16 %v45
  %v175 = vunpack.c.l.b16 %v46
  %v176 = vunpack.c.h.b16 %v46
  %v177 = vunpack.c.l.b16 %v47
  %v178 = vunpack.c.h.b16 %v47
  %v179 = vunpack.c.l.b16 %v48
  %v180 = vunpack.c.h.b16 %v48
  %v181 = vunpack.c.l.b16 %v49
  %v182 = vunpack.c.h.b16 %v49
  %v183 = vunpack.c.l.b16 %v50
  %v184 = vunpack.c.h.b16 %v50
  %v185 = vunpack.c.l.b16 %v51
  %v186 = vunpack.c.h.b16 %v51
  %v187 = vunpack.c.l.b16 %v52
  %v188 = vunpack.c.h.b16 %v52
  %v189 = vunpack.c.l.b16 %v53
  %v190 = vunpack.c.h.b16 %v53
  %v191 = vunpack.c.l.b16 %v54
  %v192 = vunpack.c.h.b16 %v54
  %v193 = vunpack.c.l.b16 %v55
  %v194 = vunpack.c.h.b16 %v55
  %v195 = vunpack.c.l.b16 %v56
  %v196 = vunpack.c.h.b16 %v56
  %v197 = vunpack.c.l.b16 %v57
  %v198 = vunpack.c.h.b16 %v57
  %v199 = vunpack.c.l.b16 %v58
  %v200 = vunpack.c.h.b16 %v58
  %v201 = vunpack.c.l.b16 %v59
  %v202 = vunpack.c.h.b16 %v59
  %v203 = vunpack.c.l.b16 %v60
  %v204 = vunpack.c.h.b16 %v60
  %v205 = vpack.c.b16 %v125, %v109
  %v206 = vpack.c.b16 %v126, %v110
  %v207 = vpack.c.b16 %v127, %v111
  %v208 = vpack.c.b16 %v128, %v112
  %v209 = vpack.c.b16 %v129, %v113
  %v210 = vpack.c.b16 %v130, %v114
  %v211 = vpack.c.b16 %v131, %v115
  %v212 = vpack.c.b16 %v132, %v116
  %v213 = vpack.c.b16 %v133, %v117
  %v214 = vpack.c.b16 %v134, %v118
  %v215 = vpack.c.b16 %v135, %v119
  %v216 = vpack.c.b16 %v136, %v120
  %v217 = vpack.c.b16 %v137, %v121
  %v218 = vpack.c.b16 %v138, %v122
  %v219 = vpack.c.b16 %v139, %v123
  %v220 = vpack.c.b16 %v140, %v124
  %v221 = vpack.c.b16 %v157, %v141
  %v222 = vpack.c.b16 %v158, %v142
  %v223 = vpack.c.b16 %v159, %v143
  %v224 = vpack.c.b16 %v160, %v144
  %v225 = vpack.c.b16 %v161, %v145
  %v226 = vpack.c.b16 %v162, %v146
  %v227 = vpack.c.b16 %v163, %v147
  %v228 = vpack.c.b16 %v164, %v148
  %v229 = vpack.c.b16 %v165, %v149
  %v230 = vpack.c.b16 %v166, %v150
  %v231 = vpack.c.b16 %v167, %v151
  %v232 = vpack.c.b16 %v168, %v152
  %v233 = vpack.c.b16 %v169, %v153
  %v234 = vpack.c.b16 %v170, %v154
  %v235 = vpack.c.b16 %v171, %v155
  %v236 = vpack.c.b16 %v172, %v156
  %v237 = vpack.c.b16 %v189, %v173
  %v238 = vpack.c.b16 %v190, %v174
  %v239 = vpack.c.b16 %v191, %v175
  %v240 = vpack.c.b16 %v192, %v176
  %v241 = vpack.c.b16 %v193, %v177
  %v242 = vpack.c.b16 %v194, %v178
  %v243 = vpack.c.b16 %v195, %v179
  %v244 = vpack.c.b16 %v196, %v180
  %v245 = vpack.c.b16 %v197, %v181
  %v246 = vpack.c.b16 %v198, %v182
  %v247 = vpack.c.b16 %v199, %v183
  %v248 = vpack.c.b16 %v200, %v184
  %v249 = vpack.c.b16 %v201, %v185
  %v250 = vpack.c.b16 %v202, %v186
  %v251 = vpack.c.b16 %v203, %v187
  %v252 = vpack.c.b16 %v204, %v188
  %vm301 = vcmask 392192
  %v303 = vsel %vm301, %v12, 0
  %305 = vmatprep.subr.bf16.mxu0 0
  %306 = vmatpush1.bf16.msra.mxu0 0
  %307 = vmatprep.subr.bf16.mxu0 0
  %308 = vmatpush1.bf16.msra.mxu0 0
  %309 = vmatprep.subr.bf16.mxu0 0
  %310 = vmatpush1.bf16.msra.mxu0 0
  %311 = vmatprep.subr.bf16.mxu0 0
  %312 = vmatpush1.bf16.msra.mxu0 0
  %313 = vmatprep.subr.bf16.mxu0 0
  %314 = vmatpush1.bf16.msra.mxu0 0
  %315 = vmatprep.subr.bf16.mxu0 %v238
  %316 = vmatpush1.bf16.msra.mxu0 %v237
  %317 = vmatprep.subr.bf16.mxu0 %v222
  %318 = vmatpush1.bf16.msra.mxu0 %v221
  %319 = vmatprep.subr.bf16.mxu0 %v206
  %320 = vmatpush1.bf16.msra.mxu0 %v205
  %321 = vmatprep.subr.bf16.mxu0 0
  %322 = vmatpush2.bf16.msra.mxu0 0
  %323 = vmatprep.subr.bf16.mxu0 0
  %324 = vmatpush2.bf16.msra.mxu0 0
  %325 = vmatprep.subr.bf16.mxu0 0
  %326 = vmatpush2.bf16.msra.mxu0 0
  %327 = vmatprep.subr.bf16.mxu0 0
  %328 = vmatpush2.bf16.msra.mxu0 0
  %329 = vmatprep.subr.bf16.mxu0 0
  %330 = vmatpush2.bf16.msra.mxu0 0
  %331 = vmatprep.subr.bf16.mxu0 0
  %332 = vmatpush2.bf16.msra.mxu0 0
  %333 = vmatprep.subr.bf16.mxu0 0
  %334 = vmatpush2.bf16.msra.mxu0 0
  %335 = vmatprep.subr.bf16.mxu0 0
  %336 = vmatpush2.bf16.msra.mxu0 0
  %337 = vmatprep.mubr.bf16.mxu0 0
  %338 = vmatmul.mubr.bf16.gmra.mxu0 %v303
  %v339 = vpop.f32.mrf.mxu0
  %v340 = vadd.f32 0.0, %v339
  %v341 = vpop.f32.mrf.mxu0
  %v342 = vadd.f32 0.0, %v341
  %v343 = vpop.f32.mrf.mxu0
  %v344 = vpop.f32.mrf.mxu0
  %345 = vdwg.mxu0
  %346 = vmatprep.subr.bf16.mxu0 0
  %347 = vmatpush1.bf16.msra.mxu0 0
  %348 = vmatprep.subr.bf16.mxu0 0
  %349 = vmatpush1.bf16.msra.mxu0 0
  %350 = vmatprep.subr.bf16.mxu0 0
  %351 = vmatpush1.bf16.msra.mxu0 0
  %352 = vmatprep.subr.bf16.mxu0 0
  %353 = vmatpush1.bf16.msra.mxu0 0
  %354 = vmatprep.subr.bf16.mxu0 0
  %355 = vmatpush1.bf16.msra.mxu0 0
  %356 = vmatprep.subr.bf16.mxu0 %v240
  %357 = vmatpush1.bf16.msra.mxu0 %v239
  %358 = vmatprep.subr.bf16.mxu0 %v224
  %359 = vmatpush1.bf16.msra.mxu0 %v223
  %360 = vmatprep.subr.bf16.mxu0 %v208
  %361 = vmatpush1.bf16.msra.mxu0 %v207
  %362 = vmatprep.subr.bf16.mxu0 0
  %363 = vmatpush2.bf16.msra.mxu0 0
  %364 = vmatprep.subr.bf16.mxu0 0
  %365 = vmatpush2.bf16.msra.mxu0 0
  %366 = vmatprep.subr.bf16.mxu0 0
  %367 = vmatpush2.bf16.msra.mxu0 0
  %368 = vmatprep.subr.bf16.mxu0 0
  %369 = vmatpush2.bf16.msra.mxu0 0
  %370 = vmatprep.subr.bf16.mxu0 0
  %371 = vmatpush2.bf16.msra.mxu0 0
  %372 = vmatprep.subr.bf16.mxu0 0
  %373 = vmatpush2.bf16.msra.mxu0 0
  %374 = vmatprep.subr.bf16.mxu0 0
  %375 = vmatpush2.bf16.msra.mxu0 0
  %376 = vmatprep.subr.bf16.mxu0 0
  %377 = vmatpush2.bf16.msra.mxu0 0
  %378 = vmatprep.mubr.bf16.mxu0 0
  %379 = vmatmul.mubr.bf16.gmra.mxu0 %v303
  %v380 = vpop.f32.mrf.mxu0
  %v381 = vadd.f32 0.0, %v380
  %v382 = vpop.f32.mrf.mxu0
  %v383 = vadd.f32 0.0, %v382
  %v384 = vpop.f32.mrf.mxu0
  %v385 = vpop.f32.mrf.mxu0
  %386 = vdwg.mxu0
  %387 = vmatprep.subr.bf16.mxu0 0
  %388 = vmatpush1.bf16.msra.mxu0 0
  %389 = vmatprep.subr.bf16.mxu0 0
  %390 = vmatpush1.bf16.msra.mxu0 0
  %391 = vmatprep.subr.bf16.mxu0 0
  %392 = vmatpush1.bf16.msra.mxu0 0
  %393 = vmatprep.subr.bf16.mxu0 0
  %394 = vmatpush1.bf16.msra.mxu0 0
  %395 = vmatprep.subr.bf16.mxu0 0
  %396 = vmatpush1.bf16.msra.mxu0 0
  %397 = vmatprep.subr.bf16.mxu0 %v242
  %398 = vmatpush1.bf16.msra.mxu0 %v241
  %399 = vmatprep.subr.bf16.mxu0 %v226
  %400 = vmatpush1.bf16.msra.mxu0 %v225
  %401 = vmatprep.subr.bf16.mxu0 %v210
  %402 = vmatpush1.bf16.msra.mxu0 %v209
  %403 = vmatprep.subr.bf16.mxu0 0
  %404 = vmatpush2.bf16.msra.mxu0 0
  %405 = vmatprep.subr.bf16.mxu0 0
  %406 = vmatpush2.bf16.msra.mxu0 0
  %407 = vmatprep.subr.bf16.mxu0 0
  %408 = vmatpush2.bf16.msra.mxu0 0
  %409 = vmatprep.subr.bf16.mxu0 0
  %410 = vmatpush2.bf16.msra.mxu0 0
  %411 = vmatprep.subr.bf16.mxu0 0
  %412 = vmatpush2.bf16.msra.mxu0 0
  %413 = vmatprep.subr.bf16.mxu0 0
  %414 = vmatpush2.bf16.msra.mxu0 0
  %415 = vmatprep.subr.bf16.mxu0 0
  %416 = vmatpush2.bf16.msra.mxu0 0
  %417 = vmatprep.subr.bf16.mxu0 0
  %418 = vmatpush2.bf16.msra.mxu0 0
  %419 = vmatprep.mubr.bf16.mxu0 0
  %420 = vmatmul.mubr.bf16.gmra.mxu0 %v303
  %v421 = vpop.f32.mrf.mxu0
  %v422 = vadd.f32 0.0, %v421
  %v423 = vpop.f32.mrf.mxu0
  %v424 = vadd.f32 0.0, %v423
  %v425 = vpop.f32.mrf.mxu0
  %v426 = vpop.f32.mrf.mxu0
  %427 = vdwg.mxu0
  %428 = vmatprep.subr.bf16.mxu0 0
  %429 = vmatpush1.bf16.msra.mxu0 0
  %430 = vmatprep.subr.bf16.mxu0 0
  %431 = vmatpush1.bf16.msra.mxu0 0
  %432 = vmatprep.subr.bf16.mxu0 0
  %433 = vmatpush1.bf16.msra.mxu0 0
  %434 = vmatprep.subr.bf16.mxu0 0
  %435 = vmatpush1.bf16.msra.mxu0 0
  %436 = vmatprep.subr.bf16.mxu0 0
  %437 = vmatpush1.bf16.msra.mxu0 0
  %438 = vmatprep.subr.bf16.mxu0 %v244
  %439 = vmatpush1.bf16.msra.mxu0 %v243
  %440 = vmatprep.subr.bf16.mxu0 %v228
  %441 = vmatpush1.bf16.msra.mxu0 %v227
  %442 = vmatprep.subr.bf16.mxu0 %v212
  %443 = vmatpush1.bf16.msra.mxu0 %v211
  %444 = vmatprep.subr.bf16.mxu0 0
  %445 = vmatpush2.bf16.msra.mxu0 0
  %446 = vmatprep.subr.bf16.mxu0 0
  %447 = vmatpush2.bf16.msra.mxu0 0
  %448 = vmatprep.subr.bf16.mxu0 0
  %449 = vmatpush2.bf16.msra.mxu0 0
  %450 = vmatprep.subr.bf16.mxu0 0
  %451 = vmatpush2.bf16.msra.mxu0 0
  %452 = vmatprep.subr.bf16.mxu0 0
  %453 = vmatpush2.bf16.msra.mxu0 0
  %454 = vmatprep.subr.bf16.mxu0 0
  %455 = vmatpush2.bf16.msra.mxu0 0
  %456 = vmatprep.subr.bf16.mxu0 0
  %457 = vmatpush2.bf16.msra.mxu0 0
  %458 = vmatprep.subr.bf16.mxu0 0
  %459 = vmatpush2.bf16.msra.mxu0 0
  %460 = vmatprep.mubr.bf16.mxu0 0
  %461 = vmatmul.mubr.bf16.gmra.mxu0 %v303
  %v462 = vpop.f32.mrf.mxu0
  %v463 = vadd.f32 0.0, %v462
  %v464 = vpop.f32.mrf.mxu0
  %v465 = vadd.f32 0.0, %v464
  %v466 = vpop.f32.mrf.mxu0
  %v467 = vpop.f32.mrf.mxu0
  %468 = vdwg.mxu0
  %469 = vmatprep.subr.bf16.mxu0 0
  %470 = vmatpush1.bf16.msra.mxu0 0
  %471 = vmatprep.subr.bf16.mxu0 0
  %472 = vmatpush1.bf16.msra.mxu0 0
  %473 = vmatprep.subr.bf16.mxu0 0
  %474 = vmatpush1.bf16.msra.mxu0 0
  %475 = vmatprep.subr.bf16.mxu0 0
  %476 = vmatpush1.bf16.msra.mxu0 0
  %477 = vmatprep.subr.bf16.mxu0 0
  %478 = vmatpush1.bf16.msra.mxu0 0
  %479 = vmatprep.subr.bf16.mxu0 %v246
  %480 = vmatpush1.bf16.msra.mxu0 %v245
  %481 = vmatprep.subr.bf16.mxu0 %v230
  %482 = vmatpush1.bf16.msra.mxu0 %v229
  %483 = vmatprep.subr.bf16.mxu0 %v214
  %484 = vmatpush1.bf16.msra.mxu0 %v213
  %485 = vmatprep.subr.bf16.mxu0 0
  %486 = vmatpush2.bf16.msra.mxu0 0
  %487 = vmatprep.subr.bf16.mxu0 0
  %488 = vmatpush2.bf16.msra.mxu0 0
  %489 = vmatprep.subr.bf16.mxu0 0
  %490 = vmatpush2.bf16.msra.mxu0 0
  %491 = vmatprep.subr.bf16.mxu0 0
  %492 = vmatpush2.bf16.msra.mxu0 0
  %493 = vmatprep.subr.bf16.mxu0 0
  %494 = vmatpush2.bf16.msra.mxu0 0
  %495 = vmatprep.subr.bf16.mxu0 0
  %496 = vmatpush2.bf16.msra.mxu0 0
  %497 = vmatprep.subr.bf16.mxu0 0
  %498 = vmatpush2.bf16.msra.mxu0 0
  %499 = vmatprep.subr.bf16.mxu0 0
  %500 = vmatpush2.bf16.msra.mxu0 0
  %501 = vmatprep.mubr.bf16.mxu0 0
  %502 = vmatmul.mubr.bf16.gmra.mxu0 %v303
  %v503 = vpop.f32.mrf.mxu0
  %v504 = vadd.f32 0.0, %v503
  %v505 = vpop.f32.mrf.mxu0
  %v506 = vadd.f32 0.0, %v505
  %v507 = vpop.f32.mrf.mxu0
  %v508 = vpop.f32.mrf.mxu0
  %509 = vdwg.mxu0
  %510 = vmatprep.subr.bf16.mxu0 0
  %511 = vmatpush1.bf16.msra.mxu0 0
  %512 = vmatprep.subr.bf16.mxu0 0
  %513 = vmatpush1.bf16.msra.mxu0 0
  %514 = vmatprep.subr.bf16.mxu0 0
  %515 = vmatpush1.bf16.msra.mxu0 0
  %516 = vmatprep.subr.bf16.mxu0 0
  %517 = vmatpush1.bf16.msra.mxu0 0
  %518 = vmatprep.subr.bf16.mxu0 0
  %519 = vmatpush1.bf16.msra.mxu0 0
  %520 = vmatprep.subr.bf16.mxu0 %v248
  %521 = vmatpush1.bf16.msra.mxu0 %v247
  %522 = vmatprep.subr.bf16.mxu0 %v232
  %523 = vmatpush1.bf16.msra.mxu0 %v231
  %524 = vmatprep.subr.bf16.mxu0 %v216
  %525 = vmatpush1.bf16.msra.mxu0 %v215
  %526 = vmatprep.subr.bf16.mxu0 0
  %527 = vmatpush2.bf16.msra.mxu0 0
  %528 = vmatprep.subr.bf16.mxu0 0
  %529 = vmatpush2.bf16.msra.mxu0 0
  %530 = vmatprep.subr.bf16.mxu0 0
  %531 = vmatpush2.bf16.msra.mxu0 0
  %532 = vmatprep.subr.bf16.mxu0 0
  %533 = vmatpush2.bf16.msra.mxu0 0
  %534 = vmatprep.subr.bf16.mxu0 0
  %535 = vmatpush2.bf16.msra.mxu0 0
  %536 = vmatprep.subr.bf16.mxu0 0
  %537 = vmatpush2.bf16.msra.mxu0 0
  %538 = vmatprep.subr.bf16.mxu0 0
  %539 = vmatpush2.bf16.msra.mxu0 0
  %540 = vmatprep.subr.bf16.mxu0 0
  %541 = vmatpush2.bf16.msra.mxu0 0
  %542 = vmatprep.mubr.bf16.mxu0 0
  %543 = vmatmul.mubr.bf16.gmra.mxu0 %v303
  %v544 = vpop.f32.mrf.mxu0
  %v545 = vadd.f32 0.0, %v544
  %v546 = vpop.f32.mrf.mxu0
  %v547 = vadd.f32 0.0, %v546
  %v548 = vpop.f32.mrf.mxu0
  %v549 = vpop.f32.mrf.mxu0
  %550 = vdwg.mxu0
  %551 = vmatprep.subr.bf16.mxu0 0
  %552 = vmatpush1.bf16.msra.mxu0 0
  %553 = vmatprep.subr.bf16.mxu0 0
  %554 = vmatpush1.bf16.msra.mxu0 0
  %555 = vmatprep.subr.bf16.mxu0 0
  %556 = vmatpush1.bf16.msra.mxu0 0
  %557 = vmatprep.subr.bf16.mxu0 0
  %558 = vmatpush1.bf16.msra.mxu0 0
  %559 = vmatprep.subr.bf16.mxu0 0
  %560 = vmatpush1.bf16.msra.mxu0 0
  %561 = vmatprep.subr.bf16.mxu0 %v250
  %562 = vmatpush1.bf16.msra.mxu0 %v249
  %563 = vmatprep.subr.bf16.mxu0 %v234
  %564 = vmatpush1.bf16.msra.mxu0 %v233
  %565 = vmatprep.subr.bf16.mxu0 %v218
  %566 = vmatpush1.bf16.msra.mxu0 %v217
  %567 = vmatprep.subr.bf16.mxu0 0
  %568 = vmatpush2.bf16.msra.mxu0 0
  %569 = vmatprep.subr.bf16.mxu0 0
  %570 = vmatpush2.bf16.msra.mxu0 0
  %571 = vmatprep.subr.bf16.mxu0 0
  %572 = vmatpush2.bf16.msra.mxu0 0
  %573 = vmatprep.subr.bf16.mxu0 0
  %574 = vmatpush2.bf16.msra.mxu0 0
  %575 = vmatprep.subr.bf16.mxu0 0
  %576 = vmatpush2.bf16.msra.mxu0 0
  %577 = vmatprep.subr.bf16.mxu0 0
  %578 = vmatpush2.bf16.msra.mxu0 0
  %579 = vmatprep.subr.bf16.mxu0 0
  %580 = vmatpush2.bf16.msra.mxu0 0
  %581 = vmatprep.subr.bf16.mxu0 0
  %582 = vmatpush2.bf16.msra.mxu0 0
  %583 = vmatprep.mubr.bf16.mxu0 0
  %584 = vmatmul.mubr.bf16.gmra.mxu0 %v303
  %v585 = vpop.f32.mrf.mxu0
  %v586 = vadd.f32 0.0, %v585
  %v587 = vpop.f32.mrf.mxu0
  %v588 = vadd.f32 0.0, %v587
  %v589 = vpop.f32.mrf.mxu0
  %v590 = vpop.f32.mrf.mxu0
  %591 = vdwg.mxu0
  %592 = vmatprep.subr.bf16.mxu0 0
  %593 = vmatpush1.bf16.msra.mxu0 0
  %594 = vmatprep.subr.bf16.mxu0 0
  %595 = vmatpush1.bf16.msra.mxu0 0
  %596 = vmatprep.subr.bf16.mxu0 0
  %597 = vmatpush1.bf16.msra.mxu0 0
  %598 = vmatprep.subr.bf16.mxu0 0
  %599 = vmatpush1.bf16.msra.mxu0 0
  %600 = vmatprep.subr.bf16.mxu0 0
  %601 = vmatpush1.bf16.msra.mxu0 0
  %602 = vmatprep.subr.bf16.mxu0 %v252
  %603 = vmatpush1.bf16.msra.mxu0 %v251
  %604 = vmatprep.subr.bf16.mxu0 %v236
  %605 = vmatpush1.bf16.msra.mxu0 %v235
  %606 = vmatprep.subr.bf16.mxu0 %v220
  %607 = vmatpush1.bf16.msra.mxu0 %v219
  %608 = vmatprep.subr.bf16.mxu0 0
  %609 = vmatpush2.bf16.msra.mxu0 0
  %610 = vmatprep.subr.bf16.mxu0 0
  %611 = vmatpush2.bf16.msra.mxu0 0
  %612 = vmatprep.subr.bf16.mxu0 0
  %613 = vmatpush2.bf16.msra.mxu0 0
  %614 = vmatprep.subr.bf16.mxu0 0
  %615 = vmatpush2.bf16.msra.mxu0 0
  %616 = vmatprep.subr.bf16.mxu0 0
  %617 = vmatpush2.bf16.msra.mxu0 0
  %618 = vmatprep.subr.bf16.mxu0 0
  %619 = vmatpush2.bf16.msra.mxu0 0
  %620 = vmatprep.subr.bf16.mxu0 0
  %621 = vmatpush2.bf16.msra.mxu0 0
  %622 = vmatprep.subr.bf16.mxu0 0
  %623 = vmatpush2.bf16.msra.mxu0 0
  %624 = vmatprep.mubr.bf16.mxu0 0
  %625 = vmatmul.mubr.bf16.gmra.mxu0 %v303
  %v626 = vpop.f32.mrf.mxu0
  %v627 = vadd.f32 0.0, %v626
  %v628 = vpop.f32.mrf.mxu0
  %v629 = vadd.f32 0.0, %v628
  %v630 = vpop.f32.mrf.mxu0
  %v631 = vpop.f32.mrf.mxu0
  %632 = vdwg.mxu0
  %vm633 = vcmp.ge.f32.partialorder %v340, 0.0
  %vm634 = vcmp.ge.f32.partialorder %v342, 0.0
  %vm635 = vcmp.ge.f32.partialorder %v381, 0.0
  %vm636 = vcmp.ge.f32.partialorder %v383, 0.0
  %vm637 = vcmp.ge.f32.partialorder %v422, 0.0
  %vm638 = vcmp.ge.f32.partialorder %v424, 0.0
  %vm639 = vcmp.ge.f32.partialorder %v463, 0.0
  %vm640 = vcmp.ge.f32.partialorder %v465, 0.0
  %vm641 = vcmp.ge.f32.partialorder %v504, 0.0
  %vm642 = vcmp.ge.f32.partialorder %v506, 0.0
  %vm643 = vcmp.ge.f32.partialorder %v545, 0.0
  %vm644 = vcmp.ge.f32.partialorder %v547, 0.0
  %vm645 = vcmp.ge.f32.partialorder %v586, 0.0
  %vm646 = vcmp.ge.f32.partialorder %v588, 0.0
  %vm647 = vcmp.ge.f32.partialorder %v627, 0.0
  %vm648 = vcmp.ge.f32.partialorder %v629, 0.0
  %v649 = vmul.f32 %v340, 0.2
  %v650 = vmul.f32 %v342, 0.2
  %v651 = vmul.f32 %v381, 0.2
  %v652 = vmul.f32 %v383, 0.2
  %v653 = vmul.f32 %v422, 0.2
  %v654 = vmul.f32 %v424, 0.2
  %v655 = vmul.f32 %v463, 0.2
  %v656 = vmul.f32 %v465, 0.2
  %v657 = vmul.f32 %v504, 0.2
  %v658 = vmul.f32 %v506, 0.2
  %v659 = vmul.f32 %v545, 0.2
  %v660 = vmul.f32 %v547, 0.2
  %v661 = vmul.f32 %v586, 0.2
  %v662 = vmul.f32 %v588, 0.2
  %v663 = vmul.f32 %v627, 0.2
  %v664 = vmul.f32 %v629, 0.2
  %v665 = vsel %vm633, %v340, %v649
  %v666 = vsel %vm634, %v342, %v650
  %v667 = vsel %vm635, %v381, %v651
  %v668 = vsel %vm636, %v383, %v652
  %v669 = vsel %vm637, %v422, %v653
  %v670 = vsel %vm638, %v424, %v654
  %v671 = vsel %vm639, %v463, %v655
  %v672 = vsel %vm640, %v465, %v656
  %v673 = vsel %vm641, %v504, %v657
  %v674 = vsel %vm642, %v506, %v658
  %v675 = vsel %vm643, %v545, %v659
  %v676 = vsel %vm644, %v547, %v660
  %v677 = vsel %vm645, %v586, %v661
  %v678 = vsel %vm646, %v588, %v662
  %v679 = vsel %vm647, %v627, %v663
  %v680 = vsel %vm648, %v629, %v664
  %v681 = vpack.c.bf16 %v665, %v665
  %v682 = vpack.c.bf16 %v666, %v666
  %v683 = vpack.c.bf16 %v667, %v667
  %v684 = vpack.c.bf16 %v668, %v668
  %v685 = vpack.c.bf16 %v669, %v669
  %v686 = vpack.c.bf16 %v670, %v670
  %v687 = vpack.c.bf16 %v671, %v671
  %v688 = vpack.c.bf16 %v672, %v672
  %v689 = vpack.c.bf16 %v673, %v673
  %v690 = vpack.c.bf16 %v674, %v674
  %v691 = vpack.c.bf16 %v675, %v675
  %v692 = vpack.c.bf16 %v676, %v676
  %v693 = vpack.c.bf16 %v677, %v677
  %v694 = vpack.c.bf16 %v678, %v678
  %v695 = vpack.c.bf16 %v679, %v679
  %v696 = vpack.c.bf16 %v680, %v680
  %v713 = vunpack.c.l.b16 %v681
  %v714 = vunpack.c.l.b16 %v682
  %v715 = vunpack.c.l.b16 %v683
  %v716 = vunpack.c.l.b16 %v684
  %v717 = vunpack.c.l.b16 %v685
  %v718 = vunpack.c.l.b16 %v686
  %v719 = vunpack.c.l.b16 %v687
  %v720 = vunpack.c.l.b16 %v688
  %v721 = vunpack.c.l.b16 %v689
  %v722 = vunpack.c.l.b16 %v690
  %v723 = vunpack.c.l.b16 %v691
  %v724 = vunpack.c.l.b16 %v692
  %v725 = vunpack.c.l.b16 %v693
  %v726 = vunpack.c.l.b16 %v694
  %v727 = vunpack.c.l.b16 %v695
  %v728 = vunpack.c.l.b16 %v696
  %v729 = vpack.c.b16 %v714, %v713
  %v730 = vpack.c.b16 %v716, %v715
  %v731 = vpack.c.b16 %v718, %v717
  %v732 = vpack.c.b16 %v720, %v719
  %v733 = vpack.c.b16 %v722, %v721
  %v734 = vpack.c.b16 %v724, %v723
  %v735 = vpack.c.b16 %v726, %v725
  %v736 = vpack.c.b16 %v728, %v727
  %745 = vst [vmem:[%s2] sm:$0xff] %v729
  %746 = vst [vmem:[%s2 + $0x8] sm:$0xff] %v730
  %747 = vst [vmem:[%s2 + $0x10] sm:$0xff] %v731
  %748 = vst [vmem:[%s2 + $0x18] sm:$0xff] %v732
  %749 = vst [vmem:[%s2 + $0x20] sm:$0xff] %v733
  %750 = vst [vmem:[%s2 + $0x28] sm:$0xff] %v734
  %751 = vst [vmem:[%s2 + $0x30] sm:$0xff] %v735
  %752 = vst [vmem:[%s2 + $0x38] sm:$0xff] %v736
  // Predicated region
  $region10: #{discriminator_forward.5} parent=0 // pred_check
    _
  $region11: #{discriminator_forward.5} parent=0 // pred_check_branch
    %754 = sbr.rel (0) target = $region13
  $region12: #{discriminator_forward.5} parent=0 // pred_region
    _
  $region13: #{discriminator_forward.5} parent=0 // pred_fallthru
    _
  // Predicated region
  $region14: #{discriminator_forward.5} parent=0 // pred_check
    _
  $region15: #{discriminator_forward.5} parent=0 // pred_check_branch
    %756 = sbr.rel (0) target = $region17
  $region16: #{discriminator_forward.5} parent=0 // pred_region
    _
  $region17: #{discriminator_forward.5} parent=0 // pred_fallthru
    _

// kernel: discriminator_forward.6
$region0: #{discriminator_forward.6}
  #allocation0 [shape = 'u32[]', space=smem, size = 0x4, offset = 0x4, fixed_abs, tag = 'smem constant byte address 0x4 - core index']
  #allocation1 [shape = 'u32[144,128]{1,0:T(1,128)}', space=vmem, size = 0x12000, scoped, tag = 'internal scratch']
  #allocation2 [shape = 'f32[8,1]{1,0:T(8,128)}', space=vmem, size = 0x1000, scoped, tag = 'scratch operand']
  #allocation3 [shape = 'f32[8,1]{1,0:T(8,128)}', space=vmem, size = 0x1000, scoped, tag = 'scratch operand']
  %s0 = inlined_call_operand.vmem [shape: bf16[16,128], index: 0, kind: input, shape index: {}]
  %s1 = inlined_call_operand.vmem [shape: bf16[128,512], index: 1, kind: input, shape index: {}]
  %s2 = inlined_call_operand.vmem [shape: f32[16,1], index: 2, kind: input, shape index: {}]
  %s3 = inlined_call_operand.vmem [shape: f32[16,1], index: 3, kind: input, shape index: {}]
  %s4 = inlined_call_operand.vmem [shape: bf16[16,512], index: 4, kind: output, shape index: {}]
  %s5 = sld [smem:[#allocation0]]
  $region49: #{discriminator_forward.6} parent=0
    _
  %s7 = ssub.s32 1, %s5
  %s8 = scalar_select 0, %s7, %s5
  loop: start=0, step=1, limit=4
  $region2: #{discriminator_forward.6} parent=0 // loop_pre_header
    _
  $region3: #{discriminator_forward.6} parent=0 // loop_header
    %s10 = sphi 0, %s14
    %p11 = scmp.ge.s32.totalorder %s10, 4
    %s17 = sphi 0, %s29
    %s18 = sphi 0, %s25
    %s19 = sphi 0, %s17
    %s20 = sphi 0, %s18
    %s21 = sphi 0, %s19
    %s22 = sphi 0, %s20
    %s32 = sphi 0, %s34
    %s35 = sphi 0, %s32
    %s36 = sphi 0, %s35
    %s52 = sphi 0, %s36
    %s58 = sphi 0, %s60
    %s61 = sphi 0, %s58
    %s62 = sphi 0, %s61
    %s78 = sphi 0, %s62
    %s84 = sphi 0, %s86
    %s87 = sphi 0, %s84
    %s88 = sphi 0, %s87
    %s104 = sphi 0, %s88
    %s110 = sphi 0, %s112
    %s113 = sphi 0, %s110
    %s114 = sphi 0, %s113
    %s130 = sphi 0, %s114
    %s136 = sphi 0, %s138
    %s139 = sphi 0, %s136
    %s140 = sphi 0, %s139
    %s156 = sphi 0, %s140
  $region4: #{discriminator_forward.6} parent=0 // loop_header_branch
    %13 = sbr.rel (%p11) target = $region8
  $region5: #{discriminator_forward.6} parent=0 // loop_body
    %s15 = ssub.s32 %s10, 1
    %s16 = ssub.s32 %s10, 2
    %s23 = sadd.s32 1, %s18
    %p24 = scmp.ge.s32.totalorder %s23, 1
    %s25 = scalar_select %p24, 0, %s23
    %s26 = sadd.s32 1, %s17
    %s27 = scalar_select %p24, %s26, %s17
    %p28 = scmp.ge.s32.totalorder %s27, 2
    %s29 = scalar_select %p28, 0, %s27
    %s30 = ssub.s32 %s17, %s29
    %p31 = scmp.eq.s32.totalorder %s30, 0
    %s33 = sadd.s32 %s32, 1
    %s34 = scalar_select %p31, %s32, %s33
    %p37 = pneg %p31
    %p38 = scmp.eq.s32.totalorder %s10, 1
    %p39 = por %p37, %p38
    %p40 = scmp.ne.s32.totalorder %s32, %s35
    %p41 = scmp.eq.s32.totalorder %s10, 0
    %p42 = por %p40, %p41
    %p43 = scmp.ne.s32.totalorder %s32, %s35
    %p44 = scmp.eq.s32.totalorder %s15, 1
    %p45 = por %p43, %p44
    %p46 = scmp.ne.s32.totalorder %s35, %s36
    %p47 = scmp.eq.s32.totalorder %s15, 0
    %p48 = por %p46, %p47
    %p49 = scmp.ne.s32.totalorder %s35, %s36
    %p50 = scmp.eq.s32.totalorder %s16, 1
    %p51 = por %p49, %p50
    %p53 = scmp.ne.s32.totalorder %s36, %s52
    %p54 = scmp.eq.s32.totalorder %s16, 0
    %p55 = por %p53, %p54
    %s56 = ssub.s32 %s18, %s25
    %p57 = scmp.eq.s32.totalorder %s56, 0
    %s59 = sadd.s32 %s58, 1
    %s60 = scalar_select %p57, %s58, %s59
    %p63 = pneg %p57
    %p64 = scmp.eq.s32.totalorder %s10, 1
    %p65 = por %p63, %p64
    %p66 = scmp.ne.s32.totalorder %s58, %s61
    %p67 = scmp.eq.s32.totalorder %s10, 0
    %p68 = por %p66, %p67
    %p69 = scmp.ne.s32.totalorder %s58, %s61
    %p70 = scmp.eq.s32.totalorder %s15, 1
    %p71 = por %p69, %p70
    %p72 = scmp.ne.s32.totalorder %s61, %s62
    %p73 = scmp.eq.s32.totalorder %s15, 0
    %p74 = por %p72, %p73
    %p75 = scmp.ne.s32.totalorder %s61, %s62
    %p76 = scmp.eq.s32.totalorder %s16, 1
    %p77 = por %p75, %p76
    %p79 = scmp.ne.s32.totalorder %s62, %s78
    %p80 = scmp.eq.s32.totalorder %s16, 0
    %p81 = por %p79, %p80
    %s82 = ssub.s32 %s17, %s29
    %p83 = scmp.eq.s32.totalorder %s82, 0
    %s85 = sadd.s32 %s84, 1
    %s86 = scalar_select %p83, %s84, %s85
    %p89 = pneg %p83
    %p90 = scmp.eq.s32.totalorder %s10, 1
    %p91 = por %p89, %p90
    %p92 = scmp.ne.s32.totalorder %s84, %s87
    %p93 = scmp.eq.s32.totalorder %s10, 0
    %p94 = por %p92, %p93
    %p95 = scmp.ne.s32.totalorder %s84, %s87
    %p96 = scmp.eq.s32.totalorder %s15, 1
    %p97 = por %p95, %p96
    %p98 = scmp.ne.s32.totalorder %s87, %s88
    %p99 = scmp.eq.s32.totalorder %s15, 0
    %p100 = por %p98, %p99
    %p101 = scmp.ne.s32.totalorder %s87, %s88
    %p102 = scmp.eq.s32.totalorder %s16, 1
    %p103 = por %p101, %p102
    %p105 = scmp.ne.s32.totalorder %s88, %s104
    %p106 = scmp.eq.s32.totalorder %s16, 0
    %p107 = por %p105, %p106
    %s108 = ssub.s32 %s17, %s29
    %p109 = scmp.eq.s32.totalorder %s108, 0
    %s111 = sadd.s32 %s110, 1
    %s112 = scalar_select %p109, %s110, %s111
    %p115 = pneg %p109
    %p116 = scmp.eq.s32.totalorder %s10, 1
    %p117 = por %p115, %p116
    %p118 = scmp.ne.s32.totalorder %s110, %s113
    %p119 = scmp.eq.s32.totalorder %s10, 0
    %p120 = por %p118, %p119
    %p121 = scmp.ne.s32.totalorder %s110, %s113
    %p122 = scmp.eq.s32.totalorder %s15, 1
    %p123 = por %p121, %p122
    %p124 = scmp.ne.s32.totalorder %s113, %s114
    %p125 = scmp.eq.s32.totalorder %s15, 0
    %p126 = por %p124, %p125
    %p127 = scmp.ne.s32.totalorder %s113, %s114
    %p128 = scmp.eq.s32.totalorder %s16, 1
    %p129 = por %p127, %p128
    %p131 = scmp.ne.s32.totalorder %s114, %s130
    %p132 = scmp.eq.s32.totalorder %s16, 0
    %p133 = por %p131, %p132
    %s134 = ssub.s32 %s17, %s29
    %p135 = scmp.eq.s32.totalorder %s134, 0
    %s137 = sadd.s32 %s136, 1
    %s138 = scalar_select %p135, %s136, %s137
    %p141 = pneg %p135
    %p142 = scmp.eq.s32.totalorder %s10, 1
    %p143 = por %p141, %p142
    %p144 = scmp.ne.s32.totalorder %s136, %s139
    %p145 = scmp.eq.s32.totalorder %s10, 0
    %p146 = por %p144, %p145
    %p147 = scmp.ne.s32.totalorder %s136, %s139
    %p148 = scmp.eq.s32.totalorder %s15, 1
    %p149 = por %p147, %p148
    %p150 = scmp.ne.s32.totalorder %s139, %s140
    %p151 = scmp.eq.s32.totalorder %s15, 0
    %p152 = por %p150, %p151
    %p153 = scmp.ne.s32.totalorder %s139, %s140
    %p154 = scmp.eq.s32.totalorder %s16, 1
    %p155 = por %p153, %p154
    %p157 = scmp.ne.s32.totalorder %s140, %s156
    %p158 = scmp.eq.s32.totalorder %s16, 0
    %p159 = por %p157, %p158
    %p160 = scmp.le.s32.totalorder 1, %s10
    %p161 = scmp.lt.s32.totalorder %s10, 3
    %p162 = pnand %p160, %p161
    %p163 = pneg %p162
    // Predicated region
    $region9: #{discriminator_forward.6} parent=5 // pred_check
      _
    $region10: #{discriminator_forward.6} parent=5 // pred_check_branch
      %165 = sbr.rel (%p162) target = $region12
    $region11: #{discriminator_forward.6} parent=5 // pred_region
      %s166 = ssub.s32 %s10, 1
      // Predicated region
      $region13: #{discriminator_forward.6} parent=11 // pred_check
        %p167 = pneg %p74
      $region14: #{discriminator_forward.6} parent=11 // pred_check_branch
        %169 = sbr.rel (%p167) target = $region16
      $region15: #{discriminator_forward.6} parent=11 // pred_region
        %s170 = smul.u32 4, %s20
        %p171 = scmp.lt.s32.totalorder %s170, 3
        %s172 = scalar_select %p171, %s170, 3
        %s173 = smul.addr %s172, 4
        %s174 = scalar_lea.vmem %s1, %s173
        %s175 = smul.u32 4, %s20
      $region16: #{discriminator_forward.6} parent=11 // pred_fallthru
        _
    $region12: #{discriminator_forward.6} parent=5 // pred_fallthru
      _
    %p176 = scmp.lt.s32.totalorder %s10, 2
    // Predicated region
    $region17: #{discriminator_forward.6} parent=5 // pred_check
      %p177 = pneg %p176
    $region18: #{discriminator_forward.6} parent=5 // pred_check_branch
      %179 = sbr.rel (%p177) target = $region20
    $region19: #{discriminator_forward.6} parent=5 // pred_region
      // Predicated region
      $region21: #{discriminator_forward.6} parent=19 // pred_check
        %p180 = pneg %p42
      $region22: #{discriminator_forward.6} parent=19 // pred_check_branch
        %182 = sbr.rel (%p180) target = $region24
      $region23: #{discriminator_forward.6} parent=19 // pred_region
        %p183 = scmp.lt.s32.totalorder %s17, 1
        %s184 = scalar_select %p183, %s17, 1
        %s185 = smul.addr %s184, 4
        %s186 = scalar_lea.vmem %s0, %s185
      $region24: #{discriminator_forward.6} parent=19 // pred_fallthru
        _
      // Predicated region
      $region25: #{discriminator_forward.6} parent=19 // pred_check
        %p187 = pneg %p94
      $region26: #{discriminator_forward.6} parent=19 // pred_check_branch
        %189 = sbr.rel (%p187) target = $region28
      $region27: #{discriminator_forward.6} parent=19 // pred_region
        %p190 = scmp.lt.s32.totalorder %s17, 1
        %s191 = scalar_select %p190, %s17, 1
        %s192 = smul.addr %s191, 8
        %s193 = scalar_lea.vmem %s2, %s192
      $region28: #{discriminator_forward.6} parent=19 // pred_fallthru
        _
      // Predicated region
      $region29: #{discriminator_forward.6} parent=19 // pred_check
        %p194 = pneg %p120
      $region30: #{discriminator_forward.6} parent=19 // pred_check_branch
        %196 = sbr.rel (%p194) target = $region32
      $region31: #{discriminator_forward.6} parent=19 // pred_region
        %p197 = scmp.lt.s32.totalorder %s17, 1
        %s198 = scalar_select %p197, %s17, 1
        %s199 = smul.addr %s198, 8
        %s200 = scalar_lea.vmem %s3, %s199
      $region32: #{discriminator_forward.6} parent=19 // pred_fallthru
        _
    $region20: #{discriminator_forward.6} parent=5 // pred_fallthru
      _
    %p201 = scmp.le.s32.totalorder 1, %s10
    %p202 = scmp.lt.s32.totalorder %s10, 3
    %p203 = pnand %p201, %p202
    %p204 = pneg %p203
    // Predicated region
    $region33: #{discriminator_forward.6} parent=5 // pred_check
      _
    $region34: #{discriminator_forward.6} parent=5 // pred_check_branch
      %206 = sbr.rel (%p203) target = $region36
    $region35: #{discriminator_forward.6} parent=5 // pred_region
      %s207 = ssub.s32 %s10, 1
      %p208 = scmp.lt.s32.totalorder %s19, 1
      %s209 = scalar_select %p208, %s19, 1
      %s210 = smul.addr %s209, 4
      %s211 = scalar_lea.vmem %s0, %s210
      %p212 = pneg %p48
      %p213 = pneg %p45
      %s214 = smul.u32 4, %s20
      %p215 = scmp.lt.s32.totalorder %s214, 3
      %s216 = scalar_select %p215, %s214, 3
      %s217 = smul.addr %s216, 4
      %s218 = scalar_lea.vmem %s1, %s217
      %p219 = pneg %p74
      %p220 = pneg %p71
      %p221 = scmp.lt.s32.totalorder %s19, 1
      %s222 = scalar_select %p221, %s19, 1
      %s223 = smul.addr %s222, 8
      %s224 = scalar_lea.vmem %s2, %s223
      %p225 = pneg %p100
      %p226 = pneg %p97
      %p227 = scmp.lt.s32.totalorder %s19, 1
      %s228 = scalar_select %p227, %s19, 1
      %s229 = smul.addr %s228, 8
      %s230 = scalar_lea.vmem %s3, %s229
      %p231 = pneg %p126
      %p232 = pneg %p123
      %p233 = pneg %p152
      %p234 = pneg %p149
      %p235 = scmp.lt.s32.totalorder %s19, 1
      %s236 = scalar_select %p235, %s19, 1
      %s237 = smul.addr %s236, 4
      %s238 = smul.addr %s237, 4
      %s239 = scalar_lea.vmem %s4, %s238
      %p240 = scmp.lt.s32.totalorder %s19, 1
      %s241 = scalar_select %p240, %s19, 1
      %s242 = smul.addr %s241, 4
      %s243 = scalar_lea.vmem %s0, %s242
      %s244 = smul.u32 4, %s20
      %p245 = scmp.lt.s32.totalorder %s244, 3
      %s246 = scalar_select %p245, %s244, 3
      %s247 = smul.addr %s246, 4
      %s248 = scalar_lea.vmem %s1, %s247
      %s249 = smul.u32 4, %s20
      %p250 = scmp.lt.s32.totalorder %s19, 1
      %s251 = scalar_select %p250, %s19, 1
      %s252 = smul.addr %s251, 8
      %s253 = scalar_lea.vmem %s2, %s252
      %p254 = scmp.lt.s32.totalorder %s19, 1
      %s255 = scalar_select %p254, %s19, 1
      %s256 = smul.addr %s255, 8
      %s257 = scalar_lea.vmem %s3, %s256
      %p258 = scmp.lt.s32.totalorder %s19, 1
      %s259 = scalar_select %p258, %s19, 1
      %s260 = smul.addr %s259, 4
      %s261 = smul.addr %s260, 4
      %s262 = scalar_lea.vmem %s4, %s261
      %v264 = vld [vmem:[%s243] sm:$0xf]
      %v265 = vld [vmem:[%s248] sm:$0xff]
      %v266 = vld [vmem:[%s248 + $0x8] sm:$0xff]
      %v267 = vld [vmem:[%s248 + $0x10] sm:$0xff]
      %v268 = vld [vmem:[%s248 + $0x18] sm:$0xff]
      %v269 = vld [vmem:[%s248 + $0x20] sm:$0xff]
      %v270 = vld [vmem:[%s248 + $0x28] sm:$0xff]
      %v271 = vld [vmem:[%s248 + $0x30] sm:$0xff]
      %v272 = vld [vmem:[%s248 + $0x38] sm:$0xff]
      %v273 = vld [vmem:[%s248 + $0x40] sm:$0xff]
      %v274 = vld [vmem:[%s248 + $0x48] sm:$0xff]
      %v275 = vld [vmem:[%s248 + $0x50] sm:$0xff]
      %v276 = vld [vmem:[%s248 + $0x58] sm:$0xff]
      %v277 = vld [vmem:[%s248 + $0x60] sm:$0xff]
      %v278 = vld [vmem:[%s248 + $0x68] sm:$0xff]
      %v279 = vld [vmem:[%s248 + $0x70] sm:$0xff]
      %v280 = vld [vmem:[%s248 + $0x78] sm:$0xff]
      %v281 = vld [vmem:[%s248 + $0x80] sm:$0xff]
      %v282 = vld [vmem:[%s248 + $0x88] sm:$0xff]
      %v283 = vld [vmem:[%s248 + $0x90] sm:$0xff]
      %v284 = vld [vmem:[%s248 + $0x98] sm:$0xff]
      %v285 = vld [vmem:[%s248 + $0xa0] sm:$0xff]
      %v286 = vld [vmem:[%s248 + $0xa8] sm:$0xff]
      %v287 = vld [vmem:[%s248 + $0xb0] sm:$0xff]
      %v288 = vld [vmem:[%s248 + $0xb8] sm:$0xff]
      %v289 = vld [vmem:[%s248 + $0xc0] sm:$0xff]
      %v290 = vld [vmem:[%s248 + $0xc8] sm:$0xff]
      %v291 = vld [vmem:[%s248 + $0xd0] sm:$0xff]
      %v292 = vld [vmem:[%s248 + $0xd8] sm:$0xff]
      %v293 = vld [vmem:[%s248 + $0xe0] sm:$0xff]
      %v294 = vld [vmem:[%s248 + $0xe8] sm:$0xff]
      %v295 = vld [vmem:[%s248 + $0xf0] sm:$0xff]
      %v296 = vld [vmem:[%s248 + $0xf8] sm:$0xff]
      %v329 = vunpack.c.l.b16 %v265
      %v330 = vunpack.c.h.b16 %v265
      %v331 = vunpack.c.l.b16 %v266
      %v332 = vunpack.c.h.b16 %v266
      %v333 = vunpack.c.l.b16 %v267
      %v334 = vunpack.c.h.b16 %v267
      %v335 = vunpack.c.l.b16 %v268
      %v336 = vunpack.c.h.b16 %v268
      %v337 = vunpack.c.l.b16 %v269
      %v338 = vunpack.c.h.b16 %v269
      %v339 = vunpack.c.l.b16 %v270
      %v340 = vunpack.c.h.b16 %v270
      %v341 = vunpack.c.l.b16 %v271
      %v342 = vunpack.c.h.b16 %v271
      %v343 = vunpack.c.l.b16 %v272
      %v344 = vunpack.c.h.b16 %v272
      %v345 = vunpack.c.l.b16 %v273
      %v346 = vunpack.c.h.b16 %v273
      %v347 = vunpack.c.l.b16 %v274
      %v348 = vunpack.c.h.b16 %v274
      %v349 = vunpack.c.l.b16 %v275
      %v350 = vunpack.c.h.b16 %v275
      %v351 = vunpack.c.l.b16 %v276
      %v352 = vunpack.c.h.b16 %v276
      %v353 = vunpack.c.l.b16 %v277
      %v354 = vunpack.c.h.b16 %v277
      %v355 = vunpack.c.l.b16 %v278
      %v356 = vunpack.c.h.b16 %v278
      %v357 = vunpack.c.l.b16 %v279
      %v358 = vunpack.c.h.b16 %v279
      %v359 = vunpack.c.l.b16 %v280
      %v360 = vunpack.c.h.b16 %v280
      %v361 = vunpack.c.l.b16 %v281
      %v362 = vunpack.c.h.b16 %v281
      %v363 = vunpack.c.l.b16 %v282
      %v364 = vunpack.c.h.b16 %v282
      %v365 = vunpack.c.l.b16 %v283
      %v366 = vunpack.c.h.b16 %v283
      %v367 = vunpack.c.l.b16 %v284
      %v368 = vunpack.c.h.b16 %v284
      %v369 = vunpack.c.l.b16 %v285
      %v370 = vunpack.c.h.b16 %v285
      %v371 = vunpack.c.l.b16 %v286
      %v372 = vunpack.c.h.b16 %v286
      %v373 = vunpack.c.l.b16 %v287
      %v374 = vunpack.c.h.b16 %v287
      %v375 = vunpack.c.l.b16 %v288
      %v376 = vunpack.c.h.b16 %v288
      %v377 = vunpack.c.l.b16 %v289
      %v378 = vunpack.c.h.b16 %v289
      %v379 = vunpack.c.l.b16 %v290
      %v380 = vunpack.c.h.b16 %v290
      %v381 = vunpack.c.l.b16 %v291
      %v382 = vunpack.c.h.b16 %v291
      %v383 = vunpack.c.l.b16 %v292
      %v384 = vunpack.c.h.b16 %v292
      %v385 = vunpack.c.l.b16 %v293
      %v386 = vunpack.c.h.b16 %v293
      %v387 = vunpack.c.l.b16 %v294
      %v388 = vunpack.c.h.b16 %v294
      %v389 = vunpack.c.l.b16 %v295
      %v390 = vunpack.c.h.b16 %v295
      %v391 = vunpack.c.l.b16 %v296
      %v392 = vunpack.c.h.b16 %v296
      %v393 = vpack.c.b16 %v333, %v329
      %v394 = vpack.c.b16 %v334, %v330
      %v395 = vpack.c.b16 %v335, %v331
      %v396 = vpack.c.b16 %v336, %v332
      %v397 = vpack.c.b16 %v341, %v337
      %v398 = vpack.c.b16 %v342, %v338
      %v399 = vpack.c.b16 %v343, %v339
      %v400 = vpack.c.b16 %v344, %v340
      %v401 = vpack.c.b16 %v349, %v345
      %v402 = vpack.c.b16 %v350, %v346
      %v403 = vpack.c.b16 %v351, %v347
      %v404 = vpack.c.b16 %v352, %v348
      %v405 = vpack.c.b16 %v357, %v353
      %v406 = vpack.c.b16 %v358, %v354
      %v407 = vpack.c.b16 %v359, %v355
      %v408 = vpack.c.b16 %v360, %v356
      %v409 = vpack.c.b16 %v365, %v361
      %v410 = vpack.c.b16 %v366, %v362
      %v411 = vpack.c.b16 %v367, %v363
      %v412 = vpack.c.b16 %v368, %v364
      %v413 = vpack.c.b16 %v373, %v369
      %v414 = vpack.c.b16 %v374, %v370
      %v415 = vpack.c.b16 %v375, %v371
      %v416 = vpack.c.b16 %v376, %v372
      %v417 = vpack.c.b16 %v381, %v377
      %v418 = vpack.c.b16 %v382, %v378
      %v419 = vpack.c.b16 %v383, %v379
      %v420 = vpack.c.b16 %v384, %v380
      %v421 = vpack.c.b16 %v389, %v385
      %v422 = vpack.c.b16 %v390, %v386
      %v423 = vpack.c.b16 %v391, %v387
      %v424 = vpack.c.b16 %v392, %v388
      %457 = vmatprep.subr.bf16.mxu0 %v422
      %458 = vmatpush1.bf16.msra.mxu0 %v421
      %459 = vmatprep.subr.bf16.mxu0 %v418
      %460 = vmatpush1.bf16.msra.mxu0 %v417
      %461 = vmatprep.subr.bf16.mxu0 %v414
      %462 = vmatpush1.bf16.msra.mxu0 %v413
      %463 = vmatprep.subr.bf16.mxu0 %v410
      %464 = vmatpush1.bf16.msra.mxu0 %v409
      %465 = vmatprep.subr.bf16.mxu0 %v406
      %466 = vmatpush1.bf16.msra.mxu0 %v405
      %467 = vmatprep.subr.bf16.mxu0 %v402
      %468 = vmatpush1.bf16.msra.mxu0 %v401
      %469 = vmatprep.subr.bf16.mxu0 %v398
      %470 = vmatpush1.bf16.msra.mxu0 %v397
      %471 = vmatprep.subr.bf16.mxu0 %v394
      %472 = vmatpush1.bf16.msra.mxu0 %v393
      %473 = vmatprep.subr.bf16.mxu0 0
      %474 = vmatpush2.bf16.msra.mxu0 0
      %475 = vmatprep.subr.bf16.mxu0 0
      %476 = vmatpush2.bf16.msra.mxu0 0
      %477 = vmatprep.subr.bf16.mxu0 0
      %478 = vmatpush2.bf16.msra.mxu0 0
      %479 = vmatprep.subr.bf16.mxu0 0
      %480 = vmatpush2.bf16.msra.mxu0 0
      %481 = vmatprep.subr.bf16.mxu0 0
      %482 = vmatpush2.bf16.msra.mxu0 0
      %483 = vmatprep.subr.bf16.mxu0 0
      %484 = vmatpush2.bf16.msra.mxu0 0
      %485 = vmatprep.subr.bf16.mxu0 0
      %486 = vmatpush2.bf16.msra.mxu0 0
      %487 = vmatprep.subr.bf16.mxu0 0
      %488 = vmatpush2.bf16.msra.mxu0 0
      %489 = vmatprep.mubr.bf16.mxu0 0
      %490 = vmatmul.mubr.bf16.gmra.mxu0 %v264
      %v491 = vpop.f32.mrf.mxu0
      %v492 = vadd.f32 0.0, %v491
      %v493 = vpop.f32.mrf.mxu0
      %v494 = vadd.f32 0.0, %v493
      %v495 = vpop.f32.mrf.mxu0
      %v496 = vpop.f32.mrf.mxu0
      %497 = vdwg.mxu0
      %498 = vmatprep.subr.bf16.mxu0 %v424
      %499 = vmatpush1.bf16.msra.mxu0 %v423
      %500 = vmatprep.subr.bf16.mxu0 %v420
      %501 = vmatpush1.bf16.msra.mxu0 %v419
      %502 = vmatprep.subr.bf16.mxu0 %v416
      %503 = vmatpush1.bf16.msra.mxu0 %v415
      %504 = vmatprep.subr.bf16.mxu0 %v412
      %505 = vmatpush1.bf16.msra.mxu0 %v411
      %506 = vmatprep.subr.bf16.mxu0 %v408
      %507 = vmatpush1.bf16.msra.mxu0 %v407
      %508 = vmatprep.subr.bf16.mxu0 %v404
      %509 = vmatpush1.bf16.msra.mxu0 %v403
      %510 = vmatprep.subr.bf16.mxu0 %v400
      %511 = vmatpush1.bf16.msra.mxu0 %v399
      %512 = vmatprep.subr.bf16.mxu0 %v396
      %513 = vmatpush1.bf16.msra.mxu0 %v395
      %514 = vmatprep.subr.bf16.mxu0 0
      %515 = vmatpush2.bf16.msra.mxu0 0
      %516 = vmatprep.subr.bf16.mxu0 0
      %517 = vmatpush2.bf16.msra.mxu0 0
      %518 = vmatprep.subr.bf16.mxu0 0
      %519 = vmatpush2.bf16.msra.mxu0 0
      %520 = vmatprep.subr.bf16.mxu0 0
      %521 = vmatpush2.bf16.msra.mxu0 0
      %522 = vmatprep.subr.bf16.mxu0 0
      %523 = vmatpush2.bf16.msra.mxu0 0
      %524 = vmatprep.subr.bf16.mxu0 0
      %525 = vmatpush2.bf16.msra.mxu0 0
      %526 = vmatprep.subr.bf16.mxu0 0
      %527 = vmatpush2.bf16.msra.mxu0 0
      %528 = vmatprep.subr.bf16.mxu0 0
      %529 = vmatpush2.bf16.msra.mxu0 0
      %530 = vmatprep.mubr.bf16.mxu0 0
      %531 = vmatmul.mubr.bf16.gmra.mxu0 %v264
      %v532 = vpop.f32.mrf.mxu0
      %v533 = vadd.f32 0.0, %v532
      %v534 = vpop.f32.mrf.mxu0
      %v535 = vadd.f32 0.0, %v534
      %v536 = vpop.f32.mrf.mxu0
      %v537 = vpop.f32.mrf.mxu0
      %538 = vdwg.mxu0
      %v539 = vadd.f32 %v492, %v494
      %v540 = vadd.f32 %v539, %v533
      %v541 = vadd.f32 %v540, %v535
      %542 = vadd.xlane.f32.xlu0 %v541
      %v543 = vpop.xlane.xlu0 %542
      %v544 = vrcp.pop 512.0
      %v545 = vmul.f32 %v543, %v544
      %v546 = vsub.f32 %v492, %v545
      %v547 = vsub.f32 %v494, %v545
      %v548 = vsub.f32 %v533, %v545
      %v549 = vsub.f32 %v535, %v545
      %v550 = vmul.f32 %v546, %v546
      %v551 = vmul.f32 %v547, %v547
      %v552 = vmul.f32 %v548, %v548
      %v553 = vmul.f32 %v549, %v549
      %v554 = vadd.f32 %v550, %v551
      %v555 = vadd.f32 %v554, %v552
      %v556 = vadd.f32 %v555, %v553
      %557 = vadd.xlane.f32.xlu0 %v556
      %v558 = vpop.xlane.xlu0 %557
      %v559 = vmul.f32 %v558, %v544
      %v560 = vld [vmem:[%s253] sm:$0xff]
      %v561 = vadd.f32 %v559, 1e-05
      %v562 = vrsqrt.pop %v561
      %v563 = vmul.f32 %v560, %v562
      %565 = vset.pattern.permute.xlu0 0
      %566 = vperm.xlu0 %565, %v563
      %v567 = vpop.permute.xlu0 %566
      %v569 = vmul.f32 %v546, %v567
      %v570 = vmul.f32 %v547, %v567
      %v571 = vmul.f32 %v548, %v567
      %v572 = vmul.f32 %v549, %v567
      %v573 = vld [vmem:[%s257] sm:$0xff]
      %575 = vset.pattern.permute.xlu0 0
      %576 = vperm.xlu0 %575, %v573
      %v577 = vpop.permute.xlu0 %576
      %v579 = vadd.f32 %v569, %v577
      %v580 = vadd.f32 %v570, %v577
      %v581 = vadd.f32 %v571, %v577
      %v582 = vadd.f32 %v572, %v577
      %vm583 = vcmp.ge.f32.partialorder %v579, 0.0
      %vm584 = vcmp.ge.f32.partialorder %v580, 0.0
      %vm585 = vcmp.ge.f32.partialorder %v581, 0.0
      %vm586 = vcmp.ge.f32.partialorder %v582, 0.0
      %v587 = vmul.f32 %v579, 0.2
      %v588 = vmul.f32 %v580, 0.2
      %v589 = vmul.f32 %v581, 0.2
      %v590 = vmul.f32 %v582, 0.2
      %v591 = vsel %vm583, %v579, %v587
      %v592 = vsel %vm584, %v580, %v588
      %v593 = vsel %vm585, %v581, %v589
      %v594 = vsel %vm586, %v582, %v590
      %v595 = vpack.c.bf16 %v591, %v591
      %v596 = vpack.c.bf16 %v592, %v592
      %v597 = vpack.c.bf16 %v593, %v593
      %v598 = vpack.c.bf16 %v594, %v594
      %v603 = vunpack.c.l.b16 %v595
      %v604 = vunpack.c.l.b16 %v596
      %v605 = vunpack.c.l.b16 %v597
      %v606 = vunpack.c.l.b16 %v598
      %v607 = vpack.c.b16 %v604, %v603
      %v608 = vpack.c.b16 %v606, %v605
      %611 = vst [vmem:[%s262] sm:$0xff] %v607
      %612 = vst [vmem:[%s262 + $0x8] sm:$0xff] %v608
      %p613 = scmp.lt.s32.totalorder %s19, 1
      %s614 = scalar_select %p613, %s19, 1
      %s615 = smul.addr %s614, 4
      %s616 = smul.addr %s615, 4
      %s617 = scalar_lea.vmem %s4, %s616
      // Predicated region
      $region37: #{discriminator_forward.6} parent=35 // pred_check
        %p618 = pneg %p149
      $region38: #{discriminator_forward.6} parent=35 // pred_check_branch
        %620 = sbr.rel (%p618) target = $region40
      $region39: #{discriminator_forward.6} parent=35 // pred_region
        _
      $region40: #{discriminator_forward.6} parent=35 // pred_fallthru
        _
    $region36: #{discriminator_forward.6} parent=5 // pred_fallthru
      _
    %p621 = scmp.le.s32.totalorder 2, %s10
    // Predicated region
    $region41: #{discriminator_forward.6} parent=5 // pred_check
      %p622 = pneg %p621
    $region42: #{discriminator_forward.6} parent=5 // pred_check_branch
      %624 = sbr.rel (%p622) target = $region44
    $region43: #{discriminator_forward.6} parent=5 // pred_region
      %s625 = ssub.s32 %s10, 2
      // Predicated region
      $region45: #{discriminator_forward.6} parent=43 // pred_check
        %p626 = pneg %p155
      $region46: #{discriminator_forward.6} parent=43 // pred_check_branch
        %628 = sbr.rel (%p626) target = $region48
      $region47: #{discriminator_forward.6} parent=43 // pred_region
        %p629 = scmp.lt.s32.totalorder %s21, 1
        %s630 = scalar_select %p629, %s21, 1
        %s631 = smul.addr %s630, 4
        %s632 = smul.addr %s631, 4
        %s633 = scalar_lea.vmem %s4, %s632
      $region48: #{discriminator_forward.6} parent=43 // pred_fallthru
        _
    $region44: #{discriminator_forward.6} parent=5 // pred_fallthru
      _
  $region6: #{discriminator_forward.6} parent=0 // loop_footer
    %s14 = sadd.s32 1, %s10
  $region7: #{discriminator_forward.6} parent=0 // loop_footer_branch
    %9 = sbr.rel target = $region3
  $region8: #{discriminator_forward.6} parent=0 // loop_exit
    _

// kernel: discriminator_forward.7
$region0: #{discriminator_forward.7}
  #allocation0 [shape = 'u32[]', space=smem, size = 0x4, offset = 0x4, fixed_abs, tag = 'smem constant byte address 0x4 - core index']
  #allocation1 [shape = 'u32[144,128]{1,0:T(1,128)}', space=vmem, size = 0x12000, scoped, tag = 'internal scratch']
  #allocation2 [shape = 'f32[16,1]{1,0:T(8,128)}', space=vmem, size = 0x2000, scoped, tag = 'scratch operand']
  #allocation3 [shape = 'f32[16,1]{1,0:T(8,128)}', space=vmem, size = 0x2000, scoped, tag = 'scratch operand']
  %s0 = inlined_call_operand.vmem [shape: bf16[32,256], index: 0, kind: input, shape index: {}]
  %s1 = inlined_call_operand.vmem [shape: bf16[256,128], index: 1, kind: input, shape index: {}]
  %s2 = inlined_call_operand.vmem [shape: f32[32,1], index: 2, kind: input, shape index: {}]
  %s3 = inlined_call_operand.vmem [shape: f32[32,1], index: 3, kind: input, shape index: {}]
  %s4 = inlined_call_operand.vmem [shape: bf16[32,128], index: 4, kind: output, shape index: {}]
  %s5 = sld [smem:[#allocation0]]
  $region49: #{discriminator_forward.7} parent=0
    _
  %s7 = ssub.s32 1, %s5
  %s8 = scalar_select 0, %s7, %s5
  loop: start=0, step=1, limit=4
  $region2: #{discriminator_forward.7} parent=0 // loop_pre_header
    _
  $region3: #{discriminator_forward.7} parent=0 // loop_header
    %s10 = sphi 0, %s14
    %p11 = scmp.ge.s32.totalorder %s10, 4
    %s17 = sphi 0, %s29
    %s18 = sphi 0, %s25
    %s19 = sphi 0, %s17
    %s20 = sphi 0, %s18
    %s21 = sphi 0, %s19
    %s22 = sphi 0, %s20
    %s32 = sphi 0, %s34
    %s35 = sphi 0, %s32
    %s36 = sphi 0, %s35
    %s52 = sphi 0, %s36
    %s58 = sphi 0, %s60
    %s61 = sphi 0, %s58
    %s62 = sphi 0, %s61
    %s78 = sphi 0, %s62
    %s84 = sphi 0, %s86
    %s87 = sphi 0, %s84
    %s88 = sphi 0, %s87
    %s104 = sphi 0, %s88
    %s110 = sphi 0, %s112
    %s113 = sphi 0, %s110
    %s114 = sphi 0, %s113
    %s130 = sphi 0, %s114
    %s136 = sphi 0, %s138
    %s139 = sphi 0, %s136
    %s140 = sphi 0, %s139
    %s156 = sphi 0, %s140
  $region4: #{discriminator_forward.7} parent=0 // loop_header_branch
    %13 = sbr.rel (%p11) target = $region8
  $region5: #{discriminator_forward.7} parent=0 // loop_body
    %s15 = ssub.s32 %s10, 1
    %s16 = ssub.s32 %s10, 2
    %s23 = sadd.s32 1, %s18
    %p24 = scmp.ge.s32.totalorder %s23, 1
    %s25 = scalar_select %p24, 0, %s23
    %s26 = sadd.s32 1, %s17
    %s27 = scalar_select %p24, %s26, %s17
    %p28 = scmp.ge.s32.totalorder %s27, 2
    %s29 = scalar_select %p28, 0, %s27
    %s30 = ssub.s32 %s17, %s29
    %p31 = scmp.eq.s32.totalorder %s30, 0
    %s33 = sadd.s32 %s32, 1
    %s34 = scalar_select %p31, %s32, %s33
    %p37 = pneg %p31
    %p38 = scmp.eq.s32.totalorder %s10, 1
    %p39 = por %p37, %p38
    %p40 = scmp.ne.s32.totalorder %s32, %s35
    %p41 = scmp.eq.s32.totalorder %s10, 0
    %p42 = por %p40, %p41
    %p43 = scmp.ne.s32.totalorder %s32, %s35
    %p44 = scmp.eq.s32.totalorder %s15, 1
    %p45 = por %p43, %p44
    %p46 = scmp.ne.s32.totalorder %s35, %s36
    %p47 = scmp.eq.s32.totalorder %s15, 0
    %p48 = por %p46, %p47
    %p49 = scmp.ne.s32.totalorder %s35, %s36
    %p50 = scmp.eq.s32.totalorder %s16, 1
    %p51 = por %p49, %p50
    %p53 = scmp.ne.s32.totalorder %s36, %s52
    %p54 = scmp.eq.s32.totalorder %s16, 0
    %p55 = por %p53, %p54
    %s56 = ssub.s32 %s18, %s25
    %p57 = scmp.eq.s32.totalorder %s56, 0
    %s59 = sadd.s32 %s58, 1
    %s60 = scalar_select %p57, %s58, %s59
    %p63 = pneg %p57
    %p64 = scmp.eq.s32.totalorder %s10, 1
    %p65 = por %p63, %p64
    %p66 = scmp.ne.s32.totalorder %s58, %s61
    %p67 = scmp.eq.s32.totalorder %s10, 0
    %p68 = por %p66, %p67
    %p69 = scmp.ne.s32.totalorder %s58, %s61
    %p70 = scmp.eq.s32.totalorder %s15, 1
    %p71 = por %p69, %p70
    %p72 = scmp.ne.s32.totalorder %s61, %s62
    %p73 = scmp.eq.s32.totalorder %s15, 0
    %p74 = por %p72, %p73
    %p75 = scmp.ne.s32.totalorder %s61, %s62
    %p76 = scmp.eq.s32.totalorder %s16, 1
    %p77 = por %p75, %p76
    %p79 = scmp.ne.s32.totalorder %s62, %s78
    %p80 = scmp.eq.s32.totalorder %s16, 0
    %p81 = por %p79, %p80
    %s82 = ssub.s32 %s17, %s29
    %p83 = scmp.eq.s32.totalorder %s82, 0
    %s85 = sadd.s32 %s84, 1
    %s86 = scalar_select %p83, %s84, %s85
    %p89 = pneg %p83
    %p90 = scmp.eq.s32.totalorder %s10, 1
    %p91 = por %p89, %p90
    %p92 = scmp.ne.s32.totalorder %s84, %s87
    %p93 = scmp.eq.s32.totalorder %s10, 0
    %p94 = por %p92, %p93
    %p95 = scmp.ne.s32.totalorder %s84, %s87
    %p96 = scmp.eq.s32.totalorder %s15, 1
    %p97 = por %p95, %p96
    %p98 = scmp.ne.s32.totalorder %s87, %s88
    %p99 = scmp.eq.s32.totalorder %s15, 0
    %p100 = por %p98, %p99
    %p101 = scmp.ne.s32.totalorder %s87, %s88
    %p102 = scmp.eq.s32.totalorder %s16, 1
    %p103 = por %p101, %p102
    %p105 = scmp.ne.s32.totalorder %s88, %s104
    %p106 = scmp.eq.s32.totalorder %s16, 0
    %p107 = por %p105, %p106
    %s108 = ssub.s32 %s17, %s29
    %p109 = scmp.eq.s32.totalorder %s108, 0
    %s111 = sadd.s32 %s110, 1
    %s112 = scalar_select %p109, %s110, %s111
    %p115 = pneg %p109
    %p116 = scmp.eq.s32.totalorder %s10, 1
    %p117 = por %p115, %p116
    %p118 = scmp.ne.s32.totalorder %s110, %s113
    %p119 = scmp.eq.s32.totalorder %s10, 0
    %p120 = por %p118, %p119
    %p121 = scmp.ne.s32.totalorder %s110, %s113
    %p122 = scmp.eq.s32.totalorder %s15, 1
    %p123 = por %p121, %p122
    %p124 = scmp.ne.s32.totalorder %s113, %s114
    %p125 = scmp.eq.s32.totalorder %s15, 0
    %p126 = por %p124, %p125
    %p127 = scmp.ne.s32.totalorder %s113, %s114
    %p128 = scmp.eq.s32.totalorder %s16, 1
    %p129 = por %p127, %p128
    %p131 = scmp.ne.s32.totalorder %s114, %s130
    %p132 = scmp.eq.s32.totalorder %s16, 0
    %p133 = por %p131, %p132
    %s134 = ssub.s32 %s17, %s29
    %p135 = scmp.eq.s32.totalorder %s134, 0
    %s137 = sadd.s32 %s136, 1
    %s138 = scalar_select %p135, %s136, %s137
    %p141 = pneg %p135
    %p142 = scmp.eq.s32.totalorder %s10, 1
    %p143 = por %p141, %p142
    %p144 = scmp.ne.s32.totalorder %s136, %s139
    %p145 = scmp.eq.s32.totalorder %s10, 0
    %p146 = por %p144, %p145
    %p147 = scmp.ne.s32.totalorder %s136, %s139
    %p148 = scmp.eq.s32.totalorder %s15, 1
    %p149 = por %p147, %p148
    %p150 = scmp.ne.s32.totalorder %s139, %s140
    %p151 = scmp.eq.s32.totalorder %s15, 0
    %p152 = por %p150, %p151
    %p153 = scmp.ne.s32.totalorder %s139, %s140
    %p154 = scmp.eq.s32.totalorder %s16, 1
    %p155 = por %p153, %p154
    %p157 = scmp.ne.s32.totalorder %s140, %s156
    %p158 = scmp.eq.s32.totalorder %s16, 0
    %p159 = por %p157, %p158
    %p160 = scmp.le.s32.totalorder 1, %s10
    %p161 = scmp.lt.s32.totalorder %s10, 3
    %p162 = pnand %p160, %p161
    %p163 = pneg %p162
    // Predicated region
    $region9: #{discriminator_forward.7} parent=5 // pred_check
      _
    $region10: #{discriminator_forward.7} parent=5 // pred_check_branch
      %165 = sbr.rel (%p162) target = $region12
    $region11: #{discriminator_forward.7} parent=5 // pred_region
      %s166 = ssub.s32 %s10, 1
      // Predicated region
      $region13: #{discriminator_forward.7} parent=11 // pred_check
        %p167 = pneg %p74
      $region14: #{discriminator_forward.7} parent=11 // pred_check_branch
        %169 = sbr.rel (%p167) target = $region16
      $region15: #{discriminator_forward.7} parent=11 // pred_region
        %p170 = scmp.lt.s32.totalorder %s20, 0
        %s171 = scalar_select %p170, %s20, 0
        %s172 = smul.addr %s171, 4
        %s173 = scalar_lea.vmem %s1, %s172
      $region16: #{discriminator_forward.7} parent=11 // pred_fallthru
        _
    $region12: #{discriminator_forward.7} parent=5 // pred_fallthru
      _
    %p174 = scmp.lt.s32.totalorder %s10, 2
    // Predicated region
    $region17: #{discriminator_forward.7} parent=5 // pred_check
      %p175 = pneg %p174
    $region18: #{discriminator_forward.7} parent=5 // pred_check_branch
      %177 = sbr.rel (%p175) target = $region20
    $region19: #{discriminator_forward.7} parent=5 // pred_region
      // Predicated region
      $region21: #{discriminator_forward.7} parent=19 // pred_check
        %p178 = pneg %p42
      $region22: #{discriminator_forward.7} parent=19 // pred_check_branch
        %180 = sbr.rel (%p178) target = $region24
      $region23: #{discriminator_forward.7} parent=19 // pred_region
        %s181 = smul.u32 2, %s17
        %p182 = scmp.lt.s32.totalorder %s181, 3
        %s183 = scalar_select %p182, %s181, 3
        %s184 = smul.addr %s183, 2
        %s185 = smul.addr %s184, 4
        %s186 = scalar_lea.vmem %s0, %s185
        %s187 = smul.u32 2, %s17
      $region24: #{discriminator_forward.7} parent=19 // pred_fallthru
        _
      // Predicated region
      $region25: #{discriminator_forward.7} parent=19 // pred_check
        %p188 = pneg %p94
      $region26: #{discriminator_forward.7} parent=19 // pred_check_branch
        %190 = sbr.rel (%p188) target = $region28
      $region27: #{discriminator_forward.7} parent=19 // pred_region
        %s191 = smul.u32 2, %s17
        %p192 = scmp.lt.s32.totalorder %s191, 3
        %s193 = scalar_select %p192, %s191, 3
        %s194 = smul.addr %s193, 8
        %s195 = scalar_lea.vmem %s2, %s194
        %s196 = smul.u32 2, %s17
      $region28: #{discriminator_forward.7} parent=19 // pred_fallthru
        _
      // Predicated region
      $region29: #{discriminator_forward.7} parent=19 // pred_check
        %p197 = pneg %p120
      $region30: #{discriminator_forward.7} parent=19 // pred_check_branch
        %199 = sbr.rel (%p197) target = $region32
      $region31: #{discriminator_forward.7} parent=19 // pred_region
        %s200 = smul.u32 2, %s17
        %p201 = scmp.lt.s32.totalorder %s200, 3
        %s202 = scalar_select %p201, %s200, 3
        %s203 = smul.addr %s202, 8
        %s204 = scalar_lea.vmem %s3, %s203
        %s205 = smul.u32 2, %s17
      $region32: #{discriminator_forward.7} parent=19 // pred_fallthru
        _
    $region20: #{discriminator_forward.7} parent=5 // pred_fallthru
      _
    %p206 = scmp.le.s32.totalorder 1, %s10
    %p207 = scmp.lt.s32.totalorder %s10, 3
    %p208 = pnand %p206, %p207
    %p209 = pneg %p208
    // Predicated region
    $region33: #{discriminator_forward.7} parent=5 // pred_check
      _
    $region34: #{discriminator_forward.7} parent=5 // pred_check_branch
      %211 = sbr.rel (%p208) target = $region36
    $region35: #{discriminator_forward.7} parent=5 // pred_region
      %s212 = ssub.s32 %s10, 1
      %s213 = smul.u32 2, %s19
      %p214 = scmp.lt.s32.totalorder %s213, 3
      %s215 = scalar_select %p214, %s213, 3
      %s216 = smul.addr %s215, 2
      %s217 = smul.addr %s216, 4
      %s218 = scalar_lea.vmem %s0, %s217
      %p219 = pneg %p48
      %p220 = pneg %p45
      %p221 = scmp.lt.s32.totalorder %s20, 0
      %s222 = scalar_select %p221, %s20, 0
      %s223 = smul.addr %s222, 4
      %s224 = scalar_lea.vmem %s1, %s223
      %p225 = pneg %p74
      %p226 = pneg %p71
      %s227 = smul.u32 2, %s19
      %p228 = scmp.lt.s32.totalorder %s227, 3
      %s229 = scalar_select %p228, %s227, 3
      %s230 = smul.addr %s229, 8
      %s231 = scalar_lea.vmem %s2, %s230
      %p232 = pneg %p100
      %p233 = pneg %p97
      %s234 = smul.u32 2, %s19
      %p235 = scmp.lt.s32.totalorder %s234, 3
      %s236 = scalar_select %p235, %s234, 3
      %s237 = smul.addr %s236, 8
      %s238 = scalar_lea.vmem %s3, %s237
      %p239 = pneg %p126
      %p240 = pneg %p123
      %p241 = pneg %p152
      %p242 = pneg %p149
      %s243 = smul.u32 2, %s19
      %p244 = scmp.lt.s32.totalorder %s243, 3
      %s245 = scalar_select %p244, %s243, 3
      %s246 = smul.addr %s245, 4
      %s247 = scalar_lea.vmem %s4, %s246
      %s248 = smul.u32 2, %s19
      %p249 = scmp.lt.s32.totalorder %s248, 3
      %s250 = scalar_select %p249, %s248, 3
      %s251 = smul.addr %s250, 2
      %s252 = smul.addr %s251, 4
      %s253 = scalar_lea.vmem %s0, %s252
      %s254 = smul.u32 2, %s19
      %p255 = scmp.lt.s32.totalorder %s20, 0
      %s256 = scalar_select %p255, %s20, 0
      %s257 = smul.addr %s256, 4
      %s258 = scalar_lea.vmem %s1, %s257
      %s259 = smul.u32 2, %s19
      %p260 = scmp.lt.s32.totalorder %s259, 3
      %s261 = scalar_select %p260, %s259, 3
      %s262 = smul.addr %s261, 8
      %s263 = scalar_lea.vmem %s2, %s262
      %s264 = smul.u32 2, %s19
      %s265 = smul.u32 2, %s19
      %p266 = scmp.lt.s32.totalorder %s265, 3
      %s267 = scalar_select %p266, %s265, 3
      %s268 = smul.addr %s267, 8
      %s269 = scalar_lea.vmem %s3, %s268
      %s270 = smul.u32 2, %s19
      %s271 = smul.u32 2, %s19
      %p272 = scmp.lt.s32.totalorder %s271, 3
      %s273 = scalar_select %p272, %s271, 3
      %s274 = smul.addr %s273, 4
      %s275 = scalar_lea.vmem %s4, %s274
      %s276 = smul.u32 2, %s19
      %v278 = vld [vmem:[%s253] sm:$0xff]
      %v279 = vld [vmem:[%s253 + $0x8] sm:$0xff]
      %v280 = vld [vmem:[%s258] sm:$0xf]
      %v281 = vld [vmem:[%s258 + $0x4] sm:$0xf]
      %v282 = vld [vmem:[%s258 + $0x8] sm:$0xf]
      %v283 = vld [vmem:[%s258 + $0xc] sm:$0xf]
      %v284 = vld [vmem:[%s258 + $0x10] sm:$0xf]
      %v285 = vld [vmem:[%s258 + $0x14] sm:$0xf]
      %v286 = vld [vmem:[%s258 + $0x18] sm:$0xf]
      %v287 = vld [vmem:[%s258 + $0x1c] sm:$0xf]
      %v288 = vld [vmem:[%s258 + $0x20] sm:$0xf]
      %v289 = vld [vmem:[%s258 + $0x24] sm:$0xf]
      %v290 = vld [vmem:[%s258 + $0x28] sm:$0xf]
      %v291 = vld [vmem:[%s258 + $0x2c] sm:$0xf]
      %v292 = vld [vmem:[%s258 + $0x30] sm:$0xf]
      %v293 = vld [vmem:[%s258 + $0x34] sm:$0xf]
      %v294 = vld [vmem:[%s258 + $0x38] sm:$0xf]
      %v295 = vld [vmem:[%s258 + $0x3c] sm:$0xf]
      %v296 = vld [vmem:[%s258 + $0x40] sm:$0xf]
      %v297 = vld [vmem:[%s258 + $0x44] sm:$0xf]
      %v298 = vld [vmem:[%s258 + $0x48] sm:$0xf]
      %v299 = vld [vmem:[%s258 + $0x4c] sm:$0xf]
      %v300 = vld [vmem:[%s258 + $0x50] sm:$0xf]
      %v301 = vld [vmem:[%s258 + $0x54] sm:$0xf]
      %v302 = vld [vmem:[%s258 + $0x58] sm:$0xf]
      %v303 = vld [vmem:[%s258 + $0x5c] sm:$0xf]
      %v304 = vld [vmem:[%s258 + $0x60] sm:$0xf]
      %v305 = vld [vmem:[%s258 + $0x64] sm:$0xf]
      %v306 = vld [vmem:[%s258 + $0x68] sm:$0xf]
      %v307 = vld [vmem:[%s258 + $0x6c] sm:$0xf]
      %v308 = vld [vmem:[%s258 + $0x70] sm:$0xf]
      %v309 = vld [vmem:[%s258 + $0x74] sm:$0xf]
      %v310 = vld [vmem:[%s258 + $0x78] sm:$0xf]
      %v311 = vld [vmem:[%s258 + $0x7c] sm:$0xf]
      %v314 = vunpack.c.l.b16 %v278
      %v315 = vunpack.c.h.b16 %v278
      %v316 = vunpack.c.l.b16 %v279
      %v317 = vunpack.c.h.b16 %v279
      %v318 = vpack.c.b16 %v316, %v314
      %v319 = vpack.c.b16 %v317, %v315
      %v354 = vunpack.c.l.b16 %v280
      %v355 = vunpack.c.l.b16 %v281
      %v356 = vunpack.c.l.b16 %v282
      %v357 = vunpack.c.l.b16 %v283
      %v358 = vunpack.c.l.b16 %v284
      %v359 = vunpack.c.l.b16 %v285
      %v360 = vunpack.c.l.b16 %v286
      %v361 = vunpack.c.l.b16 %v287
      %v362 = vunpack.c.l.b16 %v288
      %v363 = vunpack.c.l.b16 %v289
      %v364 = vunpack.c.l.b16 %v290
      %v365 = vunpack.c.l.b16 %v291
      %v366 = vunpack.c.l.b16 %v292
      %v367 = vunpack.c.l.b16 %v293
      %v368 = vunpack.c.l.b16 %v294
      %v369 = vunpack.c.l.b16 %v295
      %v370 = vunpack.c.l.b16 %v296
      %v371 = vunpack.c.l.b16 %v297
      %v372 = vunpack.c.l.b16 %v298
      %v373 = vunpack.c.l.b16 %v299
      %v374 = vunpack.c.l.b16 %v300
      %v375 = vunpack.c.l.b16 %v301
      %v376 = vunpack.c.l.b16 %v302
      %v377 = vunpack.c.l.b16 %v303
      %v378 = vunpack.c.l.b16 %v304
      %v379 = vunpack.c.l.b16 %v305
      %v380 = vunpack.c.l.b16 %v306
      %v381 = vunpack.c.l.b16 %v307
      %v382 = vunpack.c.l.b16 %v308
      %v383 = vunpack.c.l.b16 %v309
      %v384 = vunpack.c.l.b16 %v310
      %v385 = vunpack.c.l.b16 %v311
      %v386 = vpack.c.b16 %v355, %v354
      %v387 = vpack.c.b16 %v357, %v356
      %v388 = vpack.c.b16 %v359, %v358
      %v389 = vpack.c.b16 %v361, %v360
      %v390 = vpack.c.b16 %v363, %v362
      %v391 = vpack.c.b16 %v365, %v364
      %v392 = vpack.c.b16 %v367, %v366
      %v393 = vpack.c.b16 %v369, %v368
      %v394 = vpack.c.b16 %v371, %v370
      %v395 = vpack.c.b16 %v373, %v372
      %v396 = vpack.c.b16 %v375, %v374
      %v397 = vpack.c.b16 %v377, %v376
      %v398 = vpack.c.b16 %v379, %v378
      %v399 = vpack.c.b16 %v381, %v380
      %v400 = vpack.c.b16 %v383, %v382
      %v401 = vpack.c.b16 %v385, %v384
      %418 = vmatprep.subr.bf16.mxu0 0
      %419 = vmatpush1.bf16.msra.mxu0 %v393
      %420 = vmatprep.subr.bf16.mxu0 0
      %421 = vmatpush1.bf16.msra.mxu0 %v392
      %422 = vmatprep.subr.bf16.mxu0 0
      %423 = vmatpush1.bf16.msra.mxu0 %v391
      %424 = vmatprep.subr.bf16.mxu0 0
      %425 = vmatpush1.bf16.msra.mxu0 %v390
      %426 = vmatprep.subr.bf16.mxu0 0
      %427 = vmatpush1.bf16.msra.mxu0 %v389
      %428 = vmatprep.subr.bf16.mxu0 0
      %429 = vmatpush1.bf16.msra.mxu0 %v388
      %430 = vmatprep.subr.bf16.mxu0 0
      %431 = vmatpush1.bf16.msra.mxu0 %v387
      %432 = vmatprep.subr.bf16.mxu0 0
      %433 = vmatpush1.bf16.msra.mxu0 %v386
      %434 = vmatprep.subr.bf16.mxu0 0
      %435 = vmatpush2.bf16.msra.mxu0 %v401
      %436 = vmatprep.subr.bf16.mxu0 0
      %437 = vmatpush2.bf16.msra.mxu0 %v400
      %438 = vmatprep.subr.bf16.mxu0 0
      %439 = vmatpush2.bf16.msra.mxu0 %v399
      %440 = vmatprep.subr.bf16.mxu0 0
      %441 = vmatpush2.bf16.msra.mxu0 %v398
      %442 = vmatprep.subr.bf16.mxu0 0
      %443 = vmatpush2.bf16.msra.mxu0 %v397
      %444 = vmatprep.subr.bf16.mxu0 0
      %445 = vmatpush2.bf16.msra.mxu0 %v396
      %446 = vmatprep.subr.bf16.mxu0 0
      %447 = vmatpush2.bf16.msra.mxu0 %v395
      %448 = vmatprep.subr.bf16.mxu0 0
      %449 = vmatpush2.bf16.msra.mxu0 %v394
      %450 = vmatprep.mubr.bf16.mxu0 %v319
      %451 = vmatmul.mubr.bf16.gmra.mxu0 %v318
      %v452 = vpop.f32.mrf.mxu0
      %v453 = vadd.f32 0.0, %v452
      %v454 = vpop.f32.mrf.mxu0
      %v455 = vpop.f32.mrf.mxu0
      %v456 = vadd.f32 0.0, %v455
      %v457 = vpop.f32.mrf.mxu0
      %458 = vdwg.mxu0
      %459 = vadd.xlane.f32.xlu0 %v453
      %v460 = vpop.xlane.xlu0 %459
      %461 = vadd.xlane.f32.xlu0 %v456
      %v462 = vpop.xlane.xlu0 %461
      %v463 = vrcp.pop 128.0
      %v464 = vmul.f32 %v460, %v463
      %v465 = vmul.f32 %v462, %v463
      %v466 = vsub.f32 %v453, %v464
      %v467 = vsub.f32 %v456, %v465
      %v468 = vmul.f32 %v466, %v466
      %v469 = vmul.f32 %v467, %v467
      %470 = vadd.xlane.f32.xlu0 %v468
      %v471 = vpop.xlane.xlu0 %470
      %472 = vadd.xlane.f32.xlu0 %v469
      %v473 = vpop.xlane.xlu0 %472
      %v474 = vmul.f32 %v471, %v463
      %v475 = vmul.f32 %v473, %v463
      %v476 = vld [vmem:[%s263] sm:$0xff]
      %v477 = vld [vmem:[%s263 + $0x8] sm:$0xff]
      %v478 = vadd.f32 %v474, 1e-05
      %v479 = vadd.f32 %v475, 1e-05
      %v480 = vrsqrt.pop %v478
      %v481 = vrsqrt.pop %v479
      %v482 = vmul.f32 %v476, %v480
      %v483 = vmul.f32 %v477, %v481
      %485 = vset.pattern.permute.xlu0 0
      %486 = vperm.xlu0 %485, %v482
      %v487 = vpop.permute.xlu0 %486
      %490 = vset.pattern.permute.xlu0 0
      %491 = vperm.xlu0 %490, %v483
      %v492 = vpop.permute.xlu0 %491
      %v494 = vmul.f32 %v466, %v487
      %v495 = vmul.f32 %v467, %v492
      %v496 = vld [vmem:[%s269] sm:$0xff]
      %v497 = vld [vmem:[%s269 + $0x8] sm:$0xff]
      %499 = vset.pattern.permute.xlu0 0
      %500 = vperm.xlu0 %499, %v496
      %v501 = vpop.permute.xlu0 %500
      %504 = vset.pattern.permute.xlu0 0
      %505 = vperm.xlu0 %504, %v497
      %v506 = vpop.permute.xlu0 %505
      %v508 = vadd.f32 %v494, %v501
      %v509 = vadd.f32 %v495, %v506
      %vm510 = vcmp.ge.f32.partialorder %v508, 0.0
      %vm511 = vcmp.ge.f32.partialorder %v509, 0.0
      %v512 = vmul.f32 %v508, 0.2
      %v513 = vmul.f32 %v509, 0.2
      %v514 = vsel %vm510, %v508, %v512
      %v515 = vsel %vm511, %v509, %v513
      %v516 = vpack.c.bf16 %v515, %v514
      %v518 = vunpack.c.l.b16 %v516
      %v519 = vunpack.c.h.b16 %v516
      %v520 = vpack.c.b16 %v518, %v518
      %v521 = vpack.c.b16 %v519, %v519
      %524 = vst [vmem:[%s275] sm:$0xf] %v520
      %525 = vst [vmem:[%s275 + $0x4] sm:$0xf] %v521
      %s526 = smul.u32 2, %s19
      %p527 = scmp.lt.s32.totalorder %s526, 3
      %s528 = scalar_select %p527, %s526, 3
      %s529 = smul.addr %s528, 4
      %s530 = scalar_lea.vmem %s4, %s529
      // Predicated region
      $region37: #{discriminator_forward.7} parent=35 // pred_check
        %p531 = pneg %p149
      $region38: #{discriminator_forward.7} parent=35 // pred_check_branch
        %533 = sbr.rel (%p531) target = $region40
      $region39: #{discriminator_forward.7} parent=35 // pred_region
        %s534 = smul.u32 2, %s19
      $region40: #{discriminator_forward.7} parent=35 // pred_fallthru
        _
    $region36: #{discriminator_forward.7} parent=5 // pred_fallthru
      _
    %p535 = scmp.le.s32.totalorder 2, %s10
    // Predicated region
    $region41: #{discriminator_forward.7} parent=5 // pred_check
      %p536 = pneg %p535
    $region42: #{discriminator_forward.7} parent=5 // pred_check_branch
      %538 = sbr.rel (%p536) target = $region44
    $region43: #{discriminator_forward.7} parent=5 // pred_region
      %s539 = ssub.s32 %s10, 2
      // Predicated region
      $region45: #{discriminator_forward.7} parent=43 // pred_check
        %p540 = pneg %p155
      $region46: #{discriminator_forward.7} parent=43 // pred_check_branch
        %542 = sbr.rel (%p540) target = $region48
      $region47: #{discriminator_forward.7} parent=43 // pred_region
        %s543 = smul.u32 2, %s21
        %p544 = scmp.lt.s32.totalorder %s543, 3
        %s545 = scalar_select %p544, %s543, 3
        %s546 = smul.addr %s545, 4
        %s547 = scalar_lea.vmem %s4, %s546
      $region48: #{discriminator_forward.7} parent=43 // pred_fallthru
        _
    $region44: #{discriminator_forward.7} parent=5 // pred_fallthru
      _
  $region6: #{discriminator_forward.7} parent=0 // loop_footer
    %s14 = sadd.s32 1, %s10
  $region7: #{discriminator_forward.7} parent=0 // loop_footer_branch
    %9 = sbr.rel target = $region3
  $region8: #{discriminator_forward.7} parent=0 // loop_exit
    _

// kernel: discriminator_forward.8
$region0: #{discriminator_forward.8}
  #allocation0 [shape = 'u32[]', space=smem, size = 0x4, offset = 0x4, fixed_abs, tag = 'smem constant byte address 0x4 - core index']
  #allocation1 [shape = 'u32[144,128]{1,0:T(1,128)}', space=vmem, size = 0x12000, scoped, tag = 'internal scratch']
  #allocation2 [shape = 'f32[32,1]{1,0:T(8,128)}', space=vmem, size = 0x4000, scoped, tag = 'scratch operand']
  #allocation3 [shape = 'f32[32,1]{1,0:T(8,128)}', space=vmem, size = 0x4000, scoped, tag = 'scratch operand']
  %s0 = inlined_call_operand.vmem [shape: bf16[64,512], index: 0, kind: input, shape index: {}]
  %s1 = inlined_call_operand.vmem [shape: bf16[512,32], index: 1, kind: input, shape index: {}]
  %s2 = inlined_call_operand.vmem [shape: f32[64,1], index: 2, kind: input, shape index: {}]
  %s3 = inlined_call_operand.vmem [shape: f32[64,1], index: 3, kind: input, shape index: {}]
  %s4 = inlined_call_operand.vmem [shape: bf16[64,32], index: 4, kind: output, shape index: {}]
  %s5 = sld [smem:[#allocation0]]
  $region49: #{discriminator_forward.8} parent=0
    _
  %s7 = ssub.s32 1, %s5
  %s8 = scalar_select 0, %s7, %s5
  loop: start=0, step=1, limit=4
  $region2: #{discriminator_forward.8} parent=0 // loop_pre_header
    _
  $region3: #{discriminator_forward.8} parent=0 // loop_header
    %s10 = sphi 0, %s14
    %p11 = scmp.ge.s32.totalorder %s10, 4
    %s17 = sphi 0, %s29
    %s18 = sphi 0, %s25
    %s19 = sphi 0, %s17
    %s20 = sphi 0, %s18
    %s21 = sphi 0, %s19
    %s22 = sphi 0, %s20
    %s32 = sphi 0, %s34
    %s35 = sphi 0, %s32
    %s36 = sphi 0, %s35
    %s52 = sphi 0, %s36
    %s58 = sphi 0, %s60
    %s61 = sphi 0, %s58
    %s62 = sphi 0, %s61
    %s78 = sphi 0, %s62
    %s84 = sphi 0, %s86
    %s87 = sphi 0, %s84
    %s88 = sphi 0, %s87
    %s104 = sphi 0, %s88
    %s110 = sphi 0, %s112
    %s113 = sphi 0, %s110
    %s114 = sphi 0, %s113
    %s130 = sphi 0, %s114
    %s136 = sphi 0, %s138
    %s139 = sphi 0, %s136
    %s140 = sphi 0, %s139
    %s156 = sphi 0, %s140
  $region4: #{discriminator_forward.8} parent=0 // loop_header_branch
    %13 = sbr.rel (%p11) target = $region8
  $region5: #{discriminator_forward.8} parent=0 // loop_body
    %s15 = ssub.s32 %s10, 1
    %s16 = ssub.s32 %s10, 2
    %s23 = sadd.s32 1, %s18
    %p24 = scmp.ge.s32.totalorder %s23, 1
    %s25 = scalar_select %p24, 0, %s23
    %s26 = sadd.s32 1, %s17
    %s27 = scalar_select %p24, %s26, %s17
    %p28 = scmp.ge.s32.totalorder %s27, 2
    %s29 = scalar_select %p28, 0, %s27
    %s30 = ssub.s32 %s17, %s29
    %p31 = scmp.eq.s32.totalorder %s30, 0
    %s33 = sadd.s32 %s32, 1
    %s34 = scalar_select %p31, %s32, %s33
    %p37 = pneg %p31
    %p38 = scmp.eq.s32.totalorder %s10, 1
    %p39 = por %p37, %p38
    %p40 = scmp.ne.s32.totalorder %s32, %s35
    %p41 = scmp.eq.s32.totalorder %s10, 0
    %p42 = por %p40, %p41
    %p43 = scmp.ne.s32.totalorder %s32, %s35
    %p44 = scmp.eq.s32.totalorder %s15, 1
    %p45 = por %p43, %p44
    %p46 = scmp.ne.s32.totalorder %s35, %s36
    %p47 = scmp.eq.s32.totalorder %s15, 0
    %p48 = por %p46, %p47
    %p49 = scmp.ne.s32.totalorder %s35, %s36
    %p50 = scmp.eq.s32.totalorder %s16, 1
    %p51 = por %p49, %p50
    %p53 = scmp.ne.s32.totalorder %s36, %s52
    %p54 = scmp.eq.s32.totalorder %s16, 0
    %p55 = por %p53, %p54
    %s56 = ssub.s32 %s18, %s25
    %p57 = scmp.eq.s32.totalorder %s56, 0
    %s59 = sadd.s32 %s58, 1
    %s60 = scalar_select %p57, %s58, %s59
    %p63 = pneg %p57
    %p64 = scmp.eq.s32.totalorder %s10, 1
    %p65 = por %p63, %p64
    %p66 = scmp.ne.s32.totalorder %s58, %s61
    %p67 = scmp.eq.s32.totalorder %s10, 0
    %p68 = por %p66, %p67
    %p69 = scmp.ne.s32.totalorder %s58, %s61
    %p70 = scmp.eq.s32.totalorder %s15, 1
    %p71 = por %p69, %p70
    %p72 = scmp.ne.s32.totalorder %s61, %s62
    %p73 = scmp.eq.s32.totalorder %s15, 0
    %p74 = por %p72, %p73
    %p75 = scmp.ne.s32.totalorder %s61, %s62
    %p76 = scmp.eq.s32.totalorder %s16, 1
    %p77 = por %p75, %p76
    %p79 = scmp.ne.s32.totalorder %s62, %s78
    %p80 = scmp.eq.s32.totalorder %s16, 0
    %p81 = por %p79, %p80
    %s82 = ssub.s32 %s17, %s29
    %p83 = scmp.eq.s32.totalorder %s82, 0
    %s85 = sadd.s32 %s84, 1
    %s86 = scalar_select %p83, %s84, %s85
    %p89 = pneg %p83
    %p90 = scmp.eq.s32.totalorder %s10, 1
    %p91 = por %p89, %p90
    %p92 = scmp.ne.s32.totalorder %s84, %s87
    %p93 = scmp.eq.s32.totalorder %s10, 0
    %p94 = por %p92, %p93
    %p95 = scmp.ne.s32.totalorder %s84, %s87
    %p96 = scmp.eq.s32.totalorder %s15, 1
    %p97 = por %p95, %p96
    %p98 = scmp.ne.s32.totalorder %s87, %s88
    %p99 = scmp.eq.s32.totalorder %s15, 0
    %p100 = por %p98, %p99
    %p101 = scmp.ne.s32.totalorder %s87, %s88
    %p102 = scmp.eq.s32.totalorder %s16, 1
    %p103 = por %p101, %p102
    %p105 = scmp.ne.s32.totalorder %s88, %s104
    %p106 = scmp.eq.s32.totalorder %s16, 0
    %p107 = por %p105, %p106
    %s108 = ssub.s32 %s17, %s29
    %p109 = scmp.eq.s32.totalorder %s108, 0
    %s111 = sadd.s32 %s110, 1
    %s112 = scalar_select %p109, %s110, %s111
    %p115 = pneg %p109
    %p116 = scmp.eq.s32.totalorder %s10, 1
    %p117 = por %p115, %p116
    %p118 = scmp.ne.s32.totalorder %s110, %s113
    %p119 = scmp.eq.s32.totalorder %s10, 0
    %p120 = por %p118, %p119
    %p121 = scmp.ne.s32.totalorder %s110, %s113
    %p122 = scmp.eq.s32.totalorder %s15, 1
    %p123 = por %p121, %p122
    %p124 = scmp.ne.s32.totalorder %s113, %s114
    %p125 = scmp.eq.s32.totalorder %s15, 0
    %p126 = por %p124, %p125
    %p127 = scmp.ne.s32.totalorder %s113, %s114
    %p128 = scmp.eq.s32.totalorder %s16, 1
    %p129 = por %p127, %p128
    %p131 = scmp.ne.s32.totalorder %s114, %s130
    %p132 = scmp.eq.s32.totalorder %s16, 0
    %p133 = por %p131, %p132
    %s134 = ssub.s32 %s17, %s29
    %p135 = scmp.eq.s32.totalorder %s134, 0
    %s137 = sadd.s32 %s136, 1
    %s138 = scalar_select %p135, %s136, %s137
    %p141 = pneg %p135
    %p142 = scmp.eq.s32.totalorder %s10, 1
    %p143 = por %p141, %p142
    %p144 = scmp.ne.s32.totalorder %s136, %s139
    %p145 = scmp.eq.s32.totalorder %s10, 0
    %p146 = por %p144, %p145
    %p147 = scmp.ne.s32.totalorder %s136, %s139
    %p148 = scmp.eq.s32.totalorder %s15, 1
    %p149 = por %p147, %p148
    %p150 = scmp.ne.s32.totalorder %s139, %s140
    %p151 = scmp.eq.s32.totalorder %s15, 0
    %p152 = por %p150, %p151
    %p153 = scmp.ne.s32.totalorder %s139, %s140
    %p154 = scmp.eq.s32.totalorder %s16, 1
    %p155 = por %p153, %p154
    %p157 = scmp.ne.s32.totalorder %s140, %s156
    %p158 = scmp.eq.s32.totalorder %s16, 0
    %p159 = por %p157, %p158
    %p160 = scmp.le.s32.totalorder 1, %s10
    %p161 = scmp.lt.s32.totalorder %s10, 3
    %p162 = pnand %p160, %p161
    %p163 = pneg %p162
    // Predicated region
    $region9: #{discriminator_forward.8} parent=5 // pred_check
      _
    $region10: #{discriminator_forward.8} parent=5 // pred_check_branch
      %165 = sbr.rel (%p162) target = $region12
    $region11: #{discriminator_forward.8} parent=5 // pred_region
      %s166 = ssub.s32 %s10, 1
      // Predicated region
      $region13: #{discriminator_forward.8} parent=11 // pred_check
        %p167 = pneg %p74
      $region14: #{discriminator_forward.8} parent=11 // pred_check_branch
        %169 = sbr.rel (%p167) target = $region16
      $region15: #{discriminator_forward.8} parent=11 // pred_region
        %p170 = scmp.lt.s32.totalorder %s20, 0
        %s171 = scalar_select %p170, %s20, 0
        %s172 = smul.addr %s171, 4
        %s173 = scalar_lea.vmem %s1, %s172
      $region16: #{discriminator_forward.8} parent=11 // pred_fallthru
        _
    $region12: #{discriminator_forward.8} parent=5 // pred_fallthru
      _
    %p174 = scmp.lt.s32.totalorder %s10, 2
    // Predicated region
    $region17: #{discriminator_forward.8} parent=5 // pred_check
      %p175 = pneg %p174
    $region18: #{discriminator_forward.8} parent=5 // pred_check_branch
      %177 = sbr.rel (%p175) target = $region20
    $region19: #{discriminator_forward.8} parent=5 // pred_region
      // Predicated region
      $region21: #{discriminator_forward.8} parent=19 // pred_check
        %p178 = pneg %p42
      $region22: #{discriminator_forward.8} parent=19 // pred_check_branch
        %180 = sbr.rel (%p178) target = $region24
      $region23: #{discriminator_forward.8} parent=19 // pred_region
        %s181 = smul.u32 4, %s17
        %p182 = scmp.lt.s32.totalorder %s181, 7
        %s183 = scalar_select %p182, %s181, 7
        %s184 = smul.addr %s183, 4
        %s185 = smul.addr %s184, 4
        %s186 = scalar_lea.vmem %s0, %s185
        %s187 = smul.u32 4, %s17
      $region24: #{discriminator_forward.8} parent=19 // pred_fallthru
        _
      // Predicated region
      $region25: #{discriminator_forward.8} parent=19 // pred_check
        %p188 = pneg %p94
      $region26: #{discriminator_forward.8} parent=19 // pred_check_branch
        %190 = sbr.rel (%p188) target = $region28
      $region27: #{discriminator_forward.8} parent=19 // pred_region
        %s191 = smul.u32 4, %s17
        %p192 = scmp.lt.s32.totalorder %s191, 7
        %s193 = scalar_select %p192, %s191, 7
        %s194 = smul.addr %s193, 8
        %s195 = scalar_lea.vmem %s2, %s194
        %s196 = smul.u32 4, %s17
      $region28: #{discriminator_forward.8} parent=19 // pred_fallthru
        _
      // Predicated region
      $region29: #{discriminator_forward.8} parent=19 // pred_check
        %p197 = pneg %p120
      $region30: #{discriminator_forward.8} parent=19 // pred_check_branch
        %199 = sbr.rel (%p197) target = $region32
      $region31: #{discriminator_forward.8} parent=19 // pred_region
        %s200 = smul.u32 4, %s17
        %p201 = scmp.lt.s32.totalorder %s200, 7
        %s202 = scalar_select %p201, %s200, 7
        %s203 = smul.addr %s202, 8
        %s204 = scalar_lea.vmem %s3, %s203
        %s205 = smul.u32 4, %s17
      $region32: #{discriminator_forward.8} parent=19 // pred_fallthru
        _
    $region20: #{discriminator_forward.8} parent=5 // pred_fallthru
      _
    %p206 = scmp.le.s32.totalorder 1, %s10
    %p207 = scmp.lt.s32.totalorder %s10, 3
    %p208 = pnand %p206, %p207
    %p209 = pneg %p208
    // Predicated region
    $region33: #{discriminator_forward.8} parent=5 // pred_check
      _
    $region34: #{discriminator_forward.8} parent=5 // pred_check_branch
      %211 = sbr.rel (%p208) target = $region36
    $region35: #{discriminator_forward.8} parent=5 // pred_region
      %s212 = ssub.s32 %s10, 1
      %s213 = smul.u32 4, %s19
      %p214 = scmp.lt.s32.totalorder %s213, 7
      %s215 = scalar_select %p214, %s213, 7
      %s216 = smul.addr %s215, 4
      %s217 = smul.addr %s216, 4
      %s218 = scalar_lea.vmem %s0, %s217
      %p219 = pneg %p48
      %p220 = pneg %p45
      %p221 = scmp.lt.s32.totalorder %s20, 0
      %s222 = scalar_select %p221, %s20, 0
      %s223 = smul.addr %s222, 4
      %s224 = scalar_lea.vmem %s1, %s223
      %p225 = pneg %p74
      %p226 = pneg %p71
      %s227 = smul.u32 4, %s19
      %p228 = scmp.lt.s32.totalorder %s227, 7
      %s229 = scalar_select %p228, %s227, 7
      %s230 = smul.addr %s229, 8
      %s231 = scalar_lea.vmem %s2, %s230
      %p232 = pneg %p100
      %p233 = pneg %p97
      %s234 = smul.u32 4, %s19
      %p235 = scmp.lt.s32.totalorder %s234, 7
      %s236 = scalar_select %p235, %s234, 7
      %s237 = smul.addr %s236, 8
      %s238 = scalar_lea.vmem %s3, %s237
      %p239 = pneg %p126
      %p240 = pneg %p123
      %p241 = pneg %p152
      %p242 = pneg %p149
      %s243 = smul.u32 4, %s19
      %p244 = scmp.lt.s32.totalorder %s243, 7
      %s245 = scalar_select %p244, %s243, 7
      %s246 = smul.addr %s245, 4
      %s247 = scalar_lea.vmem %s4, %s246
      %s248 = smul.u32 4, %s19
      %p249 = scmp.lt.s32.totalorder %s248, 7
      %s250 = scalar_select %p249, %s248, 7
      %s251 = smul.addr %s250, 4
      %s252 = smul.addr %s251, 4
      %s253 = scalar_lea.vmem %s0, %s252
      %s254 = smul.u32 4, %s19
      %p255 = scmp.lt.s32.totalorder %s20, 0
      %s256 = scalar_select %p255, %s20, 0
      %s257 = smul.addr %s256, 4
      %s258 = scalar_lea.vmem %s1, %s257
      %s259 = smul.u32 4, %s19
      %p260 = scmp.lt.s32.totalorder %s259, 7
      %s261 = scalar_select %p260, %s259, 7
      %s262 = smul.addr %s261, 8
      %s263 = scalar_lea.vmem %s2, %s262
      %s264 = smul.u32 4, %s19
      %s265 = smul.u32 4, %s19
      %p266 = scmp.lt.s32.totalorder %s265, 7
      %s267 = scalar_select %p266, %s265, 7
      %s268 = smul.addr %s267, 8
      %s269 = scalar_lea.vmem %s3, %s268
      %s270 = smul.u32 4, %s19
      %s271 = smul.u32 4, %s19
      %p272 = scmp.lt.s32.totalorder %s271, 7
      %s273 = scalar_select %p272, %s271, 7
      %s274 = smul.addr %s273, 4
      %s275 = scalar_lea.vmem %s4, %s274
      %s276 = smul.u32 4, %s19
      %v278 = vld [vmem:[%s253] sm:$0xff]
      %v279 = vld [vmem:[%s253 + $0x8] sm:$0xff]
      %v280 = vld [vmem:[%s253 + $0x10] sm:$0xff]
      %v281 = vld [vmem:[%s253 + $0x18] sm:$0xff]
      %v282 = vld [vmem:[%s253 + $0x20] sm:$0xff]
      %v283 = vld [vmem:[%s253 + $0x28] sm:$0xff]
      %v284 = vld [vmem:[%s253 + $0x30] sm:$0xff]
      %v285 = vld [vmem:[%s253 + $0x38] sm:$0xff]
      %v286 = vld [vmem:[%s258] sm:$0xf]
      %v287 = vld [vmem:[%s258 + $0x4] sm:$0xf]
      %v288 = vld [vmem:[%s258 + $0x8] sm:$0xf]
      %v289 = vld [vmem:[%s258 + $0xc] sm:$0xf]
      %v290 = vld [vmem:[%s258 + $0x10] sm:$0xf]
      %v291 = vld [vmem:[%s258 + $0x14] sm:$0xf]
      %v292 = vld [vmem:[%s258 + $0x18] sm:$0xf]
      %v293 = vld [vmem:[%s258 + $0x1c] sm:$0xf]
      %v294 = vld [vmem:[%s258 + $0x20] sm:$0xf]
      %v295 = vld [vmem:[%s258 + $0x24] sm:$0xf]
      %v296 = vld [vmem:[%s258 + $0x28] sm:$0xf]
      %v297 = vld [vmem:[%s258 + $0x2c] sm:$0xf]
      %v298 = vld [vmem:[%s258 + $0x30] sm:$0xf]
      %v299 = vld [vmem:[%s258 + $0x34] sm:$0xf]
      %v300 = vld [vmem:[%s258 + $0x38] sm:$0xf]
      %v301 = vld [vmem:[%s258 + $0x3c] sm:$0xf]
      %v302 = vld [vmem:[%s258 + $0x40] sm:$0xf]
      %v303 = vld [vmem:[%s258 + $0x44] sm:$0xf]
      %v304 = vld [vmem:[%s258 + $0x48] sm:$0xf]
      %v305 = vld [vmem:[%s258 + $0x4c] sm:$0xf]
      %v306 = vld [vmem:[%s258 + $0x50] sm:$0xf]
      %v307 = vld [vmem:[%s258 + $0x54] sm:$0xf]
      %v308 = vld [vmem:[%s258 + $0x58] sm:$0xf]
      %v309 = vld [vmem:[%s258 + $0x5c] sm:$0xf]
      %v310 = vld [vmem:[%s258 + $0x60] sm:$0xf]
      %v311 = vld [vmem:[%s258 + $0x64] sm:$0xf]
      %v312 = vld [vmem:[%s258 + $0x68] sm:$0xf]
      %v313 = vld [vmem:[%s258 + $0x6c] sm:$0xf]
      %v314 = vld [vmem:[%s258 + $0x70] sm:$0xf]
      %v315 = vld [vmem:[%s258 + $0x74] sm:$0xf]
      %v316 = vld [vmem:[%s258 + $0x78] sm:$0xf]
      %v317 = vld [vmem:[%s258 + $0x7c] sm:$0xf]
      %v318 = vld [vmem:[%s258 + $0x80] sm:$0xf]
      %v319 = vld [vmem:[%s258 + $0x84] sm:$0xf]
      %v320 = vld [vmem:[%s258 + $0x88] sm:$0xf]
      %v321 = vld [vmem:[%s258 + $0x8c] sm:$0xf]
      %v322 = vld [vmem:[%s258 + $0x90] sm:$0xf]
      %v323 = vld [vmem:[%s258 + $0x94] sm:$0xf]
      %v324 = vld [vmem:[%s258 + $0x98] sm:$0xf]
      %v325 = vld [vmem:[%s258 + $0x9c] sm:$0xf]
      %v326 = vld [vmem:[%s258 + $0xa0] sm:$0xf]
      %v327 = vld [vmem:[%s258 + $0xa4] sm:$0xf]
      %v328 = vld [vmem:[%s258 + $0xa8] sm:$0xf]
      %v329 = vld [vmem:[%s258 + $0xac] sm:$0xf]
      %v330 = vld [vmem:[%s258 + $0xb0] sm:$0xf]
      %v331 = vld [vmem:[%s258 + $0xb4] sm:$0xf]
      %v332 = vld [vmem:[%s258 + $0xb8] sm:$0xf]
      %v333 = vld [vmem:[%s258 + $0xbc] sm:$0xf]
      %v334 = vld [vmem:[%s258 + $0xc0] sm:$0xf]
      %v335 = vld [vmem:[%s258 + $0xc4] sm:$0xf]
      %v336 = vld [vmem:[%s258 + $0xc8] sm:$0xf]
      %v337 = vld [vmem:[%s258 + $0xcc] sm:$0xf]
      %v338 = vld [vmem:[%s258 + $0xd0] sm:$0xf]
      %v339 = vld [vmem:[%s258 + $0xd4] sm:$0xf]
      %v340 = vld [vmem:[%s258 + $0xd8] sm:$0xf]
      %v341 = vld [vmem:[%s258 + $0xdc] sm:$0xf]
      %v342 = vld [vmem:[%s258 + $0xe0] sm:$0xf]
      %v343 = vld [vmem:[%s258 + $0xe4] sm:$0xf]
      %v344 = vld [vmem:[%s258 + $0xe8] sm:$0xf]
      %v345 = vld [vmem:[%s258 + $0xec] sm:$0xf]
      %v346 = vld [vmem:[%s258 + $0xf0] sm:$0xf]
      %v347 = vld [vmem:[%s258 + $0xf4] sm:$0xf]
      %v348 = vld [vmem:[%s258 + $0xf8] sm:$0xf]
      %v349 = vld [vmem:[%s258 + $0xfc] sm:$0xf]
      %v358 = vunpack.c.l.b16 %v278
      %v359 = vunpack.c.h.b16 %v278
      %v360 = vunpack.c.l.b16 %v279
      %v361 = vunpack.c.h.b16 %v279
      %v362 = vunpack.c.l.b16 %v280
      %v363 = vunpack.c.h.b16 %v280
      %v364 = vunpack.c.l.b16 %v281
      %v365 = vunpack.c.h.b16 %v281
      %v366 = vunpack.c.l.b16 %v282
      %v367 = vunpack.c.h.b16 %v282
      %v368 = vunpack.c.l.b16 %v283
      %v369 = vunpack.c.h.b16 %v283
      %v370 = vunpack.c.l.b16 %v284
      %v371 = vunpack.c.h.b16 %v284
      %v372 = vunpack.c.l.b16 %v285
      %v373 = vunpack.c.h.b16 %v285
      %v374 = vpack.c.b16 %v362, %v358
      %v375 = vpack.c.b16 %v363, %v359
      %v376 = vpack.c.b16 %v364, %v360
      %v377 = vpack.c.b16 %v365, %v361
      %v378 = vpack.c.b16 %v370, %v366
      %v379 = vpack.c.b16 %v371, %v367
      %v380 = vpack.c.b16 %v372, %v368
      %v381 = vpack.c.b16 %v373, %v369
      %v454 = vunpack.c.l.b16 %v286
      %v455 = vunpack.c.l.b16 %v287
      %v456 = vunpack.c.l.b16 %v288
      %v457 = vunpack.c.l.b16 %v289
      %v458 = vunpack.c.l.b16 %v290
      %v459 = vunpack.c.l.b16 %v291
      %v460 = vunpack.c.l.b16 %v292
      %v461 = vunpack.c.l.b16 %v293
      %v462 = vunpack.c.l.b16 %v294
      %v463 = vunpack.c.l.b16 %v295
      %v464 = vunpack.c.l.b16 %v296
      %v465 = vunpack.c.l.b16 %v297
      %v466 = vunpack.c.l.b16 %v298
      %v467 = vunpack.c.l.b16 %v299
      %v468 = vunpack.c.l.b16 %v300
      %v469 = vunpack.c.l.b16 %v301
      %v470 = vunpack.c.l.b16 %v302
      %v471 = vunpack.c.l.b16 %v303
      %v472 = vunpack.c.l.b16 %v304
      %v473 = vunpack.c.l.b16 %v305
      %v474 = vunpack.c.l.b16 %v306
      %v475 = vunpack.c.l.b16 %v307
      %v476 = vunpack.c.l.b16 %v308
      %v477 = vunpack.c.l.b16 %v309
      %v478 = vunpack.c.l.b16 %v310
      %v479 = vunpack.c.l.b16 %v311
      %v480 = vunpack.c.l.b16 %v312
      %v481 = vunpack.c.l.b16 %v313
      %v482 = vunpack.c.l.b16 %v314
      %v483 = vunpack.c.l.b16 %v315
      %v484 = vunpack.c.l.b16 %v316
      %v485 = vunpack.c.l.b16 %v317
      %v486 = vunpack.c.l.b16 %v318
      %v487 = vunpack.c.l.b16 %v319
      %v488 = vunpack.c.l.b16 %v320
      %v489 = vunpack.c.l.b16 %v321
      %v490 = vunpack.c.l.b16 %v322
      %v491 = vunpack.c.l.b16 %v323
      %v492 = vunpack.c.l.b16 %v324
      %v493 = vunpack.c.l.b16 %v325
      %v494 = vunpack.c.l.b16 %v326
      %v495 = vunpack.c.l.b16 %v327
      %v496 = vunpack.c.l.b16 %v328
      %v497 = vunpack.c.l.b16 %v329
      %v498 = vunpack.c.l.b16 %v330
      %v499 = vunpack.c.l.b16 %v331
      %v500 = vunpack.c.l.b16 %v332
      %v501 = vunpack.c.l.b16 %v333
      %v502 = vunpack.c.l.b16 %v334
      %v503 = vunpack.c.l.b16 %v335
      %v504 = vunpack.c.l.b16 %v336
      %v505 = vunpack.c.l.b16 %v337
      %v506 = vunpack.c.l.b16 %v338
      %v507 = vunpack.c.l.b16 %v339
      %v508 = vunpack.c.l.b16 %v340
      %v509 = vunpack.c.l.b16 %v341
      %v510 = vunpack.c.l.b16 %v342
      %v511 = vunpack.c.l.b16 %v343
      %v512 = vunpack.c.l.b16 %v344
      %v513 = vunpack.c.l.b16 %v345
      %v514 = vunpack.c.l.b16 %v346
      %v515 = vunpack.c.l.b16 %v347
      %v516 = vunpack.c.l.b16 %v348
      %v517 = vunpack.c.l.b16 %v349
      %v518 = vpack.c.b16 %v455, %v454
      %v519 = vpack.c.b16 %v457, %v456
      %v520 = vpack.c.b16 %v459, %v458
      %v521 = vpack.c.b16 %v461, %v460
      %v522 = vpack.c.b16 %v463, %v462
      %v523 = vpack.c.b16 %v465, %v464
      %v524 = vpack.c.b16 %v467, %v466
      %v525 = vpack.c.b16 %v469, %v468
      %v526 = vpack.c.b16 %v471, %v470
      %v527 = vpack.c.b16 %v473, %v472
      %v528 = vpack.c.b16 %v475, %v474
      %v529 = vpack.c.b16 %v477, %v476
      %v530 = vpack.c.b16 %v479, %v478
      %v531 = vpack.c.b16 %v481, %v480
      %v532 = vpack.c.b16 %v483, %v482
      %v533 = vpack.c.b16 %v485, %v484
      %v534 = vpack.c.b16 %v487, %v486
      %v535 = vpack.c.b16 %v489, %v488
      %v536 = vpack.c.b16 %v491, %v490
      %v537 = vpack.c.b16 %v493, %v492
      %v538 = vpack.c.b16 %v495, %v494
      %v539 = vpack.c.b16 %v497, %v496
      %v540 = vpack.c.b16 %v499, %v498
      %v541 = vpack.c.b16 %v501, %v500
      %v542 = vpack.c.b16 %v503, %v502
      %v543 = vpack.c.b16 %v505, %v504
      %v544 = vpack.c.b16 %v507, %v506
      %v545 = vpack.c.b16 %v509, %v508
      %v546 = vpack.c.b16 %v511, %v510
      %v547 = vpack.c.b16 %v513, %v512
      %v548 = vpack.c.b16 %v515, %v514
      %v549 = vpack.c.b16 %v517, %v516
      %582 = vmatprep.subr.bf16.mxu0 0
      %583 = vmatpush1.bf16.msra.mxu0 %v525
      %584 = vmatprep.subr.bf16.mxu0 0
      %585 = vmatpush1.bf16.msra.mxu0 %v524
      %586 = vmatprep.subr.bf16.mxu0 0
      %587 = vmatpush1.bf16.msra.mxu0 %v523
      %588 = vmatprep.subr.bf16.mxu0 0
      %589 = vmatpush1.bf16.msra.mxu0 %v522
      %590 = vmatprep.subr.bf16.mxu0 0
      %591 = vmatpush1.bf16.msra.mxu0 %v521
      %592 = vmatprep.subr.bf16.mxu0 0
      %593 = vmatpush1.bf16.msra.mxu0 %v520
      %594 = vmatprep.subr.bf16.mxu0 0
      %595 = vmatpush1.bf16.msra.mxu0 %v519
      %596 = vmatprep.subr.bf16.mxu0 0
      %597 = vmatpush1.bf16.msra.mxu0 %v518
      %598 = vmatprep.subr.bf16.mxu0 0
      %599 = vmatpush2.bf16.msra.mxu0 %v533
      %600 = vmatprep.subr.bf16.mxu0 0
      %601 = vmatpush2.bf16.msra.mxu0 %v532
      %602 = vmatprep.subr.bf16.mxu0 0
      %603 = vmatpush2.bf16.msra.mxu0 %v531
      %604 = vmatprep.subr.bf16.mxu0 0
      %605 = vmatpush2.bf16.msra.mxu0 %v530
      %606 = vmatprep.subr.bf16.mxu0 0
      %607 = vmatpush2.bf16.msra.mxu0 %v529
      %608 = vmatprep.subr.bf16.mxu0 0
      %609 = vmatpush2.bf16.msra.mxu0 %v528
      %610 = vmatprep.subr.bf16.mxu0 0
      %611 = vmatpush2.bf16.msra.mxu0 %v527
      %612 = vmatprep.subr.bf16.mxu0 0
      %613 = vmatpush2.bf16.msra.mxu0 %v526
      %614 = vmatprep.mubr.bf16.mxu0 %v375
      %615 = vmatmul.mubr.bf16.gmra.mxu0 %v374
      %v616 = vpop.f32.mrf.mxu0
      %v617 = vadd.f32 0.0, %v616
      %v618 = vpop.f32.mrf.mxu0
      %v619 = vpop.f32.mrf.mxu0
      %v620 = vadd.f32 0.0, %v619
      %v621 = vpop.f32.mrf.mxu0
      %622 = vmatprep.mubr.bf16.mxu0 %v379
      %623 = vmatmul.mubr.bf16.gmra.mxu0 %v378
      %v624 = vpop.f32.mrf.mxu0
      %v625 = vadd.f32 0.0, %v624
      %v626 = vpop.f32.mrf.mxu0
      %v627 = vpop.f32.mrf.mxu0
      %v628 = vadd.f32 0.0, %v627
      %v629 = vpop.f32.mrf.mxu0
      %630 = vdwg.mxu0
      %631 = vmatprep.subr.bf16.mxu0 0
      %632 = vmatpush1.bf16.msra.mxu0 %v541
      %633 = vmatprep.subr.bf16.mxu0 0
      %634 = vmatpush1.bf16.msra.mxu0 %v540
      %635 = vmatprep.subr.bf16.mxu0 0
      %636 = vmatpush1.bf16.msra.mxu0 %v539
      %637 = vmatprep.subr.bf16.mxu0 0
      %638 = vmatpush1.bf16.msra.mxu0 %v538
      %639 = vmatprep.subr.bf16.mxu0 0
      %640 = vmatpush1.bf16.msra.mxu0 %v537
      %641 = vmatprep.subr.bf16.mxu0 0
      %642 = vmatpush1.bf16.msra.mxu0 %v536
      %643 = vmatprep.subr.bf16.mxu0 0
      %644 = vmatpush1.bf16.msra.mxu0 %v535
      %645 = vmatprep.subr.bf16.mxu0 0
      %646 = vmatpush1.bf16.msra.mxu0 %v534
      %647 = vmatprep.subr.bf16.mxu0 0
      %648 = vmatpush2.bf16.msra.mxu0 %v549
      %649 = vmatprep.subr.bf16.mxu0 0
      %650 = vmatpush2.bf16.msra.mxu0 %v548
      %651 = vmatprep.subr.bf16.mxu0 0
      %652 = vmatpush2.bf16.msra.mxu0 %v547
      %653 = vmatprep.subr.bf16.mxu0 0
      %654 = vmatpush2.bf16.msra.mxu0 %v546
      %655 = vmatprep.subr.bf16.mxu0 0
      %656 = vmatpush2.bf16.msra.mxu0 %v545
      %657 = vmatprep.subr.bf16.mxu0 0
      %658 = vmatpush2.bf16.msra.mxu0 %v544
      %659 = vmatprep.subr.bf16.mxu0 0
      %660 = vmatpush2.bf16.msra.mxu0 %v543
      %661 = vmatprep.subr.bf16.mxu0 0
      %662 = vmatpush2.bf16.msra.mxu0 %v542
      %663 = vmatprep.mubr.bf16.mxu0 %v377
      %664 = vmatmul.mubr.bf16.gmra.mxu0 %v376
      %v665 = vpop.f32.mrf.mxu0
      %v666 = vadd.f32 %v617, %v665
      %v667 = vpop.f32.mrf.mxu0
      %v668 = vpop.f32.mrf.mxu0
      %v669 = vadd.f32 %v620, %v668
      %v670 = vpop.f32.mrf.mxu0
      %671 = vmatprep.mubr.bf16.mxu0 %v381
      %672 = vmatmul.mubr.bf16.gmra.mxu0 %v380
      %v673 = vpop.f32.mrf.mxu0
      %v674 = vadd.f32 %v625, %v673
      %v675 = vpop.f32.mrf.mxu0
      %v676 = vpop.f32.mrf.mxu0
      %v677 = vadd.f32 %v628, %v676
      %v678 = vpop.f32.mrf.mxu0
      %679 = vdwg.mxu0
      %vm680 = vcmask 261120
      %v681 = vsel %vm680, %v666, 0.0
      %682 = vadd.xlane.f32.xlu0 %v681
      %v683 = vpop.xlane.xlu0 %682
      %v684 = vsel %vm680, %v669, 0.0
      %685 = vadd.xlane.f32.xlu0 %v684
      %v686 = vpop.xlane.xlu0 %685
      %v687 = vsel %vm680, %v674, 0.0
      %688 = vadd.xlane.f32.xlu0 %v687
      %v689 = vpop.xlane.xlu0 %688
      %v690 = vsel %vm680, %v677, 0.0
      %691 = vadd.xlane.f32.xlu0 %v690
      %v692 = vpop.xlane.xlu0 %691
      %v693 = vrcp.pop 32.0
      %v694 = vmul.f32 %v683, %v693
      %v695 = vmul.f32 %v686, %v693
      %v696 = vmul.f32 %v689, %v693
      %v697 = vmul.f32 %v692, %v693
      %v698 = vsub.f32 %v666, %v694
      %v699 = vsub.f32 %v669, %v695
      %v700 = vsub.f32 %v674, %v696
      %v701 = vsub.f32 %v677, %v697
      %v702 = vmul.f32 %v698, %v698
      %v703 = vmul.f32 %v699, %v699
      %v704 = vmul.f32 %v700, %v700
      %v705 = vmul.f32 %v701, %v701
      %v706 = vsel %vm680, %v702, 0.0
      %707 = vadd.xlane.f32.xlu0 %v706
      %v708 = vpop.xlane.xlu0 %707
      %v709 = vsel %vm680, %v703, 0.0
      %710 = vadd.xlane.f32.xlu0 %v709
      %v711 = vpop.xlane.xlu0 %710
      %v712 = vsel %vm680, %v704, 0.0
      %713 = vadd.xlane.f32.xlu0 %v712
      %v714 = vpop.xlane.xlu0 %713
      %v715 = vsel %vm680, %v705, 0.0
      %716 = vadd.xlane.f32.xlu0 %v715
      %v717 = vpop.xlane.xlu0 %716
      %v718 = vmul.f32 %v708, %v693
      %v719 = vmul.f32 %v711, %v693
      %v720 = vmul.f32 %v714, %v693
      %v721 = vmul.f32 %v717, %v693
      %v722 = vld [vmem:[%s263] sm:$0xff]
      %v723 = vld [vmem:[%s263 + $0x8] sm:$0xff]
      %v724 = vld [vmem:[%s263 + $0x10] sm:$0xff]
      %v725 = vld [vmem:[%s263 + $0x18] sm:$0xff]
      %v726 = vadd.f32 %v718, 1e-05
      %v727 = vadd.f32 %v719, 1e-05
      %v728 = vadd.f32 %v720, 1e-05
      %v729 = vadd.f32 %v721, 1e-05
      %v730 = vrsqrt.pop %v726
      %v731 = vrsqrt.pop %v727
      %v732 = vrsqrt.pop %v728
      %v733 = vrsqrt.pop %v729
      %v734 = vmul.f32 %v722, %v730
      %v735 = vmul.f32 %v723, %v731
      %v736 = vmul.f32 %v724, %v732
      %v737 = vmul.f32 %v725, %v733
      %739 = vset.pattern.permute.xlu0 0
      %740 = vperm.xlu0 %739, %v734
      %v741 = vpop.permute.xlu0 %740
      %744 = vset.pattern.permute.xlu0 0
      %745 = vperm.xlu0 %744, %v735
      %v746 = vpop.permute.xlu0 %745
      %749 = vset.pattern.permute.xlu0 0
      %750 = vperm.xlu0 %749, %v736
      %v751 = vpop.permute.xlu0 %750
      %754 = vset.pattern.permute.xlu0 0
      %755 = vperm.xlu0 %754, %v737
      %v756 = vpop.permute.xlu0 %755
      %v758 = vmul.f32 %v698, %v741
      %v759 = vmul.f32 %v699, %v746
      %v760 = vmul.f32 %v700, %v751
      %v761 = vmul.f32 %v701, %v756
      %v762 = vld [vmem:[%s269] sm:$0xff]
      %v763 = vld [vmem:[%s269 + $0x8] sm:$0xff]
      %v764 = vld [vmem:[%s269 + $0x10] sm:$0xff]
      %v765 = vld [vmem:[%s269 + $0x18] sm:$0xff]
      %767 = vset.pattern.permute.xlu0 0
      %768 = vperm.xlu0 %767, %v762
      %v769 = vpop.permute.xlu0 %768
      %772 = vset.pattern.permute.xlu0 0
      %773 = vperm.xlu0 %772, %v763
      %v774 = vpop.permute.xlu0 %773
      %777 = vset.pattern.permute.xlu0 0
      %778 = vperm.xlu0 %777, %v764
      %v779 = vpop.permute.xlu0 %778
      %782 = vset.pattern.permute.xlu0 0
      %783 = vperm.xlu0 %782, %v765
      %v784 = vpop.permute.xlu0 %783
      %v786 = vadd.f32 %v758, %v769
      %v787 = vadd.f32 %v759, %v774
      %v788 = vadd.f32 %v760, %v779
      %v789 = vadd.f32 %v761, %v784
      %vm790 = vcmp.ge.f32.partialorder %v786, 0.0
      %vm791 = vcmp.ge.f32.partialorder %v787, 0.0
      %vm792 = vcmp.ge.f32.partialorder %v788, 0.0
      %vm793 = vcmp.ge.f32.partialorder %v789, 0.0
      %v794 = vmul.f32 %v786, 0.2
      %v795 = vmul.f32 %v787, 0.2
      %v796 = vmul.f32 %v788, 0.2
      %v797 = vmul.f32 %v789, 0.2
      %v798 = vsel %vm790, %v786, %v794
      %v799 = vsel %vm791, %v787, %v795
      %v800 = vsel %vm792, %v788, %v796
      %v801 = vsel %vm793, %v789, %v797
      %v802 = vpack.c.bf16 %v799, %v798
      %v803 = vpack.c.bf16 %v801, %v800
      %v806 = vunpack.c.l.b16 %v802
      %v807 = vunpack.c.h.b16 %v802
      %v808 = vunpack.c.l.b16 %v803
      %v809 = vunpack.c.h.b16 %v803
      %v810 = vpack.c.b16 %v806, %v806
      %v811 = vpack.c.b16 %v807, %v807
      %v812 = vpack.c.b16 %v808, %v808
      %v813 = vpack.c.b16 %v809, %v809
      %vm818 = vcmask 257024
      %819 = vst.msk [vmem:[%s275] sm:$0xf] %vm818, %v810
      %820 = vst.msk [vmem:[%s275 + $0x4] sm:$0xf] %vm818, %v811
      %821 = vst.msk [vmem:[%s275 + $0x8] sm:$0xf] %vm818, %v812
      %822 = vst.msk [vmem:[%s275 + $0xc] sm:$0xf] %vm818, %v813
      %s823 = smul.u32 4, %s19
      %p824 = scmp.lt.s32.totalorder %s823, 7
      %s825 = scalar_select %p824, %s823, 7
      %s826 = smul.addr %s825, 4
      %s827 = scalar_lea.vmem %s4, %s826
      // Predicated region
      $region37: #{discriminator_forward.8} parent=35 // pred_check
        %p828 = pneg %p149
      $region38: #{discriminator_forward.8} parent=35 // pred_check_branch
        %830 = sbr.rel (%p828) target = $region40
      $region39: #{discriminator_forward.8} parent=35 // pred_region
        %s831 = smul.u32 4, %s19
      $region40: #{discriminator_forward.8} parent=35 // pred_fallthru
        _
    $region36: #{discriminator_forward.8} parent=5 // pred_fallthru
      _
    %p832 = scmp.le.s32.totalorder 2, %s10
    // Predicated region
    $region41: #{discriminator_forward.8} parent=5 // pred_check
      %p833 = pneg %p832
    $region42: #{discriminator_forward.8} parent=5 // pred_check_branch
      %835 = sbr.rel (%p833) target = $region44
    $region43: #{discriminator_forward.8} parent=5 // pred_region
      %s836 = ssub.s32 %s10, 2
      // Predicated region
      $region45: #{discriminator_forward.8} parent=43 // pred_check
        %p837 = pneg %p155
      $region46: #{discriminator_forward.8} parent=43 // pred_check_branch
        %839 = sbr.rel (%p837) target = $region48
      $region47: #{discriminator_forward.8} parent=43 // pred_region
        %s840 = smul.u32 4, %s21
        %p841 = scmp.lt.s32.totalorder %s840, 7
        %s842 = scalar_select %p841, %s840, 7
        %s843 = smul.addr %s842, 4
        %s844 = scalar_lea.vmem %s4, %s843
      $region48: #{discriminator_forward.8} parent=43 // pred_fallthru
        _
    $region44: #{discriminator_forward.8} parent=5 // pred_fallthru
      _
  $region6: #{discriminator_forward.8} parent=0 // loop_footer
    %s14 = sadd.s32 1, %s10
  $region7: #{discriminator_forward.8} parent=0 // loop_footer_branch
    %9 = sbr.rel target = $region3
  $region8: #{discriminator_forward.8} parent=0 // loop_exit
    _

// kernel: discriminator_forward.9
$region0: #{discriminator_forward.9}
  #allocation0 [shape = 'u32[]', space=smem, size = 0x4, offset = 0x4, fixed_abs, tag = 'smem constant byte address 0x4 - core index']
  #allocation1 [shape = 'u32[144,128]{1,0:T(1,128)}', space=vmem, size = 0x12000, scoped, tag = 'internal scratch']
  %s0 = inlined_call_operand.vmem [shape: bf16[2,16,64], index: 0, kind: input, shape index: {}]
  %s1 = inlined_call_operand.vmem [shape: bf16[8,4,64], index: 1, kind: input, shape index: {}]
  %s2 = inlined_call_operand.vmem [shape: bf16[64,8], index: 2, kind: input, shape index: {}]
  %s3 = inlined_call_operand.vmem [shape: bf16[64,8], index: 3, kind: input, shape index: {}]
  %s4 = inlined_call_operand.vmem [shape: bf16[64,32], index: 4, kind: input, shape index: {}]
  %s5 = inlined_call_operand.vmem [shape: bf16[32,64], index: 5, kind: input, shape index: {}]
  %s6 = inlined_call_operand.vmem [shape: f32[16,64], index: 6, kind: input, shape index: {}]
  %s7 = inlined_call_operand.vmem [shape: f32[2,1], index: 7, kind: output, shape index: {}]
  %s8 = sld [smem:[#allocation0]]
  $region38: #{discriminator_forward.9} parent=0
    _
  %s10 = ssub.s32 1, %s8
  %s11 = scalar_select 0, %s10, %s8
  // Predicated region
  $region2: #{discriminator_forward.9} parent=0 // pred_check
    _
  $region3: #{discriminator_forward.9} parent=0 // pred_check_branch
    %13 = sbr.rel (0) target = $region5
  $region4: #{discriminator_forward.9} parent=0 // pred_region
    _
  $region5: #{discriminator_forward.9} parent=0 // pred_fallthru
    _
  // Predicated region
  $region6: #{discriminator_forward.9} parent=0 // pred_check
    _
  $region7: #{discriminator_forward.9} parent=0 // pred_check_branch
    %15 = sbr.rel (0) target = $region9
  $region8: #{discriminator_forward.9} parent=0 // pred_region
    _
  $region9: #{discriminator_forward.9} parent=0 // pred_fallthru
    _
  // Predicated region
  $region10: #{discriminator_forward.9} parent=0 // pred_check
    _
  $region11: #{discriminator_forward.9} parent=0 // pred_check_branch
    %17 = sbr.rel (0) target = $region13
  $region12: #{discriminator_forward.9} parent=0 // pred_region
    _
  $region13: #{discriminator_forward.9} parent=0 // pred_fallthru
    _
  // Predicated region
  $region14: #{discriminator_forward.9} parent=0 // pred_check
    _
  $region15: #{discriminator_forward.9} parent=0 // pred_check_branch
    %19 = sbr.rel (0) target = $region17
  $region16: #{discriminator_forward.9} parent=0 // pred_region
    _
  $region17: #{discriminator_forward.9} parent=0 // pred_fallthru
    _
  // Predicated region
  $region18: #{discriminator_forward.9} parent=0 // pred_check
    _
  $region19: #{discriminator_forward.9} parent=0 // pred_check_branch
    %21 = sbr.rel (0) target = $region21
  $region20: #{discriminator_forward.9} parent=0 // pred_region
    _
  $region21: #{discriminator_forward.9} parent=0 // pred_fallthru
    _
  // Predicated region
  $region22: #{discriminator_forward.9} parent=0 // pred_check
    _
  $region23: #{discriminator_forward.9} parent=0 // pred_check_branch
    %23 = sbr.rel (0) target = $region25
  $region24: #{discriminator_forward.9} parent=0 // pred_region
    _
  $region25: #{discriminator_forward.9} parent=0 // pred_fallthru
    _
  // Predicated region
  $region26: #{discriminator_forward.9} parent=0 // pred_check
    _
  $region27: #{discriminator_forward.9} parent=0 // pred_check_branch
    %25 = sbr.rel (0) target = $region29
  $region28: #{discriminator_forward.9} parent=0 // pred_region
    _
  $region29: #{discriminator_forward.9} parent=0 // pred_fallthru
    _
  %v27 = vld [vmem:[%s2] sm:$0xf]
  %v28 = vld [vmem:[%s2 + $0x4] sm:$0xf]
  %v29 = vld [vmem:[%s2 + $0x8] sm:$0xf]
  %v30 = vld [vmem:[%s2 + $0xc] sm:$0xf]
  %v31 = vld [vmem:[%s2 + $0x10] sm:$0xf]
  %v32 = vld [vmem:[%s2 + $0x14] sm:$0xf]
  %v33 = vld [vmem:[%s2 + $0x18] sm:$0xf]
  %v34 = vld [vmem:[%s2 + $0x1c] sm:$0xf]
  %v35 = vld [vmem:[%s3] sm:$0xf]
  %v36 = vld [vmem:[%s3 + $0x4] sm:$0xf]
  %v37 = vld [vmem:[%s3 + $0x8] sm:$0xf]
  %v38 = vld [vmem:[%s3 + $0xc] sm:$0xf]
  %v39 = vld [vmem:[%s3 + $0x10] sm:$0xf]
  %v40 = vld [vmem:[%s3 + $0x14] sm:$0xf]
  %v41 = vld [vmem:[%s3 + $0x18] sm:$0xf]
  %v42 = vld [vmem:[%s3 + $0x1c] sm:$0xf]
  %v43 = vld [vmem:[%s4] sm:$0xf]
  %v44 = vld [vmem:[%s4 + $0x4] sm:$0xf]
  %v45 = vld [vmem:[%s4 + $0x8] sm:$0xf]
  %v46 = vld [vmem:[%s4 + $0xc] sm:$0xf]
  %v47 = vld [vmem:[%s4 + $0x10] sm:$0xf]
  %v48 = vld [vmem:[%s4 + $0x14] sm:$0xf]
  %v49 = vld [vmem:[%s4 + $0x18] sm:$0xf]
  %v50 = vld [vmem:[%s4 + $0x1c] sm:$0xf]
  %v51 = vld [vmem:[%s5] sm:$0xf]
  %v52 = vld [vmem:[%s5 + $0x4] sm:$0xf]
  %v53 = vld [vmem:[%s5 + $0x8] sm:$0xf]
  %v54 = vld [vmem:[%s5 + $0xc] sm:$0xf]
  %v55 = vunpack.c.l.bf16 %v51
  %v56 = vunpack.c.l.bf16 %v52
  %v57 = vunpack.c.l.bf16 %v53
  %v58 = vunpack.c.l.bf16 %v54
  %v59 = vld [vmem:[%s6] sm:$0xff]
  %v60 = vld [vmem:[%s6 + $0x8] sm:$0xff]
  %v61 = vld [vmem:[%s0] sm:$0xf]
  %v62 = vld [vmem:[%s0 + $0x4] sm:$0xf]
  %v65 = vunpack.c.l.b16 %v61
  %v66 = vunpack.c.l.b16 %v62
  %v67 = vpack.c.b16 %v66, %v65
  %v76 = vunpack.c.l.b16 %v27
  %v77 = vunpack.c.l.b16 %v28
  %v78 = vunpack.c.l.b16 %v29
  %v79 = vunpack.c.l.b16 %v30
  %v80 = vunpack.c.l.b16 %v31
  %v81 = vunpack.c.l.b16 %v32
  %v82 = vunpack.c.l.b16 %v33
  %v83 = vunpack.c.l.b16 %v34
  %v84 = vpack.c.b16 %v77, %v76
  %v85 = vpack.c.b16 %v79, %v78
  %v86 = vpack.c.b16 %v81, %v80
  %v87 = vpack.c.b16 %v83, %v82
  %vm92 = vcmask 523264
  %v94 = vsel %vm92, %v67, 0
  %96 = vmatprep.subr.bf16.mxu0 0
  %97 = vmatpush1.bf16.msra.mxu0 0
  %98 = vmatprep.subr.bf16.mxu0 0
  %99 = vmatpush1.bf16.msra.mxu0 0
  %100 = vmatprep.subr.bf16.mxu0 0
  %101 = vmatpush1.bf16.msra.mxu0 0
  %102 = vmatprep.subr.bf16.mxu0 0
  %103 = vmatpush1.bf16.msra.mxu0 0
  %104 = vmatprep.subr.bf16.mxu0 0
  %105 = vmatpush1.bf16.msra.mxu0 %v87
  %106 = vmatprep.subr.bf16.mxu0 0
  %107 = vmatpush1.bf16.msra.mxu0 %v86
  %108 = vmatprep.subr.bf16.mxu0 0
  %109 = vmatpush1.bf16.msra.mxu0 %v85
  %110 = vmatprep.subr.bf16.mxu0 0
  %111 = vmatpush1.bf16.msra.mxu0 %v84
  %112 = vmatprep.subr.bf16.mxu0 0
  %113 = vmatpush2.bf16.msra.mxu0 0
  %114 = vmatprep.subr.bf16.mxu0 0
  %115 = vmatpush2.bf16.msra.mxu0 0
  %116 = vmatprep.subr.bf16.mxu0 0
  %117 = vmatpush2.bf16.msra.mxu0 0
  %118 = vmatprep.subr.bf16.mxu0 0
  %119 = vmatpush2.bf16.msra.mxu0 0
  %120 = vmatprep.subr.bf16.mxu0 0
  %121 = vmatpush2.bf16.msra.mxu0 0
  %122 = vmatprep.subr.bf16.mxu0 0
  %123 = vmatpush2.bf16.msra.mxu0 0
  %124 = vmatprep.subr.bf16.mxu0 0
  %125 = vmatpush2.bf16.msra.mxu0 0
  %126 = vmatprep.subr.bf16.mxu0 0
  %127 = vmatpush2.bf16.msra.mxu0 0
  %128 = vmatprep.mubr.bf16.mxu0 0
  %129 = vmatmul.mubr.bf16.gmra.mxu0 %v94
  %v130 = vpop.f32.mrf.mxu0
  %v131 = vadd.f32 0.0, %v130
  %v132 = vpop.f32.mrf.mxu0
  %v133 = vpop.f32.mrf.mxu0
  %v134 = vadd.f32 0.0, %v133
  %v135 = vpop.f32.mrf.mxu0
  %136 = vdwg.mxu0
  %v137 = vld [vmem:[%s1] sm:$0x3]
  %v146 = vunpack.c.l.b16 %v35
  %v147 = vunpack.c.l.b16 %v36
  %v148 = vunpack.c.l.b16 %v37
  %v149 = vunpack.c.l.b16 %v38
  %v150 = vunpack.c.l.b16 %v39
  %v151 = vunpack.c.l.b16 %v40
  %v152 = vunpack.c.l.b16 %v41
  %v153 = vunpack.c.l.b16 %v42
  %v154 = vpack.c.b16 %v147, %v146
  %v155 = vpack.c.b16 %v149, %v148
  %v156 = vpack.c.b16 %v151, %v150
  %v157 = vpack.c.b16 %v153, %v152
  %v163 = vsel %vm92, %v137, 0
  %165 = vmatprep.subr.bf16.mxu0 0
  %166 = vmatpush1.bf16.msra.mxu0 0
  %167 = vmatprep.subr.bf16.mxu0 0
  %168 = vmatpush1.bf16.msra.mxu0 0
  %169 = vmatprep.subr.bf16.mxu0 0
  %170 = vmatpush1.bf16.msra.mxu0 0
  %171 = vmatprep.subr.bf16.mxu0 0
  %172 = vmatpush1.bf16.msra.mxu0 0
  %173 = vmatprep.subr.bf16.mxu0 0
  %174 = vmatpush1.bf16.msra.mxu0 %v157
  %175 = vmatprep.subr.bf16.mxu0 0
  %176 = vmatpush1.bf16.msra.mxu0 %v156
  %177 = vmatprep.subr.bf16.mxu0 0
  %178 = vmatpush1.bf16.msra.mxu0 %v155
  %179 = vmatprep.subr.bf16.mxu0 0
  %180 = vmatpush1.bf16.msra.mxu0 %v154
  %181 = vmatprep.subr.bf16.mxu0 0
  %182 = vmatpush2.bf16.msra.mxu0 0
  %183 = vmatprep.subr.bf16.mxu0 0
  %184 = vmatpush2.bf16.msra.mxu0 0
  %185 = vmatprep.subr.bf16.mxu0 0
  %186 = vmatpush2.bf16.msra.mxu0 0
  %187 = vmatprep.subr.bf16.mxu0 0
  %188 = vmatpush2.bf16.msra.mxu0 0
  %189 = vmatprep.subr.bf16.mxu0 0
  %190 = vmatpush2.bf16.msra.mxu0 0
  %191 = vmatprep.subr.bf16.mxu0 0
  %192 = vmatpush2.bf16.msra.mxu0 0
  %193 = vmatprep.subr.bf16.mxu0 0
  %194 = vmatpush2.bf16.msra.mxu0 0
  %195 = vmatprep.subr.bf16.mxu0 0
  %196 = vmatpush2.bf16.msra.mxu0 0
  %197 = vmatprep.mubr.bf16.mxu0 0
  %198 = vmatmul.mubr.bf16.gmra.mxu0 %v163
  %v199 = vpop.f32.mrf.mxu0
  %v200 = vadd.f32 0.0, %v199
  %v201 = vpop.f32.mrf.mxu0
  %v202 = vpop.f32.mrf.mxu0
  %v203 = vpop.f32.mrf.mxu0
  %204 = vdwg.mxu0
  %v213 = vunpack.c.l.b16 %v43
  %v214 = vunpack.c.l.b16 %v44
  %v215 = vunpack.c.l.b16 %v45
  %v216 = vunpack.c.l.b16 %v46
  %v217 = vunpack.c.l.b16 %v47
  %v218 = vunpack.c.l.b16 %v48
  %v219 = vunpack.c.l.b16 %v49
  %v220 = vunpack.c.l.b16 %v50
  %v221 = vpack.c.b16 %v214, %v213
  %v222 = vpack.c.b16 %v216, %v215
  %v223 = vpack.c.b16 %v218, %v217
  %v224 = vpack.c.b16 %v220, %v219
  %229 = vmatprep.subr.bf16.mxu0 0
  %230 = vmatpush1.bf16.msra.mxu0 0
  %231 = vmatprep.subr.bf16.mxu0 0
  %232 = vmatpush1.bf16.msra.mxu0 0
  %233 = vmatprep.subr.bf16.mxu0 0
  %234 = vmatpush1.bf16.msra.mxu0 0
  %235 = vmatprep.subr.bf16.mxu0 0
  %236 = vmatpush1.bf16.msra.mxu0 0
  %237 = vmatprep.subr.bf16.mxu0 0
  %238 = vmatpush1.bf16.msra.mxu0 %v224
  %239 = vmatprep.subr.bf16.mxu0 0
  %240 = vmatpush1.bf16.msra.mxu0 %v223
  %241 = vmatprep.subr.bf16.mxu0 0
  %242 = vmatpush1.bf16.msra.mxu0 %v222
  %243 = vmatprep.subr.bf16.mxu0 0
  %244 = vmatpush1.bf16.msra.mxu0 %v221
  %245 = vmatprep.subr.bf16.mxu0 0
  %246 = vmatpush2.bf16.msra.mxu0 0
  %247 = vmatprep.subr.bf16.mxu0 0
  %248 = vmatpush2.bf16.msra.mxu0 0
  %249 = vmatprep.subr.bf16.mxu0 0
  %250 = vmatpush2.bf16.msra.mxu0 0
  %251 = vmatprep.subr.bf16.mxu0 0
  %252 = vmatpush2.bf16.msra.mxu0 0
  %253 = vmatprep.subr.bf16.mxu0 0
  %254 = vmatpush2.bf16.msra.mxu0 0
  %255 = vmatprep.subr.bf16.mxu0 0
  %256 = vmatpush2.bf16.msra.mxu0 0
  %257 = vmatprep.subr.bf16.mxu0 0
  %258 = vmatpush2.bf16.msra.mxu0 0
  %259 = vmatprep.subr.bf16.mxu0 0
  %260 = vmatpush2.bf16.msra.mxu0 0
  %261 = vmatprep.mubr.bf16.mxu0 0
  %262 = vmatmul.mubr.bf16.gmra.mxu0 %v163
  %v263 = vpop.f32.mrf.mxu0
  %v264 = vadd.f32 0.0, %v263
  %v265 = vpop.f32.mrf.mxu0
  %v266 = vpop.f32.mrf.mxu0
  %v267 = vpop.f32.mrf.mxu0
  %268 = vdwg.mxu0
  %s269 = scalar_lea.vmem %s1, 2
  %v270 = vld [vmem:[%s269] sm:$0x3]
  %v272 = vsel %vm92, %v270, 0
  %274 = vmatprep.subr.bf16.mxu0 0
  %275 = vmatpush1.bf16.msra.mxu0 0
  %276 = vmatprep.subr.bf16.mxu0 0
  %277 = vmatpush1.bf16.msra.mxu0 0
  %278 = vmatprep.subr.bf16.mxu0 0
  %279 = vmatpush1.bf16.msra.mxu0 0
  %280 = vmatprep.subr.bf16.mxu0 0
  %281 = vmatpush1.bf16.msra.mxu0 0
  %282 = vmatprep.subr.bf16.mxu0 0
  %283 = vmatpush1.bf16.msra.mxu0 %v157
  %284 = vmatprep.subr.bf16.mxu0 0
  %285 = vmatpush1.bf16.msra.mxu0 %v156
  %286 = vmatprep.subr.bf16.mxu0 0
  %287 = vmatpush1.bf16.msra.mxu0 %v155
  %288 = vmatprep.subr.bf16.mxu0 0
  %289 = vmatpush1.bf16.msra.mxu0 %v154
  %290 = vmatprep.subr.bf16.mxu0 0
  %291 = vmatpush2.bf16.msra.mxu0 0
  %292 = vmatprep.subr.bf16.mxu0 0
  %293 = vmatpush2.bf16.msra.mxu0 0
  %294 = vmatprep.subr.bf16.mxu0 0
  %295 = vmatpush2.bf16.msra.mxu0 0
  %296 = vmatprep.subr.bf16.mxu0 0
  %297 = vmatpush2.bf16.msra.mxu0 0
  %298 = vmatprep.subr.bf16.mxu0 0
  %299 = vmatpush2.bf16.msra.mxu0 0
  %300 = vmatprep.subr.bf16.mxu0 0
  %301 = vmatpush2.bf16.msra.mxu0 0
  %302 = vmatprep.subr.bf16.mxu0 0
  %303 = vmatpush2.bf16.msra.mxu0 0
  %304 = vmatprep.subr.bf16.mxu0 0
  %305 = vmatpush2.bf16.msra.mxu0 0
  %306 = vmatprep.mubr.bf16.mxu0 0
  %307 = vmatmul.mubr.bf16.gmra.mxu0 %v272
  %v308 = vpop.f32.mrf.mxu0
  %v309 = vadd.f32 0.0, %v308
  %v310 = vpop.f32.mrf.mxu0
  %v311 = vpop.f32.mrf.mxu0
  %v312 = vpop.f32.mrf.mxu0
  %313 = vdwg.mxu0
  %314 = vmatprep.subr.bf16.mxu0 0
  %315 = vmatpush1.bf16.msra.mxu0 0
  %316 = vmatprep.subr.bf16.mxu0 0
  %317 = vmatpush1.bf16.msra.mxu0 0
  %318 = vmatprep.subr.bf16.mxu0 0
  %319 = vmatpush1.bf16.msra.mxu0 0
  %320 = vmatprep.subr.bf16.mxu0 0
  %321 = vmatpush1.bf16.msra.mxu0 0
  %322 = vmatprep.subr.bf16.mxu0 0
  %323 = vmatpush1.bf16.msra.mxu0 %v224
  %324 = vmatprep.subr.bf16.mxu0 0
  %325 = vmatpush1.bf16.msra.mxu0 %v223
  %326 = vmatprep.subr.bf16.mxu0 0
  %327 = vmatpush1.bf16.msra.mxu0 %v222
  %328 = vmatprep.subr.bf16.mxu0 0
  %329 = vmatpush1.bf16.msra.mxu0 %v221
  %330 = vmatprep.subr.bf16.mxu0 0
  %331 = vmatpush2.bf16.msra.mxu0 0
  %332 = vmatprep.subr.bf16.mxu0 0
  %333 = vmatpush2.bf16.msra.mxu0 0
  %334 = vmatprep.subr.bf16.mxu0 0
  %335 = vmatpush2.bf16.msra.mxu0 0
  %336 = vmatprep.subr.bf16.mxu0 0
  %337 = vmatpush2.bf16.msra.mxu0 0
  %338 = vmatprep.subr.bf16.mxu0 0
  %339 = vmatpush2.bf16.msra.mxu0 0
  %340 = vmatprep.subr.bf16.mxu0 0
  %341 = vmatpush2.bf16.msra.mxu0 0
  %342 = vmatprep.subr.bf16.mxu0 0
  %343 = vmatpush2.bf16.msra.mxu0 0
  %344 = vmatprep.subr.bf16.mxu0 0
  %345 = vmatpush2.bf16.msra.mxu0 0
  %346 = vmatprep.mubr.bf16.mxu0 0
  %347 = vmatmul.mubr.bf16.gmra.mxu0 %v272
  %v348 = vpop.f32.mrf.mxu0
  %v349 = vadd.f32 0.0, %v348
  %v350 = vpop.f32.mrf.mxu0
  %v351 = vpop.f32.mrf.mxu0
  %v352 = vpop.f32.mrf.mxu0
  %353 = vdwg.mxu0
  %v354 = vmax.f32 %v200, %v309
  %v355 = vmax.f32 %v264, %v349
  %s356 = scalar_lea.vmem %s1, 4
  %v357 = vld [vmem:[%s356] sm:$0x3]
  %v359 = vsel %vm92, %v357, 0
  %361 = vmatprep.subr.bf16.mxu0 0
  %362 = vmatpush1.bf16.msra.mxu0 0
  %363 = vmatprep.subr.bf16.mxu0 0
  %364 = vmatpush1.bf16.msra.mxu0 0
  %365 = vmatprep.subr.bf16.mxu0 0
  %366 = vmatpush1.bf16.msra.mxu0 0
  %367 = vmatprep.subr.bf16.mxu0 0
  %368 = vmatpush1.bf16.msra.mxu0 0
  %369 = vmatprep.subr.bf16.mxu0 0
  %370 = vmatpush1.bf16.msra.mxu0 %v157
  %371 = vmatprep.subr.bf16.mxu0 0
  %372 = vmatpush1.bf16.msra.mxu0 %v156
  %373 = vmatprep.subr.bf16.mxu0 0
  %374 = vmatpush1.bf16.msra.mxu0 %v155
  %375 = vmatprep.subr.bf16.mxu0 0
  %376 = vmatpush1.bf16.msra.mxu0 %v154
  %377 = vmatprep.subr.bf16.mxu0 0
  %378 = vmatpush2.bf16.msra.mxu0 0
  %379 = vmatprep.subr.bf16.mxu0 0
  %380 = vmatpush2.bf16.msra.mxu0 0
  %381 = vmatprep.subr.bf16.mxu0 0
  %382 = vmatpush2.bf16.msra.mxu0 0
  %383 = vmatprep.subr.bf16.mxu0 0
  %384 = vmatpush2.bf16.msra.mxu0 0
  %385 = vmatprep.subr.bf16.mxu0 0
  %386 = vmatpush2.bf16.msra.mxu0 0
  %387 = vmatprep.subr.bf16.mxu0 0
  %388 = vmatpush2.bf16.msra.mxu0 0
  %389 = vmatprep.subr.bf16.mxu0 0
  %390 = vmatpush2.bf16.msra.mxu0 0
  %391 = vmatprep.subr.bf16.mxu0 0
  %392 = vmatpush2.bf16.msra.mxu0 0
  %393 = vmatprep.mubr.bf16.mxu0 0
  %394 = vmatmul.mubr.bf16.gmra.mxu0 %v359
  %v395 = vpop.f32.mrf.mxu0
  %v396 = vadd.f32 0.0, %v395
  %v397 = vpop.f32.mrf.mxu0
  %v398 = vpop.f32.mrf.mxu0
  %v399 = vpop.f32.mrf.mxu0
  %400 = vdwg.mxu0
  %401 = vmatprep.subr.bf16.mxu0 0
  %402 = vmatpush1.bf16.msra.mxu0 0
  %403 = vmatprep.subr.bf16.mxu0 0
  %404 = vmatpush1.bf16.msra.mxu0 0
  %405 = vmatprep.subr.bf16.mxu0 0
  %406 = vmatpush1.bf16.msra.mxu0 0
  %407 = vmatprep.subr.bf16.mxu0 0
  %408 = vmatpush1.bf16.msra.mxu0 0
  %409 = vmatprep.subr.bf16.mxu0 0
  %410 = vmatpush1.bf16.msra.mxu0 %v224
  %411 = vmatprep.subr.bf16.mxu0 0
  %412 = vmatpush1.bf16.msra.mxu0 %v223
  %413 = vmatprep.subr.bf16.mxu0 0
  %414 = vmatpush1.bf16.msra.mxu0 %v222
  %415 = vmatprep.subr.bf16.mxu0 0
  %416 = vmatpush1.bf16.msra.mxu0 %v221
  %417 = vmatprep.subr.bf16.mxu0 0
  %418 = vmatpush2.bf16.msra.mxu0 0
  %419 = vmatprep.subr.bf16.mxu0 0
  %420 = vmatpush2.bf16.msra.mxu0 0
  %421 = vmatprep.subr.bf16.mxu0 0
  %422 = vmatpush2.bf16.msra.mxu0 0
  %423 = vmatprep.subr.bf16.mxu0 0
  %424 = vmatpush2.bf16.msra.mxu0 0
  %425 = vmatprep.subr.bf16.mxu0 0
  %426 = vmatpush2.bf16.msra.mxu0 0
  %427 = vmatprep.subr.bf16.mxu0 0
  %428 = vmatpush2.bf16.msra.mxu0 0
  %429 = vmatprep.subr.bf16.mxu0 0
  %430 = vmatpush2.bf16.msra.mxu0 0
  %431 = vmatprep.subr.bf16.mxu0 0
  %432 = vmatpush2.bf16.msra.mxu0 0
  %433 = vmatprep.mubr.bf16.mxu0 0
  %434 = vmatmul.mubr.bf16.gmra.mxu0 %v359
  %v435 = vpop.f32.mrf.mxu0
  %v436 = vadd.f32 0.0, %v435
  %v437 = vpop.f32.mrf.mxu0
  %v438 = vpop.f32.mrf.mxu0
  %v439 = vpop.f32.mrf.mxu0
  %440 = vdwg.mxu0
  %v441 = vmax.f32 %v354, %v396
  %v442 = vmax.f32 %v355, %v436
  %s443 = scalar_lea.vmem %s1, 6
  %v444 = vld [vmem:[%s443] sm:$0x3]
  %v446 = vsel %vm92, %v444, 0
  %448 = vmatprep.subr.bf16.mxu0 0
  %449 = vmatpush1.bf16.msra.mxu0 0
  %450 = vmatprep.subr.bf16.mxu0 0
  %451 = vmatpush1.bf16.msra.mxu0 0
  %452 = vmatprep.subr.bf16.mxu0 0
  %453 = vmatpush1.bf16.msra.mxu0 0
  %454 = vmatprep.subr.bf16.mxu0 0
  %455 = vmatpush1.bf16.msra.mxu0 0
  %456 = vmatprep.subr.bf16.mxu0 0
  %457 = vmatpush1.bf16.msra.mxu0 %v157
  %458 = vmatprep.subr.bf16.mxu0 0
  %459 = vmatpush1.bf16.msra.mxu0 %v156
  %460 = vmatprep.subr.bf16.mxu0 0
  %461 = vmatpush1.bf16.msra.mxu0 %v155
  %462 = vmatprep.subr.bf16.mxu0 0
  %463 = vmatpush1.bf16.msra.mxu0 %v154
  %464 = vmatprep.subr.bf16.mxu0 0
  %465 = vmatpush2.bf16.msra.mxu0 0
  %466 = vmatprep.subr.bf16.mxu0 0
  %467 = vmatpush2.bf16.msra.mxu0 0
  %468 = vmatprep.subr.bf16.mxu0 0
  %469 = vmatpush2.bf16.msra.mxu0 0
  %470 = vmatprep.subr.bf16.mxu0 0
  %471 = vmatpush2.bf16.msra.mxu0 0
  %472 = vmatprep.subr.bf16.mxu0 0
  %473 = vmatpush2.bf16.msra.mxu0 0
  %474 = vmatprep.subr.bf16.mxu0 0
  %475 = vmatpush2.bf16.msra.mxu0 0
  %476 = vmatprep.subr.bf16.mxu0 0
  %477 = vmatpush2.bf16.msra.mxu0 0
  %478 = vmatprep.subr.bf16.mxu0 0
  %479 = vmatpush2.bf16.msra.mxu0 0
  %480 = vmatprep.mubr.bf16.mxu0 0
  %481 = vmatmul.mubr.bf16.gmra.mxu0 %v446
  %v482 = vpop.f32.mrf.mxu0
  %v483 = vadd.f32 0.0, %v482
  %v484 = vpop.f32.mrf.mxu0
  %v485 = vpop.f32.mrf.mxu0
  %v486 = vpop.f32.mrf.mxu0
  %487 = vdwg.mxu0
  %488 = vmatprep.subr.bf16.mxu0 0
  %489 = vmatpush1.bf16.msra.mxu0 0
  %490 = vmatprep.subr.bf16.mxu0 0
  %491 = vmatpush1.bf16.msra.mxu0 0
  %492 = vmatprep.subr.bf16.mxu0 0
  %493 = vmatpush1.bf16.msra.mxu0 0
  %494 = vmatprep.subr.bf16.mxu0 0
  %495 = vmatpush1.bf16.msra.mxu0 0
  %496 = vmatprep.subr.bf16.mxu0 0
  %497 = vmatpush1.bf16.msra.mxu0 %v224
  %498 = vmatprep.subr.bf16.mxu0 0
  %499 = vmatpush1.bf16.msra.mxu0 %v223
  %500 = vmatprep.subr.bf16.mxu0 0
  %501 = vmatpush1.bf16.msra.mxu0 %v222
  %502 = vmatprep.subr.bf16.mxu0 0
  %503 = vmatpush1.bf16.msra.mxu0 %v221
  %504 = vmatprep.subr.bf16.mxu0 0
  %505 = vmatpush2.bf16.msra.mxu0 0
  %506 = vmatprep.subr.bf16.mxu0 0
  %507 = vmatpush2.bf16.msra.mxu0 0
  %508 = vmatprep.subr.bf16.mxu0 0
  %509 = vmatpush2.bf16.msra.mxu0 0
  %510 = vmatprep.subr.bf16.mxu0 0
  %511 = vmatpush2.bf16.msra.mxu0 0
  %512 = vmatprep.subr.bf16.mxu0 0
  %513 = vmatpush2.bf16.msra.mxu0 0
  %514 = vmatprep.subr.bf16.mxu0 0
  %515 = vmatpush2.bf16.msra.mxu0 0
  %516 = vmatprep.subr.bf16.mxu0 0
  %517 = vmatpush2.bf16.msra.mxu0 0
  %518 = vmatprep.subr.bf16.mxu0 0
  %519 = vmatpush2.bf16.msra.mxu0 0
  %520 = vmatprep.mubr.bf16.mxu0 0
  %521 = vmatmul.mubr.bf16.gmra.mxu0 %v446
  %v522 = vpop.f32.mrf.mxu0
  %v523 = vadd.f32 0.0, %v522
  %v524 = vpop.f32.mrf.mxu0
  %v525 = vpop.f32.mrf.mxu0
  %v526 = vpop.f32.mrf.mxu0
  %527 = vdwg.mxu0
  %v528 = vmax.f32 %v441, %v483
  %v529 = vmax.f32 %v442, %v523
  %vm530 = vcmask 64512
  %v532 = vsel %vm530, %v131, 0
  %v535 = vsel %vm530, %v134, 0
  %v538 = vsel %vm530, %v528, 0
  %540 = vmatprep.subr.mxu0 0.0
  %541 = vmatpush1.xpose.msra.mxu0 0.0
  %542 = vmatprep.subr.mxu0 0.0
  %543 = vmatpush1.xpose.msra.mxu0 0.0
  %544 = vmatprep.subr.mxu0 0.0
  %545 = vmatpush1.xpose.msra.mxu0 0.0
  %546 = vmatprep.subr.mxu0 0.0
  %547 = vmatpush1.xpose.msra.mxu0 0.0
  %548 = vmatprep.subr.mxu0 0.0
  %549 = vmatpush1.xpose.msra.mxu0 0.0
  %550 = vmatprep.subr.mxu0 0.0
  %551 = vmatpush1.xpose.msra.mxu0 0.0
  %552 = vmatprep.subr.mxu0 0.0
  %553 = vmatpush1.xpose.msra.mxu0 0.0
  %554 = vmatprep.subr.mxu0 0.0
  %555 = vmatpush1.xpose.msra.mxu0 0.0
  %556 = vmatprep.subr.mxu0 0.0
  %557 = vmatpush1.xpose.msra.mxu0 0.0
  %558 = vmatprep.subr.mxu0 0.0
  %559 = vmatpush1.xpose.msra.mxu0 0.0
  %560 = vmatprep.subr.mxu0 0.0
  %561 = vmatpush1.xpose.msra.mxu0 0.0
  %562 = vmatprep.subr.mxu0 0.0
  %563 = vmatpush1.xpose.msra.mxu0 0.0
  %564 = vmatprep.subr.mxu0 0.0
  %565 = vmatpush1.xpose.msra.mxu0 0.0
  %566 = vmatprep.subr.mxu0 0.0
  %567 = vmatpush1.xpose.msra.mxu0 0.0
  %568 = vmatprep.subr.mxu0 0.0
  %569 = vmatpush1.xpose.msra.mxu0 0.0
  %570 = vmatprep.subr.mxu0 0.0
  %571 = vmatpush1.xpose.msra.mxu0 %v538
  %572 = vmatprep.subr.mxu0 0.0
  %573 = vmatpush2.xpose.msra.mxu0 0.0
  %574 = vmatprep.subr.mxu0 0.0
  %575 = vmatpush2.xpose.msra.mxu0 0.0
  %576 = vmatprep.subr.mxu0 0.0
  %577 = vmatpush2.xpose.msra.mxu0 0.0
  %578 = vmatprep.subr.mxu0 0.0
  %579 = vmatpush2.xpose.msra.mxu0 0.0
  %580 = vmatprep.subr.mxu0 0.0
  %581 = vmatpush2.xpose.msra.mxu0 0.0
  %582 = vmatprep.subr.mxu0 0.0
  %583 = vmatpush2.xpose.msra.mxu0 0.0
  %584 = vmatprep.subr.mxu0 0.0
  %585 = vmatpush2.xpose.msra.mxu0 0.0
  %586 = vmatprep.subr.mxu0 0.0
  %587 = vmatpush2.xpose.msra.mxu0 0.0
  %588 = vmatprep.subr.mxu0 0.0
  %589 = vmatpush2.xpose.msra.mxu0 0.0
  %590 = vmatprep.subr.mxu0 0.0
  %591 = vmatpush2.xpose.msra.mxu0 0.0
  %592 = vmatprep.subr.mxu0 0.0
  %593 = vmatpush2.xpose.msra.mxu0 0.0
  %594 = vmatprep.subr.mxu0 0.0
  %595 = vmatpush2.xpose.msra.mxu0 0.0
  %596 = vmatprep.subr.mxu0 0.0
  %597 = vmatpush2.xpose.msra.mxu0 0.0
  %598 = vmatprep.subr.mxu0 0.0
  %599 = vmatpush2.xpose.msra.mxu0 0.0
  %600 = vmatprep.subr.mxu0 0.0
  %601 = vmatpush2.xpose.msra.mxu0 0.0
  %602 = vmatprep.subr.mxu0 0.0
  %603 = vmatpush2.xpose.msra.mxu0 0.0
  %604 = vmatprep.mubr.f32.mxu0 0.0
  %605 = vmatmul.mubr.f32.gmra.mxu0 %v532
  %v606 = vpop.f32.mrf.mxu0
  %v607 = vadd.f32 0.0, %v606
  %v608 = vpop.f32.mrf.mxu0
  %609 = vmatprep.mubr.f32.mxu0 0.0
  %610 = vmatmul.mubr.f32.gmra.mxu0 %v535
  %v611 = vpop.f32.mrf.mxu0
  %v612 = vadd.f32 0.0, %v611
  %v613 = vpop.f32.mrf.mxu0
  %614 = vdwg.mxu0
  %vm615 = vcmask 31744
  %v616 = vsel %vm615, %v607, -inf
  %617 = vmax.xlane.f32.xlu0 %v616
  %v618 = vpop.xlane.xlu0 %617
  %v619 = vsel %vm615, %v612, -inf
  %620 = vmax.xlane.f32.xlu0 %v619
  %v621 = vpop.xlane.xlu0 %620
  %v622 = vsub.f32 %v607, %v618
  %v623 = vsub.f32 %v612, %v621
  %v624 = vmul.f32 %v622, 1.442695
  %v625 = vpow.pop %v624
  %v626 = vmul.f32 %v623, 1.442695
  %v627 = vpow.pop %v626
  %v628 = vsel %vm615, %v625, 0.0
  %629 = vadd.xlane.f32.xlu0 %v628
  %v630 = vpop.xlane.xlu0 %629
  %v631 = vsel %vm615, %v627, 0.0
  %632 = vadd.xlane.f32.xlu0 %v631
  %v633 = vpop.xlane.xlu0 %632
  %v634 = vrcp.pop %v630
  %v635 = vmul.f32 %v625, %v634
  %v636 = vrcp.pop %v633
  %v637 = vmul.f32 %v627, %v636
  %v639 = vsel %vm615, %v635, 0
  %v642 = vsel %vm615, %v637, 0
  %vm644 = vcmask 1043456
  %v646 = vsel %vm644, %v529, 0
  %648 = vmatprep.subr.mxu0 0.0
  %649 = vmatpush1.msra.mxu0 0.0
  %650 = vmatprep.subr.mxu0 0.0
  %651 = vmatpush1.msra.mxu0 0.0
  %652 = vmatprep.subr.mxu0 0.0
  %653 = vmatpush1.msra.mxu0 0.0
  %654 = vmatprep.subr.mxu0 0.0
  %655 = vmatpush1.msra.mxu0 0.0
  %656 = vmatprep.subr.mxu0 0.0
  %657 = vmatpush1.msra.mxu0 0.0
  %658 = vmatprep.subr.mxu0 0.0
  %659 = vmatpush1.msra.mxu0 0.0
  %660 = vmatprep.subr.mxu0 0.0
  %661 = vmatpush1.msra.mxu0 0.0
  %662 = vmatprep.subr.mxu0 0.0
  %663 = vmatpush1.msra.mxu0 0.0
  %664 = vmatprep.subr.mxu0 0.0
  %665 = vmatpush1.msra.mxu0 0.0
  %666 = vmatprep.subr.mxu0 0.0
  %667 = vmatpush1.msra.mxu0 0.0
  %668 = vmatprep.subr.mxu0 0.0
  %669 = vmatpush1.msra.mxu0 0.0
  %670 = vmatprep.subr.mxu0 0.0
  %671 = vmatpush1.msra.mxu0 0.0
  %672 = vmatprep.subr.mxu0 0.0
  %673 = vmatpush1.msra.mxu0 0.0
  %674 = vmatprep.subr.mxu0 0.0
  %675 = vmatpush1.msra.mxu0 0.0
  %676 = vmatprep.subr.mxu0 0.0
  %677 = vmatpush1.msra.mxu0 0.0
  %678 = vmatprep.subr.mxu0 0.0
  %679 = vmatpush1.msra.mxu0 %v646
  %680 = vmatprep.subr.mxu0 0.0
  %681 = vmatpush2.msra.mxu0 0.0
  %682 = vmatprep.subr.mxu0 0.0
  %683 = vmatpush2.msra.mxu0 0.0
  %684 = vmatprep.subr.mxu0 0.0
  %685 = vmatpush2.msra.mxu0 0.0
  %686 = vmatprep.subr.mxu0 0.0
  %687 = vmatpush2.msra.mxu0 0.0
  %688 = vmatprep.subr.mxu0 0.0
  %689 = vmatpush2.msra.mxu0 0.0
  %690 = vmatprep.subr.mxu0 0.0
  %691 = vmatpush2.msra.mxu0 0.0
  %692 = vmatprep.subr.mxu0 0.0
  %693 = vmatpush2.msra.mxu0 0.0
  %694 = vmatprep.subr.mxu0 0.0
  %695 = vmatpush2.msra.mxu0 0.0
  %696 = vmatprep.subr.mxu0 0.0
  %697 = vmatpush2.msra.mxu0 0.0
  %698 = vmatprep.subr.mxu0 0.0
  %699 = vmatpush2.msra.mxu0 0.0
  %700 = vmatprep.subr.mxu0 0.0
  %701 = vmatpush2.msra.mxu0 0.0
  %702 = vmatprep.subr.mxu0 0.0
  %703 = vmatpush2.msra.mxu0 0.0
  %704 = vmatprep.subr.mxu0 0.0
  %705 = vmatpush2.msra.mxu0 0.0
  %706 = vmatprep.subr.mxu0 0.0
  %707 = vmatpush2.msra.mxu0 0.0
  %708 = vmatprep.subr.mxu0 0.0
  %709 = vmatpush2.msra.mxu0 0.0
  %710 = vmatprep.subr.mxu0 0.0
  %711 = vmatpush2.msra.mxu0 0.0
  %712 = vmatprep.mubr.f32.mxu0 0.0
  %713 = vmatmul.mubr.f32.gmra.mxu0 %v639
  %v714 = vpop.f32.mrf.mxu0
  %v715 = vadd.f32 0.0, %v714
  %v716 = vpop.f32.mrf.mxu0
  %717 = vmatprep.mubr.f32.mxu0 0.0
  %718 = vmatmul.mubr.f32.gmra.mxu0 %v642
  %v719 = vpop.f32.mrf.mxu0
  %v720 = vadd.f32 0.0, %v719
  %v721 = vpop.f32.mrf.mxu0
  %722 = vdwg.mxu0
  %v723 = vunpack.c.l.bf16 %v61
  %v724 = vunpack.c.l.bf16 %v62
  %vm725 = vcmask 261120
  %v727 = vsel %vm725, %v715, 0
  %v730 = vsel %vm725, %v720, 0
  %732 = vmatprep.subr.mxu0 0.0
  %733 = vmatpush1.msra.mxu0 0.0
  %734 = vmatprep.subr.mxu0 0.0
  %735 = vmatpush1.msra.mxu0 0.0
  %736 = vmatprep.subr.mxu0 0.0
  %737 = vmatpush1.msra.mxu0 0.0
  %738 = vmatprep.subr.mxu0 0.0
  %739 = vmatpush1.msra.mxu0 0.0
  %740 = vmatprep.subr.mxu0 0.0
  %741 = vmatpush1.msra.mxu0 0.0
  %742 = vmatprep.subr.mxu0 0.0
  %743 = vmatpush1.msra.mxu0 0.0
  %744 = vmatprep.subr.mxu0 0.0
  %745 = vmatpush1.msra.mxu0 0.0
  %746 = vmatprep.subr.mxu0 0.0
  %747 = vmatpush1.msra.mxu0 0.0
  %748 = vmatprep.subr.mxu0 0.0
  %749 = vmatpush1.msra.mxu0 0.0
  %750 = vmatprep.subr.mxu0 0.0
  %751 = vmatpush1.msra.mxu0 0.0
  %752 = vmatprep.subr.mxu0 0.0
  %753 = vmatpush1.msra.mxu0 0.0
  %754 = vmatprep.subr.mxu0 0.0
  %755 = vmatpush1.msra.mxu0 0.0
  %756 = vmatprep.subr.mxu0 0.0
  %757 = vmatpush1.msra.mxu0 %v58
  %758 = vmatprep.subr.mxu0 0.0
  %759 = vmatpush1.msra.mxu0 %v57
  %760 = vmatprep.subr.mxu0 0.0
  %761 = vmatpush1.msra.mxu0 %v56
  %762 = vmatprep.subr.mxu0 0.0
  %763 = vmatpush1.msra.mxu0 %v55
  %764 = vmatprep.subr.mxu0 0.0
  %765 = vmatpush2.msra.mxu0 0.0
  %766 = vmatprep.subr.mxu0 0.0
  %767 = vmatpush2.msra.mxu0 0.0
  %768 = vmatprep.subr.mxu0 0.0
  %769 = vmatpush2.msra.mxu0 0.0
  %770 = vmatprep.subr.mxu0 0.0
  %771 = vmatpush2.msra.mxu0 0.0
  %772 = vmatprep.subr.mxu0 0.0
  %773 = vmatpush2.msra.mxu0 0.0
  %774 = vmatprep.subr.mxu0 0.0
  %775 = vmatpush2.msra.mxu0 0.0
  %776 = vmatprep.subr.mxu0 0.0
  %777 = vmatpush2.msra.mxu0 0.0
  %778 = vmatprep.subr.mxu0 0.0
  %779 = vmatpush2.msra.mxu0 0.0
  %780 = vmatprep.subr.mxu0 0.0
  %781 = vmatpush2.msra.mxu0 0.0
  %782 = vmatprep.subr.mxu0 0.0
  %783 = vmatpush2.msra.mxu0 0.0
  %784 = vmatprep.subr.mxu0 0.0
  %785 = vmatpush2.msra.mxu0 0.0
  %786 = vmatprep.subr.mxu0 0.0
  %787 = vmatpush2.msra.mxu0 0.0
  %788 = vmatprep.subr.mxu0 0.0
  %789 = vmatpush2.msra.mxu0 0.0
  %790 = vmatprep.subr.mxu0 0.0
  %791 = vmatpush2.msra.mxu0 0.0
  %792 = vmatprep.subr.mxu0 0.0
  %793 = vmatpush2.msra.mxu0 0.0
  %794 = vmatprep.subr.mxu0 0.0
  %795 = vmatpush2.msra.mxu0 0.0
  %796 = vmatprep.mubr.f32.mxu0 0.0
  %797 = vmatmul.mubr.f32.gmra.mxu0 %v727
  %v798 = vpop.f32.mrf.mxu0
  %v799 = vadd.f32 %v723, %v798
  %v800 = vpop.f32.mrf.mxu0
  %801 = vmatprep.mubr.f32.mxu0 0.0
  %802 = vmatmul.mubr.f32.gmra.mxu0 %v730
  %v803 = vpop.f32.mrf.mxu0
  %v804 = vadd.f32 %v724, %v803
  %v805 = vpop.f32.mrf.mxu0
  %806 = vdwg.mxu0
  %v807 = vmul.f32 %v799, %v59
  %v808 = vmul.f32 %v804, %v60
  %v809 = vsel %vm92, %v807, 0.0
  %810 = vadd.xlane.f32.xlu0 %v809
  %v811 = vpop.xlane.xlu0 %810
  %v812 = vsel %vm92, %v808, 0.0
  %813 = vadd.xlane.f32.xlu0 %v812
  %v814 = vpop.xlane.xlu0 %813
  %v815 = vadd.f32 %v811, %v814
  %v816 = vrot.slane %v815, 4
  %v817 = vadd.f32 %v815, %v816
  %v818 = vrot.slane %v817, 2
  %v819 = vadd.f32 %v817, %v818
  %v820 = vrot.slane %v819, 1
  %v821 = vadd.f32 %v819, %v820
  %v822 = vxor.u32 %v821, 2147483648
  %v823 = vmul.f32 %v822, 1.442695
  %v824 = vpow.pop %v823
  %v825 = vadd.f32 %v824, 1.0
  %v826 = vrcp.pop %v825
  %v827 = vmul.f32 1.0, %v826
  %vm828 = vcmask 0
  %829 = vst.msk [vmem:[%s7] sm:$0x1] %vm828, %v827
  %s830 = scalar_lea.vmem %s0, 8
  %v831 = vld [vmem:[%s830] sm:$0xf]
  %v832 = vld [vmem:[%s830 + $0x4] sm:$0xf]
  %v835 = vunpack.c.l.b16 %v831
  %v836 = vunpack.c.l.b16 %v832
  %v837 = vpack.c.b16 %v836, %v835
  %v839 = vsel %vm92, %v837, 0
  %841 = vmatprep.subr.bf16.mxu0 0
  %842 = vmatpush1.bf16.msra.mxu0 0
  %843 = vmatprep.subr.bf16.mxu0 0
  %844 = vmatpush1.bf16.msra.mxu0 0
  %845 = vmatprep.subr.bf16.mxu0 0
  %846 = vmatpush1.bf16.msra.mxu0 0
  %847 = vmatprep.subr.bf16.mxu0 0
  %848 = vmatpush1.bf16.msra.mxu0 0
  %849 = vmatprep.subr.bf16.mxu0 0
  %850 = vmatpush1.bf16.msra.mxu0 %v87
  %851 = vmatprep.subr.bf16.mxu0 0
  %852 = vmatpush1.bf16.msra.mxu0 %v86
  %853 = vmatprep.subr.bf16.mxu0 0
  %854 = vmatpush1.bf16.msra.mxu0 %v85
  %855 = vmatprep.subr.bf16.mxu0 0
  %856 = vmatpush1.bf16.msra.mxu0 %v84
  %857 = vmatprep.subr.bf16.mxu0 0
  %858 = vmatpush2.bf16.msra.mxu0 0
  %859 = vmatprep.subr.bf16.mxu0 0
  %860 = vmatpush2.bf16.msra.mxu0 0
  %861 = vmatprep.subr.bf16.mxu0 0
  %862 = vmatpush2.bf16.msra.mxu0 0
  %863 = vmatprep.subr.bf16.mxu0 0
  %864 = vmatpush2.bf16.msra.mxu0 0
  %865 = vmatprep.subr.bf16.mxu0 0
  %866 = vmatpush2.bf16.msra.mxu0 0
  %867 = vmatprep.subr.bf16.mxu0 0
  %868 = vmatpush2.bf16.msra.mxu0 0
  %869 = vmatprep.subr.bf16.mxu0 0
  %870 = vmatpush2.bf16.msra.mxu0 0
  %871 = vmatprep.subr.bf16.mxu0 0
  %872 = vmatpush2.bf16.msra.mxu0 0
  %873 = vmatprep.mubr.bf16.mxu0 0
  %874 = vmatmul.mubr.bf16.gmra.mxu0 %v839
  %v875 = vpop.f32.mrf.mxu0
  %v876 = vadd.f32 0.0, %v875
  %v877 = vpop.f32.mrf.mxu0
  %v878 = vpop.f32.mrf.mxu0
  %v879 = vadd.f32 0.0, %v878
  %v880 = vpop.f32.mrf.mxu0
  %881 = vdwg.mxu0
  %s882 = scalar_lea.vmem %s1, 8
  %v883 = vld [vmem:[%s882] sm:$0x3]
  %v885 = vsel %vm92, %v883, 0
  %887 = vmatprep.subr.bf16.mxu0 0
  %888 = vmatpush1.bf16.msra.mxu0 0
  %889 = vmatprep.subr.bf16.mxu0 0
  %890 = vmatpush1.bf16.msra.mxu0 0
  %891 = vmatprep.subr.bf16.mxu0 0
  %892 = vmatpush1.bf16.msra.mxu0 0
  %893 = vmatprep.subr.bf16.mxu0 0
  %894 = vmatpush1.bf16.msra.mxu0 0
  %895 = vmatprep.subr.bf16.mxu0 0
  %896 = vmatpush1.bf16.msra.mxu0 %v157
  %897 = vmatprep.subr.bf16.mxu0 0
  %898 = vmatpush1.bf16.msra.mxu0 %v156
  %899 = vmatprep.subr.bf16.mxu0 0
  %900 = vmatpush1.bf16.msra.mxu0 %v155
  %901 = vmatprep.subr.bf16.mxu0 0
  %902 = vmatpush1.bf16.msra.mxu0 %v154
  %903 = vmatprep.subr.bf16.mxu0 0
  %904 = vmatpush2.bf16.msra.mxu0 0
  %905 = vmatprep.subr.bf16.mxu0 0
  %906 = vmatpush2.bf16.msra.mxu0 0
  %907 = vmatprep.subr.bf16.mxu0 0
  %908 = vmatpush2.bf16.msra.mxu0 0
  %909 = vmatprep.subr.bf16.mxu0 0
  %910 = vmatpush2.bf16.msra.mxu0 0
  %911 = vmatprep.subr.bf16.mxu0 0
  %912 = vmatpush2.bf16.msra.mxu0 0
  %913 = vmatprep.subr.bf16.mxu0 0
  %914 = vmatpush2.bf16.msra.mxu0 0
  %915 = vmatprep.subr.bf16.mxu0 0
  %916 = vmatpush2.bf16.msra.mxu0 0
  %917 = vmatprep.subr.bf16.mxu0 0
  %918 = vmatpush2.bf16.msra.mxu0 0
  %919 = vmatprep.mubr.bf16.mxu0 0
  %920 = vmatmul.mubr.bf16.gmra.mxu0 %v885
  %v921 = vpop.f32.mrf.mxu0
  %v922 = vadd.f32 0.0, %v921
  %v923 = vpop.f32.mrf.mxu0
  %v924 = vpop.f32.mrf.mxu0
  %v925 = vpop.f32.mrf.mxu0
  %926 = vdwg.mxu0
  %927 = vmatprep.subr.bf16.mxu0 0
  %928 = vmatpush1.bf16.msra.mxu0 0
  %929 = vmatprep.subr.bf16.mxu0 0
  %930 = vmatpush1.bf16.msra.mxu0 0
  %931 = vmatprep.subr.bf16.mxu0 0
  %932 = vmatpush1.bf16.msra.mxu0 0
  %933 = vmatprep.subr.bf16.mxu0 0
  %934 = vmatpush1.bf16.msra.mxu0 0
  %935 = vmatprep.subr.bf16.mxu0 0
  %936 = vmatpush1.bf16.msra.mxu0 %v224
  %937 = vmatprep.subr.bf16.mxu0 0
  %938 = vmatpush1.bf16.msra.mxu0 %v223
  %939 = vmatprep.subr.bf16.mxu0 0
  %940 = vmatpush1.bf16.msra.mxu0 %v222
  %941 = vmatprep.subr.bf16.mxu0 0
  %942 = vmatpush1.bf16.msra.mxu0 %v221
  %943 = vmatprep.subr.bf16.mxu0 0
  %944 = vmatpush2.bf16.msra.mxu0 0
  %945 = vmatprep.subr.bf16.mxu0 0
  %946 = vmatpush2.bf16.msra.mxu0 0
  %947 = vmatprep.subr.bf16.mxu0 0
  %948 = vmatpush2.bf16.msra.mxu0 0
  %949 = vmatprep.subr.bf16.mxu0 0
  %950 = vmatpush2.bf16.msra.mxu0 0
  %951 = vmatprep.subr.bf16.mxu0 0
  %952 = vmatpush2.bf16.msra.mxu0 0
  %953 = vmatprep.subr.bf16.mxu0 0
  %954 = vmatpush2.bf16.msra.mxu0 0
  %955 = vmatprep.subr.bf16.mxu0 0
  %956 = vmatpush2.bf16.msra.mxu0 0
  %957 = vmatprep.subr.bf16.mxu0 0
  %958 = vmatpush2.bf16.msra.mxu0 0
  %959 = vmatprep.mubr.bf16.mxu0 0
  %960 = vmatmul.mubr.bf16.gmra.mxu0 %v885
  %v961 = vpop.f32.mrf.mxu0
  %v962 = vadd.f32 0.0, %v961
  %v963 = vpop.f32.mrf.mxu0
  %v964 = vpop.f32.mrf.mxu0
  %v965 = vpop.f32.mrf.mxu0
  %966 = vdwg.mxu0
  %s967 = scalar_lea.vmem %s1, 10
  %v968 = vld [vmem:[%s967] sm:$0x3]
  %v970 = vsel %vm92, %v968, 0
  %972 = vmatprep.subr.bf16.mxu0 0
  %973 = vmatpush1.bf16.msra.mxu0 0
  %974 = vmatprep.subr.bf16.mxu0 0
  %975 = vmatpush1.bf16.msra.mxu0 0
  %976 = vmatprep.subr.bf16.mxu0 0
  %977 = vmatpush1.bf16.msra.mxu0 0
  %978 = vmatprep.subr.bf16.mxu0 0
  %979 = vmatpush1.bf16.msra.mxu0 0
  %980 = vmatprep.subr.bf16.mxu0 0
  %981 = vmatpush1.bf16.msra.mxu0 %v157
  %982 = vmatprep.subr.bf16.mxu0 0
  %983 = vmatpush1.bf16.msra.mxu0 %v156
  %984 = vmatprep.subr.bf16.mxu0 0
  %985 = vmatpush1.bf16.msra.mxu0 %v155
  %986 = vmatprep.subr.bf16.mxu0 0
  %987 = vmatpush1.bf16.msra.mxu0 %v154
  %988 = vmatprep.subr.bf16.mxu0 0
  %989 = vmatpush2.bf16.msra.mxu0 0
  %990 = vmatprep.subr.bf16.mxu0 0
  %991 = vmatpush2.bf16.msra.mxu0 0
  %992 = vmatprep.subr.bf16.mxu0 0
  %993 = vmatpush2.bf16.msra.mxu0 0
  %994 = vmatprep.subr.bf16.mxu0 0
  %995 = vmatpush2.bf16.msra.mxu0 0
  %996 = vmatprep.subr.bf16.mxu0 0
  %997 = vmatpush2.bf16.msra.mxu0 0
  %998 = vmatprep.subr.bf16.mxu0 0
  %999 = vmatpush2.bf16.msra.mxu0 0
  %1000 = vmatprep.subr.bf16.mxu0 0
  %1001 = vmatpush2.bf16.msra.mxu0 0
  %1002 = vmatprep.subr.bf16.mxu0 0
  %1003 = vmatpush2.bf16.msra.mxu0 0
  %1004 = vmatprep.mubr.bf16.mxu0 0
  %1005 = vmatmul.mubr.bf16.gmra.mxu0 %v970
  %v1006 = vpop.f32.mrf.mxu0
  %v1007 = vadd.f32 0.0, %v1006
  %v1008 = vpop.f32.mrf.mxu0
  %v1009 = vpop.f32.mrf.mxu0
  %v1010 = vpop.f32.mrf.mxu0
  %1011 = vdwg.mxu0
  %1012 = vmatprep.subr.bf16.mxu0 0
  %1013 = vmatpush1.bf16.msra.mxu0 0
  %1014 = vmatprep.subr.bf16.mxu0 0
  %1015 = vmatpush1.bf16.msra.mxu0 0
  %1016 = vmatprep.subr.bf16.mxu0 0
  %1017 = vmatpush1.bf16.msra.mxu0 0
  %1018 = vmatprep.subr.bf16.mxu0 0
  %1019 = vmatpush1.bf16.msra.mxu0 0
  %1020 = vmatprep.subr.bf16.mxu0 0
  %1021 = vmatpush1.bf16.msra.mxu0 %v224
  %1022 = vmatprep.subr.bf16.mxu0 0
  %1023 = vmatpush1.bf16.msra.mxu0 %v223
  %1024 = vmatprep.subr.bf16.mxu0 0
  %1025 = vmatpush1.bf16.msra.mxu0 %v222
  %1026 = vmatprep.subr.bf16.mxu0 0
  %1027 = vmatpush1.bf16.msra.mxu0 %v221
  %1028 = vmatprep.subr.bf16.mxu0 0
  %1029 = vmatpush2.bf16.msra.mxu0 0
  %1030 = vmatprep.subr.bf16.mxu0 0
  %1031 = vmatpush2.bf16.msra.mxu0 0
  %1032 = vmatprep.subr.bf16.mxu0 0
  %1033 = vmatpush2.bf16.msra.mxu0 0
  %1034 = vmatprep.subr.bf16.mxu0 0
  %1035 = vmatpush2.bf16.msra.mxu0 0
  %1036 = vmatprep.subr.bf16.mxu0 0
  %1037 = vmatpush2.bf16.msra.mxu0 0
  %1038 = vmatprep.subr.bf16.mxu0 0
  %1039 = vmatpush2.bf16.msra.mxu0 0
  %1040 = vmatprep.subr.bf16.mxu0 0
  %1041 = vmatpush2.bf16.msra.mxu0 0
  %1042 = vmatprep.subr.bf16.mxu0 0
  %1043 = vmatpush2.bf16.msra.mxu0 0
  %1044 = vmatprep.mubr.bf16.mxu0 0
  %1045 = vmatmul.mubr.bf16.gmra.mxu0 %v970
  %v1046 = vpop.f32.mrf.mxu0
  %v1047 = vadd.f32 0.0, %v1046
  %v1048 = vpop.f32.mrf.mxu0
  %v1049 = vpop.f32.mrf.mxu0
  %v1050 = vpop.f32.mrf.mxu0
  %1051 = vdwg.mxu0
  %v1052 = vmax.f32 %v922, %v1007
  %v1053 = vmax.f32 %v962, %v1047
  %s1054 = scalar_lea.vmem %s1, 12
  %v1055 = vld [vmem:[%s1054] sm:$0x3]
  %v1057 = vsel %vm92, %v1055, 0
  %1059 = vmatprep.subr.bf16.mxu0 0
  %1060 = vmatpush1.bf16.msra.mxu0 0
  %1061 = vmatprep.subr.bf16.mxu0 0
  %1062 = vmatpush1.bf16.msra.mxu0 0
  %1063 = vmatprep.subr.bf16.mxu0 0
  %1064 = vmatpush1.bf16.msra.mxu0 0
  %1065 = vmatprep.subr.bf16.mxu0 0
  %1066 = vmatpush1.bf16.msra.mxu0 0
  %1067 = vmatprep.subr.bf16.mxu0 0
  %1068 = vmatpush1.bf16.msra.mxu0 %v157
  %1069 = vmatprep.subr.bf16.mxu0 0
  %1070 = vmatpush1.bf16.msra.mxu0 %v156
  %1071 = vmatprep.subr.bf16.mxu0 0
  %1072 = vmatpush1.bf16.msra.mxu0 %v155
  %1073 = vmatprep.subr.bf16.mxu0 0
  %1074 = vmatpush1.bf16.msra.mxu0 %v154
  %1075 = vmatprep.subr.bf16.mxu0 0
  %1076 = vmatpush2.bf16.msra.mxu0 0
  %1077 = vmatprep.subr.bf16.mxu0 0
  %1078 = vmatpush2.bf16.msra.mxu0 0
  %1079 = vmatprep.subr.bf16.mxu0 0
  %1080 = vmatpush2.bf16.msra.mxu0 0
  %1081 = vmatprep.subr.bf16.mxu0 0
  %1082 = vmatpush2.bf16.msra.mxu0 0
  %1083 = vmatprep.subr.bf16.mxu0 0
  %1084 = vmatpush2.bf16.msra.mxu0 0
  %1085 = vmatprep.subr.bf16.mxu0 0
  %1086 = vmatpush2.bf16.msra.mxu0 0
  %1087 = vmatprep.subr.bf16.mxu0 0
  %1088 = vmatpush2.bf16.msra.mxu0 0
  %1089 = vmatprep.subr.bf16.mxu0 0
  %1090 = vmatpush2.bf16.msra.mxu0 0
  %1091 = vmatprep.mubr.bf16.mxu0 0
  %1092 = vmatmul.mubr.bf16.gmra.mxu0 %v1057
  %v1093 = vpop.f32.mrf.mxu0
  %v1094 = vadd.f32 0.0, %v1093
  %v1095 = vpop.f32.mrf.mxu0
  %v1096 = vpop.f32.mrf.mxu0
  %v1097 = vpop.f32.mrf.mxu0
  %1098 = vdwg.mxu0
  %1099 = vmatprep.subr.bf16.mxu0 0
  %1100 = vmatpush1.bf16.msra.mxu0 0
  %1101 = vmatprep.subr.bf16.mxu0 0
  %1102 = vmatpush1.bf16.msra.mxu0 0
  %1103 = vmatprep.subr.bf16.mxu0 0
  %1104 = vmatpush1.bf16.msra.mxu0 0
  %1105 = vmatprep.subr.bf16.mxu0 0
  %1106 = vmatpush1.bf16.msra.mxu0 0
  %1107 = vmatprep.subr.bf16.mxu0 0
  %1108 = vmatpush1.bf16.msra.mxu0 %v224
  %1109 = vmatprep.subr.bf16.mxu0 0
  %1110 = vmatpush1.bf16.msra.mxu0 %v223
  %1111 = vmatprep.subr.bf16.mxu0 0
  %1112 = vmatpush1.bf16.msra.mxu0 %v222
  %1113 = vmatprep.subr.bf16.mxu0 0
  %1114 = vmatpush1.bf16.msra.mxu0 %v221
  %1115 = vmatprep.subr.bf16.mxu0 0
  %1116 = vmatpush2.bf16.msra.mxu0 0
  %1117 = vmatprep.subr.bf16.mxu0 0
  %1118 = vmatpush2.bf16.msra.mxu0 0
  %1119 = vmatprep.subr.bf16.mxu0 0
  %1120 = vmatpush2.bf16.msra.mxu0 0
  %1121 = vmatprep.subr.bf16.mxu0 0
  %1122 = vmatpush2.bf16.msra.mxu0 0
  %1123 = vmatprep.subr.bf16.mxu0 0
  %1124 = vmatpush2.bf16.msra.mxu0 0
  %1125 = vmatprep.subr.bf16.mxu0 0
  %1126 = vmatpush2.bf16.msra.mxu0 0
  %1127 = vmatprep.subr.bf16.mxu0 0
  %1128 = vmatpush2.bf16.msra.mxu0 0
  %1129 = vmatprep.subr.bf16.mxu0 0
  %1130 = vmatpush2.bf16.msra.mxu0 0
  %1131 = vmatprep.mubr.bf16.mxu0 0
  %1132 = vmatmul.mubr.bf16.gmra.mxu0 %v1057
  %v1133 = vpop.f32.mrf.mxu0
  %v1134 = vadd.f32 0.0, %v1133
  %v1135 = vpop.f32.mrf.mxu0
  %v1136 = vpop.f32.mrf.mxu0
  %v1137 = vpop.f32.mrf.mxu0
  %1138 = vdwg.mxu0
  %v1139 = vmax.f32 %v1052, %v1094
  %v1140 = vmax.f32 %v1053, %v1134
  %s1141 = scalar_lea.vmem %s1, 14
  %v1142 = vld [vmem:[%s1141] sm:$0x3]
  %v1144 = vsel %vm92, %v1142, 0
  %1146 = vmatprep.subr.bf16.mxu0 0
  %1147 = vmatpush1.bf16.msra.mxu0 0
  %1148 = vmatprep.subr.bf16.mxu0 0
  %1149 = vmatpush1.bf16.msra.mxu0 0
  %1150 = vmatprep.subr.bf16.mxu0 0
  %1151 = vmatpush1.bf16.msra.mxu0 0
  %1152 = vmatprep.subr.bf16.mxu0 0
  %1153 = vmatpush1.bf16.msra.mxu0 0
  %1154 = vmatprep.subr.bf16.mxu0 0
  %1155 = vmatpush1.bf16.msra.mxu0 %v157
  %1156 = vmatprep.subr.bf16.mxu0 0
  %1157 = vmatpush1.bf16.msra.mxu0 %v156
  %1158 = vmatprep.subr.bf16.mxu0 0
  %1159 = vmatpush1.bf16.msra.mxu0 %v155
  %1160 = vmatprep.subr.bf16.mxu0 0
  %1161 = vmatpush1.bf16.msra.mxu0 %v154
  %1162 = vmatprep.subr.bf16.mxu0 0
  %1163 = vmatpush2.bf16.msra.mxu0 0
  %1164 = vmatprep.subr.bf16.mxu0 0
  %1165 = vmatpush2.bf16.msra.mxu0 0
  %1166 = vmatprep.subr.bf16.mxu0 0
  %1167 = vmatpush2.bf16.msra.mxu0 0
  %1168 = vmatprep.subr.bf16.mxu0 0
  %1169 = vmatpush2.bf16.msra.mxu0 0
  %1170 = vmatprep.subr.bf16.mxu0 0
  %1171 = vmatpush2.bf16.msra.mxu0 0
  %1172 = vmatprep.subr.bf16.mxu0 0
  %1173 = vmatpush2.bf16.msra.mxu0 0
  %1174 = vmatprep.subr.bf16.mxu0 0
  %1175 = vmatpush2.bf16.msra.mxu0 0
  %1176 = vmatprep.subr.bf16.mxu0 0
  %1177 = vmatpush2.bf16.msra.mxu0 0
  %1178 = vmatprep.mubr.bf16.mxu0 0
  %1179 = vmatmul.mubr.bf16.gmra.mxu0 %v1144
  %v1180 = vpop.f32.mrf.mxu0
  %v1181 = vadd.f32 0.0, %v1180
  %v1182 = vpop.f32.mrf.mxu0
  %v1183 = vpop.f32.mrf.mxu0
  %v1184 = vpop.f32.mrf.mxu0
  %1185 = vdwg.mxu0
  %1186 = vmatprep.subr.bf16.mxu0 0
  %1187 = vmatpush1.bf16.msra.mxu0 0
  %1188 = vmatprep.subr.bf16.mxu0 0
  %1189 = vmatpush1.bf16.msra.mxu0 0
  %1190 = vmatprep.subr.bf16.mxu0 0
  %1191 = vmatpush1.bf16.msra.mxu0 0
  %1192 = vmatprep.subr.bf16.mxu0 0
  %1193 = vmatpush1.bf16.msra.mxu0 0
  %1194 = vmatprep.subr.bf16.mxu0 0
  %1195 = vmatpush1.bf16.msra.mxu0 %v224
  %1196 = vmatprep.subr.bf16.mxu0 0
  %1197 = vmatpush1.bf16.msra.mxu0 %v223
  %1198 = vmatprep.subr.bf16.mxu0 0
  %1199 = vmatpush1.bf16.msra.mxu0 %v222
  %1200 = vmatprep.subr.bf16.mxu0 0
  %1201 = vmatpush1.bf16.msra.mxu0 %v221
  %1202 = vmatprep.subr.bf16.mxu0 0
  %1203 = vmatpush2.bf16.msra.mxu0 0
  %1204 = vmatprep.subr.bf16.mxu0 0
  %1205 = vmatpush2.bf16.msra.mxu0 0
  %1206 = vmatprep.subr.bf16.mxu0 0
  %1207 = vmatpush2.bf16.msra.mxu0 0
  %1208 = vmatprep.subr.bf16.mxu0 0
  %1209 = vmatpush2.bf16.msra.mxu0 0
  %1210 = vmatprep.subr.bf16.mxu0 0
  %1211 = vmatpush2.bf16.msra.mxu0 0
  %1212 = vmatprep.subr.bf16.mxu0 0
  %1213 = vmatpush2.bf16.msra.mxu0 0
  %1214 = vmatprep.subr.bf16.mxu0 0
  %1215 = vmatpush2.bf16.msra.mxu0 0
  %1216 = vmatprep.subr.bf16.mxu0 0
  %1217 = vmatpush2.bf16.msra.mxu0 0
  %1218 = vmatprep.mubr.bf16.mxu0 0
  %1219 = vmatmul.mubr.bf16.gmra.mxu0 %v1144
  %v1220 = vpop.f32.mrf.mxu0
  %v1221 = vadd.f32 0.0, %v1220
  %v1222 = vpop.f32.mrf.mxu0
  %v1223 = vpop.f32.mrf.mxu0
  %v1224 = vpop.f32.mrf.mxu0
  %1225 = vdwg.mxu0
  %v1226 = vmax.f32 %v1139, %v1181
  %v1227 = vmax.f32 %v1140, %v1221
  %v1229 = vsel %vm530, %v876, 0
  %v1232 = vsel %vm530, %v879, 0
  %v1235 = vsel %vm530, %v1226, 0
  %1237 = vmatprep.subr.mxu0 0.0
  %1238 = vmatpush1.xpose.msra.mxu0 0.0
  %1239 = vmatprep.subr.mxu0 0.0
  %1240 = vmatpush1.xpose.msra.mxu0 0.0
  %1241 = vmatprep.subr.mxu0 0.0
  %1242 = vmatpush1.xpose.msra.mxu0 0.0
  %1243 = vmatprep.subr.mxu0 0.0
  %1244 = vmatpush1.xpose.msra.mxu0 0.0
  %1245 = vmatprep.subr.mxu0 0.0
  %1246 = vmatpush1.xpose.msra.mxu0 0.0
  %1247 = vmatprep.subr.mxu0 0.0
  %1248 = vmatpush1.xpose.msra.mxu0 0.0
  %1249 = vmatprep.subr.mxu0 0.0
  %1250 = vmatpush1.xpose.msra.mxu0 0.0
  %1251 = vmatprep.subr.mxu0 0.0
  %1252 = vmatpush1.xpose.msra.mxu0 0.0
  %1253 = vmatprep.subr.mxu0 0.0
  %1254 = vmatpush1.xpose.msra.mxu0 0.0
  %1255 = vmatprep.subr.mxu0 0.0
  %1256 = vmatpush1.xpose.msra.mxu0 0.0
  %1257 = vmatprep.subr.mxu0 0.0
  %1258 = vmatpush1.xpose.msra.mxu0 0.0
  %1259 = vmatprep.subr.mxu0 0.0
  %1260 = vmatpush1.xpose.msra.mxu0 0.0
  %1261 = vmatprep.subr.mxu0 0.0
  %1262 = vmatpush1.xpose.msra.mxu0 0.0
  %1263 = vmatprep.subr.mxu0 0.0
  %1264 = vmatpush1.xpose.msra.mxu0 0.0
  %1265 = vmatprep.subr.mxu0 0.0
  %1266 = vmatpush1.xpose.msra.mxu0 0.0
  %1267 = vmatprep.subr.mxu0 0.0
  %1268 = vmatpush1.xpose.msra.mxu0 %v1235
  %1269 = vmatprep.subr.mxu0 0.0
  %1270 = vmatpush2.xpose.msra.mxu0 0.0
  %1271 = vmatprep.subr.mxu0 0.0
  %1272 = vmatpush2.xpose.msra.mxu0 0.0
  %1273 = vmatprep.subr.mxu0 0.0
  %1274 = vmatpush2.xpose.msra.mxu0 0.0
  %1275 = vmatprep.subr.mxu0 0.0
  %1276 = vmatpush2.xpose.msra.mxu0 0.0
  %1277 = vmatprep.subr.mxu0 0.0
  %1278 = vmatpush2.xpose.msra.mxu0 0.0
  %1279 = vmatprep.subr.mxu0 0.0
  %1280 = vmatpush2.xpose.msra.mxu0 0.0
  %1281 = vmatprep.subr.mxu0 0.0
  %1282 = vmatpush2.xpose.msra.mxu0 0.0
  %1283 = vmatprep.subr.mxu0 0.0
  %1284 = vmatpush2.xpose.msra.mxu0 0.0
  %1285 = vmatprep.subr.mxu0 0.0
  %1286 = vmatpush2.xpose.msra.mxu0 0.0
  %1287 = vmatprep.subr.mxu0 0.0
  %1288 = vmatpush2.xpose.msra.mxu0 0.0
  %1289 = vmatprep.subr.mxu0 0.0
  %1290 = vmatpush2.xpose.msra.mxu0 0.0
  %1291 = vmatprep.subr.mxu0 0.0
  %1292 = vmatpush2.xpose.msra.mxu0 0.0
  %1293 = vmatprep.subr.mxu0 0.0
  %1294 = vmatpush2.xpose.msra.mxu0 0.0
  %1295 = vmatprep.subr.mxu0 0.0
  %1296 = vmatpush2.xpose.msra.mxu0 0.0
  %1297 = vmatprep.subr.mxu0 0.0
  %1298 = vmatpush2.xpose.msra.mxu0 0.0
  %1299 = vmatprep.subr.mxu0 0.0
  %1300 = vmatpush2.xpose.msra.mxu0 0.0
  %1301 = vmatprep.mubr.f32.mxu0 0.0
  %1302 = vmatmul.mubr.f32.gmra.mxu0 %v1229
  %v1303 = vpop.f32.mrf.mxu0
  %v1304 = vadd.f32 0.0, %v1303
  %v1305 = vpop.f32.mrf.mxu0
  %1306 = vmatprep.mubr.f32.mxu0 0.0
  %1307 = vmatmul.mubr.f32.gmra.mxu0 %v1232
  %v1308 = vpop.f32.mrf.mxu0
  %v1309 = vadd.f32 0.0, %v1308
  %v1310 = vpop.f32.mrf.mxu0
  %1311 = vdwg.mxu0
  %v1312 = vsel %vm615, %v1304, -inf
  %1313 = vmax.xlane.f32.xlu0 %v1312
  %v1314 = vpop.xlane.xlu0 %1313
  %v1315 = vsel %vm615, %v1309, -inf
  %1316 = vmax.xlane.f32.xlu0 %v1315
  %v1317 = vpop.xlane.xlu0 %1316
  %v1318 = vsub.f32 %v1304, %v1314
  %v1319 = vsub.f32 %v1309, %v1317
  %v1320 = vmul.f32 %v1318, 1.442695
  %v1321 = vpow.pop %v1320
  %v1322 = vmul.f32 %v1319, 1.442695
  %v1323 = vpow.pop %v1322
  %v1324 = vsel %vm615, %v1321, 0.0
  %1325 = vadd.xlane.f32.xlu0 %v1324
  %v1326 = vpop.xlane.xlu0 %1325
  %v1327 = vsel %vm615, %v1323, 0.0
  %1328 = vadd.xlane.f32.xlu0 %v1327
  %v1329 = vpop.xlane.xlu0 %1328
  %v1330 = vrcp.pop %v1326
  %v1331 = vmul.f32 %v1321, %v1330
  %v1332 = vrcp.pop %v1329
  %v1333 = vmul.f32 %v1323, %v1332
  %v1335 = vsel %vm615, %v1331, 0
  %v1338 = vsel %vm615, %v1333, 0
  %v1341 = vsel %vm644, %v1227, 0
  %1343 = vmatprep.subr.mxu0 0.0
  %1344 = vmatpush1.msra.mxu0 0.0
  %1345 = vmatprep.subr.mxu0 0.0
  %1346 = vmatpush1.msra.mxu0 0.0
  %1347 = vmatprep.subr.mxu0 0.0
  %1348 = vmatpush1.msra.mxu0 0.0
  %1349 = vmatprep.subr.mxu0 0.0
  %1350 = vmatpush1.msra.mxu0 0.0
  %1351 = vmatprep.subr.mxu0 0.0
  %1352 = vmatpush1.msra.mxu0 0.0
  %1353 = vmatprep.subr.mxu0 0.0
  %1354 = vmatpush1.msra.mxu0 0.0
  %1355 = vmatprep.subr.mxu0 0.0
  %1356 = vmatpush1.msra.mxu0 0.0
  %1357 = vmatprep.subr.mxu0 0.0
  %1358 = vmatpush1.msra.mxu0 0.0
  %1359 = vmatprep.subr.mxu0 0.0
  %1360 = vmatpush1.msra.mxu0 0.0
  %1361 = vmatprep.subr.mxu0 0.0
  %1362 = vmatpush1.msra.mxu0 0.0
  %1363 = vmatprep.subr.mxu0 0.0
  %1364 = vmatpush1.msra.mxu0 0.0
  %1365 = vmatprep.subr.mxu0 0.0
  %1366 = vmatpush1.msra.mxu0 0.0
  %1367 = vmatprep.subr.mxu0 0.0
  %1368 = vmatpush1.msra.mxu0 0.0
  %1369 = vmatprep.subr.mxu0 0.0
  %1370 = vmatpush1.msra.mxu0 0.0
  %1371 = vmatprep.subr.mxu0 0.0
  %1372 = vmatpush1.msra.mxu0 0.0
  %1373 = vmatprep.subr.mxu0 0.0
  %1374 = vmatpush1.msra.mxu0 %v1341
  %1375 = vmatprep.subr.mxu0 0.0
  %1376 = vmatpush2.msra.mxu0 0.0
  %1377 = vmatprep.subr.mxu0 0.0
  %1378 = vmatpush2.msra.mxu0 0.0
  %1379 = vmatprep.subr.mxu0 0.0
  %1380 = vmatpush2.msra.mxu0 0.0
  %1381 = vmatprep.subr.mxu0 0.0
  %1382 = vmatpush2.msra.mxu0 0.0
  %1383 = vmatprep.subr.mxu0 0.0
  %1384 = vmatpush2.msra.mxu0 0.0
  %1385 = vmatprep.subr.mxu0 0.0
  %1386 = vmatpush2.msra.mxu0 0.0
  %1387 = vmatprep.subr.mxu0 0.0
  %1388 = vmatpush2.msra.mxu0 0.0
  %1389 = vmatprep.subr.mxu0 0.0
  %1390 = vmatpush2.msra.mxu0 0.0
  %1391 = vmatprep.subr.mxu0 0.0
  %1392 = vmatpush2.msra.mxu0 0.0
  %1393 = vmatprep.subr.mxu0 0.0
  %1394 = vmatpush2.msra.mxu0 0.0
  %1395 = vmatprep.subr.mxu0 0.0
  %1396 = vmatpush2.msra.mxu0 0.0
  %1397 = vmatprep.subr.mxu0 0.0
  %1398 = vmatpush2.msra.mxu0 0.0
  %1399 = vmatprep.subr.mxu0 0.0
  %1400 = vmatpush2.msra.mxu0 0.0
  %1401 = vmatprep.subr.mxu0 0.0
  %1402 = vmatpush2.msra.mxu0 0.0
  %1403 = vmatprep.subr.mxu0 0.0
  %1404 = vmatpush2.msra.mxu0 0.0
  %1405 = vmatprep.subr.mxu0 0.0
  %1406 = vmatpush2.msra.mxu0 0.0
  %1407 = vmatprep.mubr.f32.mxu0 0.0
  %1408 = vmatmul.mubr.f32.gmra.mxu0 %v1335
  %v1409 = vpop.f32.mrf.mxu0
  %v1410 = vadd.f32 0.0, %v1409
  %v1411 = vpop.f32.mrf.mxu0
  %1412 = vmatprep.mubr.f32.mxu0 0.0
  %1413 = vmatmul.mubr.f32.gmra.mxu0 %v1338
  %v1414 = vpop.f32.mrf.mxu0
  %v1415 = vadd.f32 0.0, %v1414
  %v1416 = vpop.f32.mrf.mxu0
  %1417 = vdwg.mxu0
  %v1418 = vunpack.c.l.bf16 %v831
  %v1419 = vunpack.c.l.bf16 %v832
  %v1421 = vsel %vm725, %v1410, 0
  %v1424 = vsel %vm725, %v1415, 0
  %1426 = vmatprep.subr.mxu0 0.0
  %1427 = vmatpush1.msra.mxu0 0.0
  %1428 = vmatprep.subr.mxu0 0.0
  %1429 = vmatpush1.msra.mxu0 0.0
  %1430 = vmatprep.subr.mxu0 0.0
  %1431 = vmatpush1.msra.mxu0 0.0
  %1432 = vmatprep.subr.mxu0 0.0
  %1433 = vmatpush1.msra.mxu0 0.0
  %1434 = vmatprep.subr.mxu0 0.0
  %1435 = vmatpush1.msra.mxu0 0.0
  %1436 = vmatprep.subr.mxu0 0.0
  %1437 = vmatpush1.msra.mxu0 0.0
  %1438 = vmatprep.subr.mxu0 0.0
  %1439 = vmatpush1.msra.mxu0 0.0
  %1440 = vmatprep.subr.mxu0 0.0
  %1441 = vmatpush1.msra.mxu0 0.0
  %1442 = vmatprep.subr.mxu0 0.0
  %1443 = vmatpush1.msra.mxu0 0.0
  %1444 = vmatprep.subr.mxu0 0.0
  %1445 = vmatpush1.msra.mxu0 0.0
  %1446 = vmatprep.subr.mxu0 0.0
  %1447 = vmatpush1.msra.mxu0 0.0
  %1448 = vmatprep.subr.mxu0 0.0
  %1449 = vmatpush1.msra.mxu0 0.0
  %1450 = vmatprep.subr.mxu0 0.0
  %1451 = vmatpush1.msra.mxu0 %v58
  %1452 = vmatprep.subr.mxu0 0.0
  %1453 = vmatpush1.msra.mxu0 %v57
  %1454 = vmatprep.subr.mxu0 0.0
  %1455 = vmatpush1.msra.mxu0 %v56
  %1456 = vmatprep.subr.mxu0 0.0
  %1457 = vmatpush1.msra.mxu0 %v55
  %1458 = vmatprep.subr.mxu0 0.0
  %1459 = vmatpush2.msra.mxu0 0.0
  %1460 = vmatprep.subr.mxu0 0.0
  %1461 = vmatpush2.msra.mxu0 0.0
  %1462 = vmatprep.subr.mxu0 0.0
  %1463 = vmatpush2.msra.mxu0 0.0
  %1464 = vmatprep.subr.mxu0 0.0
  %1465 = vmatpush2.msra.mxu0 0.0
  %1466 = vmatprep.subr.mxu0 0.0
  %1467 = vmatpush2.msra.mxu0 0.0
  %1468 = vmatprep.subr.mxu0 0.0
  %1469 = vmatpush2.msra.mxu0 0.0
  %1470 = vmatprep.subr.mxu0 0.0
  %1471 = vmatpush2.msra.mxu0 0.0
  %1472 = vmatprep.subr.mxu0 0.0
  %1473 = vmatpush2.msra.mxu0 0.0
  %1474 = vmatprep.subr.mxu0 0.0
  %1475 = vmatpush2.msra.mxu0 0.0
  %1476 = vmatprep.subr.mxu0 0.0
  %1477 = vmatpush2.msra.mxu0 0.0
  %1478 = vmatprep.subr.mxu0 0.0
  %1479 = vmatpush2.msra.mxu0 0.0
  %1480 = vmatprep.subr.mxu0 0.0
  %1481 = vmatpush2.msra.mxu0 0.0
  %1482 = vmatprep.subr.mxu0 0.0
  %1483 = vmatpush2.msra.mxu0 0.0
  %1484 = vmatprep.subr.mxu0 0.0
  %1485 = vmatpush2.msra.mxu0 0.0
  %1486 = vmatprep.subr.mxu0 0.0
  %1487 = vmatpush2.msra.mxu0 0.0
  %1488 = vmatprep.subr.mxu0 0.0
  %1489 = vmatpush2.msra.mxu0 0.0
  %1490 = vmatprep.mubr.f32.mxu0 0.0
  %1491 = vmatmul.mubr.f32.gmra.mxu0 %v1421
  %v1492 = vpop.f32.mrf.mxu0
  %v1493 = vadd.f32 %v1418, %v1492
  %v1494 = vpop.f32.mrf.mxu0
  %1495 = vmatprep.mubr.f32.mxu0 0.0
  %1496 = vmatmul.mubr.f32.gmra.mxu0 %v1424
  %v1497 = vpop.f32.mrf.mxu0
  %v1498 = vadd.f32 %v1419, %v1497
  %v1499 = vpop.f32.mrf.mxu0
  %1500 = vdwg.mxu0
  %v1501 = vmul.f32 %v1493, %v59
  %v1502 = vmul.f32 %v1498, %v60
  %v1503 = vsel %vm92, %v1501, 0.0
  %1504 = vadd.xlane.f32.xlu0 %v1503
  %v1505 = vpop.xlane.xlu0 %1504
  %v1506 = vsel %vm92, %v1502, 0.0
  %1507 = vadd.xlane.f32.xlu0 %v1506
  %v1508 = vpop.xlane.xlu0 %1507
  %v1509 = vadd.f32 %v1505, %v1508
  %v1510 = vrot.slane %v1509, 4
  %v1511 = vadd.f32 %v1509, %v1510
  %v1512 = vrot.slane %v1511, 2
  %v1513 = vadd.f32 %v1511, %v1512
  %v1514 = vrot.slane %v1513, 1
  %v1515 = vadd.f32 %v1513, %v1514
  %v1516 = vxor.u32 %v1515, 2147483648
  %v1517 = vmul.f32 %v1516, 1.442695
  %v1518 = vpow.pop %v1517
  %v1519 = vadd.f32 %v1518, 1.0
  %v1520 = vrcp.pop %v1519
  %v1521 = vmul.f32 1.0, %v1520
  %1522 = vst.msk [vmem:[%s7 + $0x1] sm:$0x1] %vm828, %v1521
  // Predicated region
  $region30: #{discriminator_forward.9} parent=0 // pred_check
    _
  $region31: #{discriminator_forward.9} parent=0 // pred_check_branch
    %1524 = sbr.rel (0) target = $region33
  $region32: #{discriminator_forward.9} parent=0 // pred_region
    _
  $region33: #{discriminator_forward.9} parent=0 // pred_fallthru
    _
  // Predicated region
  $region34: #{discriminator_forward.9} parent=0 // pred_check
    _
  $region35: #{discriminator_forward.9} parent=0 // pred_check_branch
    %1526 = sbr.rel (0) target = $region37
  $region36: #{discriminator_forward.9} parent=0 // pred_region
    _
  $region37: #{discriminator_forward.9} parent=0 // pred_fallthru
    _

</llo_original>
